<compile_context>
chip_gen: v7x
topology: tpu7x:2x2x1
jax: 0.10.0
libtpu: 0.0.40
codegen_flags: <defaults>
</compile_context>

<pallas_src>
import functools

import jax
import jax.numpy as jnp
from jax import lax
from jax.experimental import pallas as pl
from jax.experimental.pallas import tpu as pltpu

LANE = 128      # TPU lane width: channel / contraction padding target
SUBPACK = 16    # bf16 rows per sublane pack: all in-kernel row offsets align to this


def _round_up(x, m):
    return (x + m - 1) // m * m


@functools.lru_cache(maxsize=1)
def _vmem_limit():
    """Per-generation scoped-VMEM limit: ~3/4 of physical, capped at 100 MiB
    (-> ~48 MiB on v7x, ~96 MiB on v5e/v6e).  Safe fallback if the query fails."""
    try:
        cap = int(pltpu.get_tpu_info().vmem_capacity_bytes)
        return int(min(cap * 3 // 4, 100 * 1024 * 1024))
    except Exception:
        return 48 * 1024 * 1024


# ----------------------------------------------------------------------------
# Kernels: tap-accumulated conv (+ fused residual-block variant)
# ----------------------------------------------------------------------------
def _accumulate_taps(x_ref, w_ref, kh, kw, wrow, m_rows):
    """acc = sum_t x_window(t) @ w[t] in f32.  Returns (acc, centre_window).

    x_ref block: [1, kw, R, C] bf16 (kw column-shifted flat copies).
    Tap (ti, tj) window = copy tj, rows [ti*wrow, ti*wrow + m_rows): the start
    is a multiple of 16 (wrow, m_rows are), so slices are relayout-free."""
    cop = w_ref.shape[-1]
    acc = jnp.zeros((m_rows, cop), jnp.float32)
    center = None
    for tj in range(kw):
        xt = x_ref[0, tj]                                    # [R, C] bf16
        for ti in range(kh):
            a = xt[ti * wrow:ti * wrow + m_rows, :]          # aligned bf16 window
            if ti == (kh - 1) // 2 and tj == (kw - 1) // 2:
                center = a                                   # residual (free)
            acc = acc + jnp.dot(a, w_ref[ti * kw + tj],
                                preferred_element_type=jnp.float32)
    return acc, center


def _conv_taps_kernel(x_ref, w_ref, b_ref, o_ref, *, kh, kw, wrow, m_rows,
                      apply_relu):
    acc, _ = _accumulate_taps(x_ref, w_ref, kh, kw, wrow, m_rows)
    acc = acc + b_ref[...]
    if apply_relu:
        acc = jnp.maximum(acc, 0.0)
    o_ref[0] = acc.astype(o_ref.dtype)


def _res_block_kernel(x_ref, w1_ref, b1_ref, w2_ref, b2_ref, o_ref, *, wrow,
                      m_rows):
    """Fused residual block: relu(x + conv1x1(relu(conv3x3(x) + b1)) + b2).
    `x` (the residual) is the centre-tap window of the resident input block."""
    acc, center = _accumulate_taps(x_ref, w1_ref, 3, 3, wrow, m_rows)
    h = jnp.maximum(acc + b1_ref[...], 0.0).astype(jnp.bfloat16)
    out = jnp.dot(h, w2_ref[...], preferred_element_type=jnp.float32)
    out = out + b2_ref[...] + center.astype(jnp.float32)
    o_ref[0] = jnp.maximum(out, 0.0).astype(o_ref.dtype)


# ----------------------------------------------------------------------------
# Host-side layout prep (spatial pad + 16-aligned flat layout + column shifts)
# ----------------------------------------------------------------------------
def _flat_shifted(x, kh, kw, pad):
    """x: [N, H, W, C] -> (x_sh [N, kw, R, C], wrow, m_rows, ho, wo).

    Rows of the spatially padded image are flattened with a row stride padded
    to 16; copy tj is the flat image shifted by tj rows (== shifted by tj
    columns), so every in-kernel tap window starts on a 16-row boundary."""
    n, h, w, c = x.shape
    if pad:
        x = jnp.pad(x, ((0, 0), (pad, pad), (pad, pad), (0, 0)))
    hp, wcols = h + 2 * pad, w + 2 * pad
    ho, wo = hp - kh + 1, wcols - kw + 1
    wrow = _round_up(wcols, SUBPACK)
    if wrow > wcols:
        x = jnp.pad(x, ((0, 0), (0, 0), (0, wrow - wcols), (0, 0)))
    m_rows = _round_up(ho * wrow, SUBPACK)
    r = (kh - 1) * wrow + m_rows
    x_flat = x.reshape(n, hp * wrow, c)
    need = r + (kw - 1)
    if need > hp * wrow:
        x_flat = jnp.pad(x_flat, ((0, 0), (0, need - hp * wrow), (0, 0)))
    x_sh = jnp.stack([x_flat[:, tj:tj + r, :] for tj in range(kw)], axis=1)
    return x_sh, wrow, m_rows, ho, wo


def conv_taps(x, w_taps, b, *, kh, kw, pad, relu):
    """Stride-1 cross-correlation conv on NHWC bf16 (channels lane-padded).

    x: [N, H, W, C];  w_taps: [kh*kw, C, Cop] bf16;  b: [1, Cop] f32.
    Returns [N, Ho, Wo, Cop] bf16."""
    n = x.shape[0]
    t, k, cop = w_taps.shape
    assert t == kh * kw and k == x.shape[-1], (w_taps.shape, x.shape)
    x_sh, wrow, m_rows, ho, wo = _flat_shifted(x, kh, kw, pad)
    r, c = x_sh.shape[2], x_sh.shape[3]

    # TODO(synk): spatial row-block tiling (grid=(n, row_tiles)) with halo
    # blocks for large images / v7x's 64 MiB VMEM; working sets here are tiny.
    out = pl.pallas_call(
        functools.partial(_conv_taps_kernel, kh=kh, kw=kw, wrow=wrow,
                          m_rows=m_rows, apply_relu=relu),
        grid=(n,),
        out_shape=jax.ShapeDtypeStruct((n, m_rows, cop), jnp.bfloat16),
        in_specs=[
            pl.BlockSpec((1, kw, r, c), lambda i: (i, 0, 0, 0)),
            pl.BlockSpec((t, k, cop), lambda i: (0, 0, 0)),
            pl.BlockSpec((1, cop), lambda i: (0, 0)),
        ],
        out_specs=pl.BlockSpec((1, m_rows, cop), lambda i: (i, 0, 0)),
        compiler_params=pltpu.CompilerParams(
            dimension_semantics=("parallel",),
            vmem_limit_bytes=_vmem_limit()),
    )(x_sh, w_taps, b)
    out = out[:, :ho * wrow].reshape(n, ho, wrow, cop)
    return out[:, :, :wo, :]


def res_block(x, w1_taps, b1, w2, b2):
    """Fused residual block on [N, H, W, LANE] bf16 -> same shape."""
    n = x.shape[0]
    x_sh, wrow, m_rows, ho, wo = _flat_shifted(x, 3, 3, 1)
    r, c = x_sh.shape[2], x_sh.shape[3]
    out = pl.pallas_call(
        functools.partial(_res_block_kernel, wrow=wrow, m_rows=m_rows),
        grid=(n,),
        out_shape=jax.ShapeDtypeStruct((n, m_rows, LANE), jnp.bfloat16),
        in_specs=[
            pl.BlockSpec((1, 3, r, c), lambda i: (i, 0, 0, 0)),
            pl.BlockSpec((9, LANE, LANE), lambda i: (0, 0, 0)),
            pl.BlockSpec((1, LANE), lambda i: (0, 0)),
            pl.BlockSpec((LANE, LANE), lambda i: (0, 0)),
            pl.BlockSpec((1, LANE), lambda i: (0, 0)),
        ],
        out_specs=pl.BlockSpec((1, m_rows, LANE), lambda i: (i, 0, 0)),
        compiler_params=pltpu.CompilerParams(
            dimension_semantics=("parallel",),
            vmem_limit_bytes=_vmem_limit()),
    )(x_sh, w1_taps, b1, w2, b2)
    out = out[:, :ho * wrow].reshape(n, ho, wrow, LANE)
    return out[:, :, :wo, :]


def _space_to_depth2(x):
    """[N, H, W, C] -> [N, H//2, W//2, 4C], channel order (pi, pj, c)."""
    n, h, w, c = x.shape
    x = x.reshape(n, h // 2, 2, w // 2, 2, c)
    x = x.transpose(0, 1, 3, 2, 4, 5)
    return x.reshape(n, h // 2, w // 2, 4 * c)


def conv4x4_s2_relu(x, w_taps, b, cin):
    """Conv(k=4, s=2, p=1) + ReLU via space-to-depth + 2x2 stride-1 tap conv.
    Lane padding happens AFTER space-to-depth (K = round128(4*cin), not 4*128)."""
    x = x[..., :cin]                       # native channels only
    n, h, w, _ = x.shape
    assert h % 2 == 0 and w % 2 == 0, "even spatial dims required for stride-2"
    xp = jnp.pad(x, ((0, 0), (1, 1), (1, 1), (0, 0)))
    y = _space_to_depth2(xp)               # [N, (H+2)//2, (W+2)//2, 4*cin]
    k_native = 4 * cin
    kpad = _round_up(k_native, LANE)
    if kpad > k_native:
        y = jnp.pad(y, ((0, 0), (0, 0), (0, 0), (0, kpad - k_native)))
    # TODO(synk): fold the spatial pad / space-to-depth shuffle into the kernel
    # (zero-initialised VMEM scratch + strided DMA) to drop the XLA glue pass.
    return conv_taps(y.astype(jnp.bfloat16), w_taps, b, kh=2, kw=2, pad=0,
                     relu=True)


# ----------------------------------------------------------------------------
# Parameter init (PyTorch-like) and one-time kernel-layout preparation
# ----------------------------------------------------------------------------
def init_encoder_params(key, in_channels, n_channels, z_channels,
                        num_res_blocks, num_downsamplings):
    def conv_params(key, kh, kw, cin, cout):
        kw_key, kb_key = jax.random.split(key)
        fan_in = cin * kh * kw
        scale = 1.0 / jnp.sqrt(jnp.float32(fan_in))
        w = jax.random.uniform(kw_key, (kh, kw, cin, cout), jnp.float32,
                               -scale, scale)
        b = jax.random.uniform(kb_key, (cout,), jnp.float32, -scale, scale)
        return w, b

    keys = jax.random.split(key, num_downsamplings + 2 * num_res_blocks + 1)
    it = iter(keys)

    down = []
    cin = in_channels
    for _ in range(num_downsamplings):
        down.append(conv_params(next(it), 4, 4, cin, n_channels))
        cin = n_channels

    res = []
    for _ in range(num_res_blocks):
        w1, b1 = conv_params(next(it), 3, 3, n_channels, n_channels)
        w2, b2 = conv_params(next(it), 1, 1, n_channels, n_channels)
        res.append((w1, b1, w2, b2))

    final = conv_params(next(it), 3, 3, n_channels, z_channels)
    return {"down": down, "res": res, "final": final}


def _prep_bias(b):
    return jnp.zeros((1, LANE), jnp.float32).at[0, :b.shape[0]].set(
        b.astype(jnp.float32))


def _prep_conv_weight(w):
    """[kh, kw, cin, cout] -> [kh*kw, LANE, LANE] bf16 (row-major taps)."""
    kh, kw, cin, cout = w.shape
    wp = jnp.zeros((kh * kw, LANE, LANE), jnp.float32)
    wp = wp.at[:, :cin, :cout].set(
        w.astype(jnp.float32).reshape(kh * kw, cin, cout))
    return wp.astype(jnp.bfloat16)


def _prep_1x1_weight(w):
    _, _, cin, cout = w.shape
    wp = jnp.zeros((LANE, LANE), jnp.float32)
    wp = wp.at[:cin, :cout].set(w[0, 0].astype(jnp.float32))
    return wp.astype(jnp.bfloat16)


def _prep_down_weight(w):
    """4x4/stride-2 weight -> 2x2 s2d taps [4, round128(4*cin), LANE] bf16."""
    kh, kw, cin, cout = w.shape
    assert kh == 4 and kw == 4
    k_native = 4 * cin
    kpad = _round_up(k_native, LANE)
    wp = w.astype(jnp.float32).reshape(2, 2, 2, 2, cin, cout)  # (di,pi,dj,pj,c,o)
    wp = wp.transpose(0, 2, 1, 3, 4, 5)                        # (di,dj,pi,pj,c,o)
    wp = wp.reshape(4, k_native, cout)
    wp = jnp.pad(wp, ((0, 0), (0, kpad - k_native), (0, LANE - cout)))
    return wp.astype(jnp.bfloat16)


def prepare_encoder_params(params):
    kp = {"down": [], "res": [], "final": None}
    for w, b in params["down"]:
        kp["down"].append((_prep_down_weight(w), _prep_bias(b)))
    for w1, b1, w2, b2 in params["res"]:
        kp["res"].append((_prep_conv_weight(w1), _prep_bias(b1),
                          _prep_1x1_weight(w2), _prep_bias(b2)))
    wf, bf = params["final"]
    kp["final"] = (_prep_conv_weight(wf), _prep_bias(bf))
    return kp


# ----------------------------------------------------------------------------
# Encoder forward pass (jitted end-to-end)
# ----------------------------------------------------------------------------
def encoder_forward(x_nchw, kp, *, z_channels, down_cins):
    x = jnp.transpose(x_nchw, (0, 2, 3, 1))           # NCHW -> NHWC (native C)

    # Downsampling blocks: Conv(k=4, s=2, p=1) + ReLU
    for (w_taps, b), cin in zip(kp["down"], down_cins):
        x = conv4x4_s2_relu(x, w_taps, b, cin)        # -> [N, H/2, W/2, 128] bf16

    # Residual blocks: relu(x + conv1x1(dropout(relu(conv3x3(x)))))
    # TODO(synk): nn.Dropout2d treated as identity (eval/inference mode).
    for w1, b1, w2, b2 in kp["res"]:
        x = res_block(x, w1, b1, w2, b2)

    # Final Conv(k=3, s=1, p=1), no activation
    wf, bfin = kp["final"]
    x = conv_taps(x, wf, bfin, kh=3, kw=3, pad=1, relu=False)

    # Drop channel padding, NHWC -> NCHW, f32.
    x = x[..., :z_channels]
    return jnp.transpose(x, (0, 3, 1, 2)).astype(jnp.float32)


# ----------------------------------------------------------------------------
# Pure-JAX f32 reference (lax.conv) for a correctness sanity check
# ----------------------------------------------------------------------------
def _ref_conv(x, w, b, stride, pad):
    y = lax.conv_general_dilated(
        x, w, window_strides=(stride, stride),
        padding=[(pad, pad), (pad, pad)],
        dimension_numbers=("NHWC", "HWIO", "NHWC"))
    return y + b[None, None, None, :]


def encoder_forward_ref(x_nchw, params):
    x = jnp.transpose(x_nchw, (0, 2, 3, 1)).astype(jnp.float32)
    for w, b in params["down"]:
        x = jax.nn.relu(_ref_conv(x, w, b, 2, 1))
    for w1, b1, w2, b2 in params["res"]:
        h = jax.nn.relu(_ref_conv(x, w1, b1, 1, 1))
        x = jax.nn.relu(x + _ref_conv(h, w2, b2, 1, 0))
    wf, bf = params["final"]
    x = _ref_conv(x, wf, bf, 1, 1)
    return jnp.transpose(x, (0, 3, 1, 2))


if __name__ == "__main__":
    # Encoder hyperparameters (small, consistent with the module's __init__)
    in_channels = 4
    n_channels = 32
    z_channels = 8
    num_res_blocks = 2
    num_downsamplings = 2
    p_dropout = 0.1  # unused at inference (dropout = identity)

    key = jax.random.PRNGKey(0)
    k_params, k_x = jax.random.split(key)

    params = init_encoder_params(
        k_params, in_channels, n_channels, z_channels, num_res_blocks,
        num_downsamplings)
    kparams = prepare_encoder_params(params)

    # Native input-channel count of each downsampling conv (static metadata).
    down_cins = tuple([in_channels] + [n_channels] * (num_downsamplings - 1))

    # Input in PyTorch NCHW layout: [batch, in_channels, H, W]
    x = jax.random.normal(k_x, (2, in_channels, 16, 16), jnp.float32)

    fwd = jax.jit(functools.partial(encoder_forward, z_channels=z_channels,
                                    down_cins=down_cins))
    out = jax.block_until_ready(fwd(x, kparams))

    # Expected output shape: [2, z_channels, 16 / 2**num_downsamplings, ...]
    assert out.shape == (2, z_channels, 4, 4), out.shape

    ref = jax.block_until_ready(encoder_forward_ref(x, params))
    max_err = float(jnp.max(jnp.abs(out - ref)))
    # bf16 MXU operands / bf16 activation storage => looser tolerance vs f32 ref
    assert jnp.allclose(out, ref, rtol=5e-2, atol=5e-2), max_err

    print("KERNEL_OK")
</pallas_src>

<mosaic_0001>
module attributes {stable_mosaic.version = 11 : i64} {
  func.func @_conv_taps_kernel(%arg0: i32, %arg1: memref<1x2x144x128xbf16, #tpu.memory_space<vmem>>, %arg2: memref<4x128x128xbf16, #tpu.memory_space<vmem>>, %arg3: memref<1x128xf32, #tpu.memory_space<vmem>>, %arg4: memref<1x128x128xbf16, #tpu.memory_space<vmem>>) attributes {dimension_semantics = [#tpu.dimension_semantics<parallel>], iteration_bounds = array<i64: 2>, scalar_prefetch = 0 : i64, scratch_operands = 0 : i64, tpu.core_type = #tpu.core_type<tc>, window_params = [{transform_indices = @transform_0, window_bounds = array<i64: 1, 2, 144, 128>}, {pipeline_mode = #tpu.pipeline_mode<synchronous>, transform_indices = @transform_1, window_bounds = array<i64: 4, 128, 128>}, {pipeline_mode = #tpu.pipeline_mode<synchronous>, transform_indices = @transform_2, window_bounds = array<i64: 1, 128>}, {transform_indices = @transform_3, window_bounds = array<i64: 1, 128, 128>}]} {
    %cst = arith.constant 0.000000e+00 : f32
    %0 = vector.broadcast %cst : f32 to vector<128x128xf32>
    %c0 = arith.constant 0 : index
    %c0_0 = arith.constant 0 : index
    %c0_1 = arith.constant 0 : index
    %c0_2 = arith.constant 0 : index
    %1 = vector.load %arg1[%c0, %c0_0, %c0_1, %c0_2] : memref<1x2x144x128xbf16, #tpu.memory_space<vmem>>, vector<1x1x144x128xbf16>
    %2 = vector.shape_cast %1 : vector<1x1x144x128xbf16> to vector<144x128xbf16>
    %3 = vector.extract_strided_slice %2 {offsets = [0, 0], sizes = [128, 128], strides = [1, 1]} : vector<144x128xbf16> to vector<128x128xbf16>
    %c0_3 = arith.constant 0 : index
    %c0_4 = arith.constant 0 : index
    %c0_5 = arith.constant 0 : index
    %4 = vector.load %arg2[%c0_3, %c0_4, %c0_5] : memref<4x128x128xbf16, #tpu.memory_space<vmem>>, vector<1x128x128xbf16>
    %5 = vector.shape_cast %4 : vector<1x128x128xbf16> to vector<128x128xbf16>
    %cst_6 = arith.constant dense<0.000000e+00> : vector<128x128xf32>
    %6 = tpu.matmul %3, %5, %cst_6 {dimension_numbers = #tpu.dot_dimension_numbers<[1], [0], [0], [1], [0, 0, 1, 1], [], []>} : vector<128x128xbf16>, vector<128x128xbf16>, vector<128x128xf32> -> vector<128x128xf32>
    %7 = arith.addf %0, %6 : vector<128x128xf32>
    %8 = vector.extract_strided_slice %2 {offsets = [16, 0], sizes = [128, 128], strides = [1, 1]} : vector<144x128xbf16> to vector<128x128xbf16>
    %c2 = arith.constant 2 : index
    %c0_7 = arith.constant 0 : index
    %c0_8 = arith.constant 0 : index
    %9 = vector.load %arg2[%c2, %c0_7, %c0_8] : memref<4x128x128xbf16, #tpu.memory_space<vmem>>, vector<1x128x128xbf16>
    %10 = vector.shape_cast %9 : vector<1x128x128xbf16> to vector<128x128xbf16>
    %cst_9 = arith.constant dense<0.000000e+00> : vector<128x128xf32>
    %11 = tpu.matmul %8, %10, %cst_9 {dimension_numbers = #tpu.dot_dimension_numbers<[1], [0], [0], [1], [0, 0, 1, 1], [], []>} : vector<128x128xbf16>, vector<128x128xbf16>, vector<128x128xf32> -> vector<128x128xf32>
    %12 = arith.addf %7, %11 : vector<128x128xf32>
    %c0_10 = arith.constant 0 : index
    %c1 = arith.constant 1 : index
    %c0_11 = arith.constant 0 : index
    %c0_12 = arith.constant 0 : index
    %13 = vector.load %arg1[%c0_10, %c1, %c0_11, %c0_12] : memref<1x2x144x128xbf16, #tpu.memory_space<vmem>>, vector<1x1x144x128xbf16>
    %14 = vector.shape_cast %13 : vector<1x1x144x128xbf16> to vector<144x128xbf16>
    %15 = vector.extract_strided_slice %14 {offsets = [0, 0], sizes = [128, 128], strides = [1, 1]} : vector<144x128xbf16> to vector<128x128xbf16>
    %c1_13 = arith.constant 1 : index
    %c0_14 = arith.constant 0 : index
    %c0_15 = arith.constant 0 : index
    %16 = vector.load %arg2[%c1_13, %c0_14, %c0_15] : memref<4x128x128xbf16, #tpu.memory_space<vmem>>, vector<1x128x128xbf16>
    %17 = vector.shape_cast %16 : vector<1x128x128xbf16> to vector<128x128xbf16>
    %cst_16 = arith.constant dense<0.000000e+00> : vector<128x128xf32>
    %18 = tpu.matmul %15, %17, %cst_16 {dimension_numbers = #tpu.dot_dimension_numbers<[1], [0], [0], [1], [0, 0, 1, 1], [], []>} : vector<128x128xbf16>, vector<128x128xbf16>, vector<128x128xf32> -> vector<128x128xf32>
    %19 = arith.addf %12, %18 : vector<128x128xf32>
    %20 = vector.extract_strided_slice %14 {offsets = [16, 0], sizes = [128, 128], strides = [1, 1]} : vector<144x128xbf16> to vector<128x128xbf16>
    %c3 = arith.constant 3 : index
    %c0_17 = arith.constant 0 : index
    %c0_18 = arith.constant 0 : index
    %21 = vector.load %arg2[%c3, %c0_17, %c0_18] : memref<4x128x128xbf16, #tpu.memory_space<vmem>>, vector<1x128x128xbf16>
    %22 = vector.shape_cast %21 : vector<1x128x128xbf16> to vector<128x128xbf16>
    %cst_19 = arith.constant dense<0.000000e+00> : vector<128x128xf32>
    %23 = tpu.matmul %20, %22, %cst_19 {dimension_numbers = #tpu.dot_dimension_numbers<[1], [0], [0], [1], [0, 0, 1, 1], [], []>} : vector<128x128xbf16>, vector<128x128xbf16>, vector<128x128xf32> -> vector<128x128xf32>
    %24 = arith.addf %19, %23 : vector<128x128xf32>
    %c0_20 = arith.constant 0 : index
    %c0_21 = arith.constant 0 : index
    %25 = vector.load %arg3[%c0_20, %c0_21] : memref<1x128xf32, #tpu.memory_space<vmem>>, vector<1x128xf32>
    %26 = vector.broadcast %25 : vector<1x128xf32> to vector<128x128xf32>
    %27 = arith.addf %24, %26 : vector<128x128xf32>
    %cst_22 = arith.constant 0.000000e+00 : f32
    %28 = vector.broadcast %cst_22 : f32 to vector<128x128xf32>
    %29 = arith.maximumf %27, %28 : vector<128x128xf32>
    %30 = arith.truncf %29 : vector<128x128xf32> to vector<128x128xbf16>
    %c0_23 = arith.constant 0 : index
    %c0_24 = arith.constant 0 : index
    %c0_25 = arith.constant 0 : index
    %31 = vector.load %arg4[%c0_23, %c0_24, %c0_25] : memref<1x128x128xbf16, #tpu.memory_space<vmem>>, vector<1x128x128xbf16>
    %32 = vector.shape_cast %31 : vector<1x128x128xbf16> to vector<128x128xbf16>
    %33 = vector.shape_cast %30 : vector<128x128xbf16> to vector<1x128x128xbf16>
    tpu.vector_store %arg4[%c0_23, %c0_24, %c0_25], %33 {strides = array<i32>} : memref<1x128x128xbf16, #tpu.memory_space<vmem>>, vector<1x128x128xbf16>,
    return
  }
  func.func @transform_0(%arg0: i32) -> (i32, i32, i32, i32) {
    %c0_i32 = arith.constant 0 : i32
    %c0_i32_0 = arith.constant 0 : i32
    %c0_i32_1 = arith.constant 0 : i32
    %c0_i32_2 = arith.constant 0 : i32
    return %arg0, %c0_i32, %c0_i32_0, %c0_i32_1 : i32, i32, i32, i32
  }
  func.func @transform_1(%arg0: i32) -> (i32, i32, i32) {
    %c0_i32 = arith.constant 0 : i32
    %c0_i32_0 = arith.constant 0 : i32
    %c0_i32_1 = arith.constant 0 : i32
    %c0_i32_2 = arith.constant 0 : i32
    return %c0_i32, %c0_i32_0, %c0_i32_1 : i32, i32, i32
  }
  func.func @transform_2(%arg0: i32) -> (i32, i32) {
    %c0_i32 = arith.constant 0 : i32
    %c0_i32_0 = arith.constant 0 : i32
    %c0_i32_1 = arith.constant 0 : i32
    return %c0_i32, %c0_i32_0 : i32, i32
  }
  func.func @transform_3(%arg0: i32) -> (i32, i32, i32) {
    %c0_i32 = arith.constant 0 : i32
    %c0_i32_0 = arith.constant 0 : i32
    %c0_i32_1 = arith.constant 0 : i32
    return %arg0, %c0_i32, %c0_i32_0 : i32, i32, i32
  }
}

module attributes {stable_mosaic.version = 11 : i64} {
  func.func @_conv_taps_kernel(%arg0: i32, %arg1: memref<1x2x80x128xbf16, #tpu.memory_space<vmem>>, %arg2: memref<4x128x128xbf16, #tpu.memory_space<vmem>>, %arg3: memref<1x128xf32, #tpu.memory_space<vmem>>, %arg4: memref<1x64x128xbf16, #tpu.memory_space<vmem>>) attributes {dimension_semantics = [#tpu.dimension_semantics<parallel>], iteration_bounds = array<i64: 2>, scalar_prefetch = 0 : i64, scratch_operands = 0 : i64, tpu.core_type = #tpu.core_type<tc>, window_params = [{transform_indices = @transform_0, window_bounds = array<i64: 1, 2, 80, 128>}, {pipeline_mode = #tpu.pipeline_mode<synchronous>, transform_indices = @transform_1, window_bounds = array<i64: 4, 128, 128>}, {pipeline_mode = #tpu.pipeline_mode<synchronous>, transform_indices = @transform_2, window_bounds = array<i64: 1, 128>}, {transform_indices = @transform_3, window_bounds = array<i64: 1, 64, 128>}]} {
    %cst = arith.constant 0.000000e+00 : f32
    %0 = vector.broadcast %cst : f32 to vector<64x128xf32>
    %c0 = arith.constant 0 : index
    %c0_0 = arith.constant 0 : index
    %c0_1 = arith.constant 0 : index
    %c0_2 = arith.constant 0 : index
    %1 = vector.load %arg1[%c0, %c0_0, %c0_1, %c0_2] : memref<1x2x80x128xbf16, #tpu.memory_space<vmem>>, vector<1x1x80x128xbf16>
    %2 = vector.shape_cast %1 : vector<1x1x80x128xbf16> to vector<80x128xbf16>
    %3 = vector.extract_strided_slice %2 {offsets = [0, 0], sizes = [64, 128], strides = [1, 1]} : vector<80x128xbf16> to vector<64x128xbf16>
    %c0_3 = arith.constant 0 : index
    %c0_4 = arith.constant 0 : index
    %c0_5 = arith.constant 0 : index
    %4 = vector.load %arg2[%c0_3, %c0_4, %c0_5] : memref<4x128x128xbf16, #tpu.memory_space<vmem>>, vector<1x128x128xbf16>
    %5 = vector.shape_cast %4 : vector<1x128x128xbf16> to vector<128x128xbf16>
    %cst_6 = arith.constant dense<0.000000e+00> : vector<64x128xf32>
    %6 = tpu.matmul %3, %5, %cst_6 {dimension_numbers = #tpu.dot_dimension_numbers<[1], [0], [0], [1], [0, 0, 1, 1], [], []>} : vector<64x128xbf16>, vector<128x128xbf16>, vector<64x128xf32> -> vector<64x128xf32>
    %7 = arith.addf %0, %6 : vector<64x128xf32>
    %8 = vector.extract_strided_slice %2 {offsets = [16, 0], sizes = [64, 128], strides = [1, 1]} : vector<80x128xbf16> to vector<64x128xbf16>
    %c2 = arith.constant 2 : index
    %c0_7 = arith.constant 0 : index
    %c0_8 = arith.constant 0 : index
    %9 = vector.load %arg2[%c2, %c0_7, %c0_8] : memref<4x128x128xbf16, #tpu.memory_space<vmem>>, vector<1x128x128xbf16>
    %10 = vector.shape_cast %9 : vector<1x128x128xbf16> to vector<128x128xbf16>
    %cst_9 = arith.constant dense<0.000000e+00> : vector<64x128xf32>
    %11 = tpu.matmul %8, %10, %cst_9 {dimension_numbers = #tpu.dot_dimension_numbers<[1], [0], [0], [1], [0, 0, 1, 1], [], []>} : vector<64x128xbf16>, vector<128x128xbf16>, vector<64x128xf32> -> vector<64x128xf32>
    %12 = arith.addf %7, %11 : vector<64x128xf32>
    %c0_10 = arith.constant 0 : index
    %c1 = arith.constant 1 : index
    %c0_11 = arith.constant 0 : index
    %c0_12 = arith.constant 0 : index
    %13 = vector.load %arg1[%c0_10, %c1, %c0_11, %c0_12] : memref<1x2x80x128xbf16, #tpu.memory_space<vmem>>, vector<1x1x80x128xbf16>
    %14 = vector.shape_cast %13 : vector<1x1x80x128xbf16> to vector<80x128xbf16>
    %15 = vector.extract_strided_slice %14 {offsets = [0, 0], sizes = [64, 128], strides = [1, 1]} : vector<80x128xbf16> to vector<64x128xbf16>
    %c1_13 = arith.constant 1 : index
    %c0_14 = arith.constant 0 : index
    %c0_15 = arith.constant 0 : index
    %16 = vector.load %arg2[%c1_13, %c0_14, %c0_15] : memref<4x128x128xbf16, #tpu.memory_space<vmem>>, vector<1x128x128xbf16>
    %17 = vector.shape_cast %16 : vector<1x128x128xbf16> to vector<128x128xbf16>
    %cst_16 = arith.constant dense<0.000000e+00> : vector<64x128xf32>
    %18 = tpu.matmul %15, %17, %cst_16 {dimension_numbers = #tpu.dot_dimension_numbers<[1], [0], [0], [1], [0, 0, 1, 1], [], []>} : vector<64x128xbf16>, vector<128x128xbf16>, vector<64x128xf32> -> vector<64x128xf32>
    %19 = arith.addf %12, %18 : vector<64x128xf32>
    %20 = vector.extract_strided_slice %14 {offsets = [16, 0], sizes = [64, 128], strides = [1, 1]} : vector<80x128xbf16> to vector<64x128xbf16>
    %c3 = arith.constant 3 : index
    %c0_17 = arith.constant 0 : index
    %c0_18 = arith.constant 0 : index
    %21 = vector.load %arg2[%c3, %c0_17, %c0_18] : memref<4x128x128xbf16, #tpu.memory_space<vmem>>, vector<1x128x128xbf16>
    %22 = vector.shape_cast %21 : vector<1x128x128xbf16> to vector<128x128xbf16>
    %cst_19 = arith.constant dense<0.000000e+00> : vector<64x128xf32>
    %23 = tpu.matmul %20, %22, %cst_19 {dimension_numbers = #tpu.dot_dimension_numbers<[1], [0], [0], [1], [0, 0, 1, 1], [], []>} : vector<64x128xbf16>, vector<128x128xbf16>, vector<64x128xf32> -> vector<64x128xf32>
    %24 = arith.addf %19, %23 : vector<64x128xf32>
    %c0_20 = arith.constant 0 : index
    %c0_21 = arith.constant 0 : index
    %25 = vector.load %arg3[%c0_20, %c0_21] : memref<1x128xf32, #tpu.memory_space<vmem>>, vector<1x128xf32>
    %26 = vector.broadcast %25 : vector<1x128xf32> to vector<64x128xf32>
    %27 = arith.addf %24, %26 : vector<64x128xf32>
    %cst_22 = arith.constant 0.000000e+00 : f32
    %28 = vector.broadcast %cst_22 : f32 to vector<64x128xf32>
    %29 = arith.maximumf %27, %28 : vector<64x128xf32>
    %30 = arith.truncf %29 : vector<64x128xf32> to vector<64x128xbf16>
    %c0_23 = arith.constant 0 : index
    %c0_24 = arith.constant 0 : index
    %c0_25 = arith.constant 0 : index
    %31 = vector.load %arg4[%c0_23, %c0_24, %c0_25] : memref<1x64x128xbf16, #tpu.memory_space<vmem>>, vector<1x64x128xbf16>
    %32 = vector.shape_cast %31 : vector<1x64x128xbf16> to vector<64x128xbf16>
    %33 = vector.shape_cast %30 : vector<64x128xbf16> to vector<1x64x128xbf16>
    tpu.vector_store %arg4[%c0_23, %c0_24, %c0_25], %33 {strides = array<i32>} : memref<1x64x128xbf16, #tpu.memory_space<vmem>>, vector<1x64x128xbf16>,
    return
  }
  func.func @transform_0(%arg0: i32) -> (i32, i32, i32, i32) {
    %c0_i32 = arith.constant 0 : i32
    %c0_i32_0 = arith.constant 0 : i32
    %c0_i32_1 = arith.constant 0 : i32
    %c0_i32_2 = arith.constant 0 : i32
    return %arg0, %c0_i32, %c0_i32_0, %c0_i32_1 : i32, i32, i32, i32
  }
  func.func @transform_1(%arg0: i32) -> (i32, i32, i32) {
    %c0_i32 = arith.constant 0 : i32
    %c0_i32_0 = arith.constant 0 : i32
    %c0_i32_1 = arith.constant 0 : i32
    %c0_i32_2 = arith.constant 0 : i32
    return %c0_i32, %c0_i32_0, %c0_i32_1 : i32, i32, i32
  }
  func.func @transform_2(%arg0: i32) -> (i32, i32) {
    %c0_i32 = arith.constant 0 : i32
    %c0_i32_0 = arith.constant 0 : i32
    %c0_i32_1 = arith.constant 0 : i32
    return %c0_i32, %c0_i32_0 : i32, i32
  }
  func.func @transform_3(%arg0: i32) -> (i32, i32, i32) {
    %c0_i32 = arith.constant 0 : i32
    %c0_i32_0 = arith.constant 0 : i32
    %c0_i32_1 = arith.constant 0 : i32
    return %arg0, %c0_i32, %c0_i32_0 : i32, i32, i32
  }
}

module attributes {stable_mosaic.version = 11 : i64} {
  func.func @_conv_taps_kernel(%arg0: i32, %arg1: memref<1x3x96x128xbf16, #tpu.memory_space<vmem>>, %arg2: memref<9x128x128xbf16, #tpu.memory_space<vmem>>, %arg3: memref<1x128xf32, #tpu.memory_space<vmem>>, %arg4: memref<1x64x128xbf16, #tpu.memory_space<vmem>>) attributes {dimension_semantics = [#tpu.dimension_semantics<parallel>], iteration_bounds = array<i64: 2>, scalar_prefetch = 0 : i64, scratch_operands = 0 : i64, tpu.core_type = #tpu.core_type<tc>, window_params = [{transform_indices = @transform_0, window_bounds = array<i64: 1, 3, 96, 128>}, {pipeline_mode = #tpu.pipeline_mode<synchronous>, transform_indices = @transform_1, window_bounds = array<i64: 9, 128, 128>}, {pipeline_mode = #tpu.pipeline_mode<synchronous>, transform_indices = @transform_2, window_bounds = array<i64: 1, 128>}, {transform_indices = @transform_3, window_bounds = array<i64: 1, 64, 128>}]} {
    %cst = arith.constant 0.000000e+00 : f32
    %0 = vector.broadcast %cst : f32 to vector<64x128xf32>
    %c0 = arith.constant 0 : index
    %c0_0 = arith.constant 0 : index
    %c0_1 = arith.constant 0 : index
    %c0_2 = arith.constant 0 : index
    %1 = vector.load %arg1[%c0, %c0_0, %c0_1, %c0_2] : memref<1x3x96x128xbf16, #tpu.memory_space<vmem>>, vector<1x1x96x128xbf16>
    %2 = vector.shape_cast %1 : vector<1x1x96x128xbf16> to vector<96x128xbf16>
    %3 = vector.extract_strided_slice %2 {offsets = [0, 0], sizes = [64, 128], strides = [1, 1]} : vector<96x128xbf16> to vector<64x128xbf16>
    %c0_3 = arith.constant 0 : index
    %c0_4 = arith.constant 0 : index
    %c0_5 = arith.constant 0 : index
    %4 = vector.load %arg2[%c0_3, %c0_4, %c0_5] : memref<9x128x128xbf16, #tpu.memory_space<vmem>>, vector<1x128x128xbf16>
    %5 = vector.shape_cast %4 : vector<1x128x128xbf16> to vector<128x128xbf16>
    %cst_6 = arith.constant dense<0.000000e+00> : vector<64x128xf32>
    %6 = tpu.matmul %3, %5, %cst_6 {dimension_numbers = #tpu.dot_dimension_numbers<[1], [0], [0], [1], [0, 0, 1, 1], [], []>} : vector<64x128xbf16>, vector<128x128xbf16>, vector<64x128xf32> -> vector<64x128xf32>
    %7 = arith.addf %0, %6 : vector<64x128xf32>
    %8 = vector.extract_strided_slice %2 {offsets = [16, 0], sizes = [64, 128], strides = [1, 1]} : vector<96x128xbf16> to vector<64x128xbf16>
    %c3 = arith.constant 3 : index
    %c0_7 = arith.constant 0 : index
    %c0_8 = arith.constant 0 : index
    %9 = vector.load %arg2[%c3, %c0_7, %c0_8] : memref<9x128x128xbf16, #tpu.memory_space<vmem>>, vector<1x128x128xbf16>
    %10 = vector.shape_cast %9 : vector<1x128x128xbf16> to vector<128x128xbf16>
    %cst_9 = arith.constant dense<0.000000e+00> : vector<64x128xf32>
    %11 = tpu.matmul %8, %10, %cst_9 {dimension_numbers = #tpu.dot_dimension_numbers<[1], [0], [0], [1], [0, 0, 1, 1], [], []>} : vector<64x128xbf16>, vector<128x128xbf16>, vector<64x128xf32> -> vector<64x128xf32>
    %12 = arith.addf %7, %11 : vector<64x128xf32>
    %13 = vector.extract_strided_slice %2 {offsets = [32, 0], sizes = [64, 128], strides = [1, 1]} : vector<96x128xbf16> to vector<64x128xbf16>
    %c6 = arith.constant 6 : index
    %c0_10 = arith.constant 0 : index
    %c0_11 = arith.constant 0 : index
    %14 = vector.load %arg2[%c6, %c0_10, %c0_11] : memref<9x128x128xbf16, #tpu.memory_space<vmem>>, vector<1x128x128xbf16>
    %15 = vector.shape_cast %14 : vector<1x128x128xbf16> to vector<128x128xbf16>
    %cst_12 = arith.constant dense<0.000000e+00> : vector<64x128xf32>
    %16 = tpu.matmul %13, %15, %cst_12 {dimension_numbers = #tpu.dot_dimension_numbers<[1], [0], [0], [1], [0, 0, 1, 1], [], []>} : vector<64x128xbf16>, vector<128x128xbf16>, vector<64x128xf32> -> vector<64x128xf32>
    %17 = arith.addf %12, %16 : vector<64x128xf32>
    %c0_13 = arith.constant 0 : index
    %c1 = arith.constant 1 : index
    %c0_14 = arith.constant 0 : index
    %c0_15 = arith.constant 0 : index
    %18 = vector.load %arg1[%c0_13, %c1, %c0_14, %c0_15] : memref<1x3x96x128xbf16, #tpu.memory_space<vmem>>, vector<1x1x96x128xbf16>
    %19 = vector.shape_cast %18 : vector<1x1x96x128xbf16> to vector<96x128xbf16>
    %20 = vector.extract_strided_slice %19 {offsets = [0, 0], sizes = [64, 128], strides = [1, 1]} : vector<96x128xbf16> to vector<64x128xbf16>
    %c1_16 = arith.constant 1 : index
    %c0_17 = arith.constant 0 : index
    %c0_18 = arith.constant 0 : index
    %21 = vector.load %arg2[%c1_16, %c0_17, %c0_18] : memref<9x128x128xbf16, #tpu.memory_space<vmem>>, vector<1x128x128xbf16>
    %22 = vector.shape_cast %21 : vector<1x128x128xbf16> to vector<128x128xbf16>
    %cst_19 = arith.constant dense<0.000000e+00> : vector<64x128xf32>
    %23 = tpu.matmul %20, %22, %cst_19 {dimension_numbers = #tpu.dot_dimension_numbers<[1], [0], [0], [1], [0, 0, 1, 1], [], []>} : vector<64x128xbf16>, vector<128x128xbf16>, vector<64x128xf32> -> vector<64x128xf32>
    %24 = arith.addf %17, %23 : vector<64x128xf32>
    %25 = vector.extract_strided_slice %19 {offsets = [16, 0], sizes = [64, 128], strides = [1, 1]} : vector<96x128xbf16> to vector<64x128xbf16>
    %c4 = arith.constant 4 : index
    %c0_20 = arith.constant 0 : index
    %c0_21 = arith.constant 0 : index
    %26 = vector.load %arg2[%c4, %c0_20, %c0_21] : memref<9x128x128xbf16, #tpu.memory_space<vmem>>, vector<1x128x128xbf16>
    %27 = vector.shape_cast %26 : vector<1x128x128xbf16> to vector<128x128xbf16>
    %cst_22 = arith.constant dense<0.000000e+00> : vector<64x128xf32>
    %28 = tpu.matmul %25, %27, %cst_22 {dimension_numbers = #tpu.dot_dimension_numbers<[1], [0], [0], [1], [0, 0, 1, 1], [], []>} : vector<64x128xbf16>, vector<128x128xbf16>, vector<64x128xf32> -> vector<64x128xf32>
    %29 = arith.addf %24, %28 : vector<64x128xf32>
    %30 = vector.extract_strided_slice %19 {offsets = [32, 0], sizes = [64, 128], strides = [1, 1]} : vector<96x128xbf16> to vector<64x128xbf16>
    %c7 = arith.constant 7 : index
    %c0_23 = arith.constant 0 : index
    %c0_24 = arith.constant 0 : index
    %31 = vector.load %arg2[%c7, %c0_23, %c0_24] : memref<9x128x128xbf16, #tpu.memory_space<vmem>>, vector<1x128x128xbf16>
    %32 = vector.shape_cast %31 : vector<1x128x128xbf16> to vector<128x128xbf16>
    %cst_25 = arith.constant dense<0.000000e+00> : vector<64x128xf32>
    %33 = tpu.matmul %30, %32, %cst_25 {dimension_numbers = #tpu.dot_dimension_numbers<[1], [0], [0], [1], [0, 0, 1, 1], [], []>} : vector<64x128xbf16>, vector<128x128xbf16>, vector<64x128xf32> -> vector<64x128xf32>
    %34 = arith.addf %29, %33 : vector<64x128xf32>
    %c0_26 = arith.constant 0 : index
    %c2 = arith.constant 2 : index
    %c0_27 = arith.constant 0 : index
    %c0_28 = arith.constant 0 : index
    %35 = vector.load %arg1[%c0_26, %c2, %c0_27, %c0_28] : memref<1x3x96x128xbf16, #tpu.memory_space<vmem>>, vector<1x1x96x128xbf16>
    %36 = vector.shape_cast %35 : vector<1x1x96x128xbf16> to vector<96x128xbf16>
    %37 = vector.extract_strided_slice %36 {offsets = [0, 0], sizes = [64, 128], strides = [1, 1]} : vector<96x128xbf16> to vector<64x128xbf16>
    %c2_29 = arith.constant 2 : index
    %c0_30 = arith.constant 0 : index
    %c0_31 = arith.constant 0 : index
    %38 = vector.load %arg2[%c2_29, %c0_30, %c0_31] : memref<9x128x128xbf16, #tpu.memory_space<vmem>>, vector<1x128x128xbf16>
    %39 = vector.shape_cast %38 : vector<1x128x128xbf16> to vector<128x128xbf16>
    %cst_32 = arith.constant dense<0.000000e+00> : vector<64x128xf32>
    %40 = tpu.matmul %37, %39, %cst_32 {dimension_numbers = #tpu.dot_dimension_numbers<[1], [0], [0], [1], [0, 0, 1, 1], [], []>} : vector<64x128xbf16>, vector<128x128xbf16>, vector<64x128xf32> -> vector<64x128xf32>
    %41 = arith.addf %34, %40 : vector<64x128xf32>
    %42 = vector.extract_strided_slice %36 {offsets = [16, 0], sizes = [64, 128], strides = [1, 1]} : vector<96x128xbf16> to vector<64x128xbf16>
    %c5 = arith.constant 5 : index
    %c0_33 = arith.constant 0 : index
    %c0_34 = arith.constant 0 : index
    %43 = vector.load %arg2[%c5, %c0_33, %c0_34] : memref<9x128x128xbf16, #tpu.memory_space<vmem>>, vector<1x128x128xbf16>
    %44 = vector.shape_cast %43 : vector<1x128x128xbf16> to vector<128x128xbf16>
    %cst_35 = arith.constant dense<0.000000e+00> : vector<64x128xf32>
    %45 = tpu.matmul %42, %44, %cst_35 {dimension_numbers = #tpu.dot_dimension_numbers<[1], [0], [0], [1], [0, 0, 1, 1], [], []>} : vector<64x128xbf16>, vector<128x128xbf16>, vector<64x128xf32> -> vector<64x128xf32>
    %46 = arith.addf %41, %45 : vector<64x128xf32>
    %47 = vector.extract_strided_slice %36 {offsets = [32, 0], sizes = [64, 128], strides = [1, 1]} : vector<96x128xbf16> to vector<64x128xbf16>
    %c8 = arith.constant 8 : index
    %c0_36 = arith.constant 0 : index
    %c0_37 = arith.constant 0 : index
    %48 = vector.load %arg2[%c8, %c0_36, %c0_37] : memref<9x128x128xbf16, #tpu.memory_space<vmem>>, vector<1x128x128xbf16>
    %49 = vector.shape_cast %48 : vector<1x128x128xbf16> to vector<128x128xbf16>
    %cst_38 = arith.constant dense<0.000000e+00> : vector<64x128xf32>
    %50 = tpu.matmul %47, %49, %cst_38 {dimension_numbers = #tpu.dot_dimension_numbers<[1], [0], [0], [1], [0, 0, 1, 1], [], []>} : vector<64x128xbf16>, vector<128x128xbf16>, vector<64x128xf32> -> vector<64x128xf32>
    %51 = arith.addf %46, %50 : vector<64x128xf32>
    %c0_39 = arith.constant 0 : index
    %c0_40 = arith.constant 0 : index
    %52 = vector.load %arg3[%c0_39, %c0_40] : memref<1x128xf32, #tpu.memory_space<vmem>>, vector<1x128xf32>
    %53 = vector.broadcast %52 : vector<1x128xf32> to vector<64x128xf32>
    %54 = arith.addf %51, %53 : vector<64x128xf32>
    %55 = arith.truncf %54 : vector<64x128xf32> to vector<64x128xbf16>
    %c0_41 = arith.constant 0 : index
    %c0_42 = arith.constant 0 : index
    %c0_43 = arith.constant 0 : index
    %56 = vector.load %arg4[%c0_41, %c0_42, %c0_43] : memref<1x64x128xbf16, #tpu.memory_space<vmem>>, vector<1x64x128xbf16>
    %57 = vector.shape_cast %56 : vector<1x64x128xbf16> to vector<64x128xbf16>
    %58 = vector.shape_cast %55 : vector<64x128xbf16> to vector<1x64x128xbf16>
    tpu.vector_store %arg4[%c0_41, %c0_42, %c0_43], %58 {strides = array<i32>} : memref<1x64x128xbf16, #tpu.memory_space<vmem>>, vector<1x64x128xbf16>,
    return
  }
  func.func @transform_0(%arg0: i32) -> (i32, i32, i32, i32) {
    %c0_i32 = arith.constant 0 : i32
    %c0_i32_0 = arith.constant 0 : i32
    %c0_i32_1 = arith.constant 0 : i32
    %c0_i32_2 = arith.constant 0 : i32
    return %arg0, %c0_i32, %c0_i32_0, %c0_i32_1 : i32, i32, i32, i32
  }
  func.func @transform_1(%arg0: i32) -> (i32, i32, i32) {
    %c0_i32 = arith.constant 0 : i32
    %c0_i32_0 = arith.constant 0 : i32
    %c0_i32_1 = arith.constant 0 : i32
    %c0_i32_2 = arith.constant 0 : i32
    return %c0_i32, %c0_i32_0, %c0_i32_1 : i32, i32, i32
  }
  func.func @transform_2(%arg0: i32) -> (i32, i32) {
    %c0_i32 = arith.constant 0 : i32
    %c0_i32_0 = arith.constant 0 : i32
    %c0_i32_1 = arith.constant 0 : i32
    return %c0_i32, %c0_i32_0 : i32, i32
  }
  func.func @transform_3(%arg0: i32) -> (i32, i32, i32) {
    %c0_i32 = arith.constant 0 : i32
    %c0_i32_0 = arith.constant 0 : i32
    %c0_i32_1 = arith.constant 0 : i32
    return %arg0, %c0_i32, %c0_i32_0 : i32, i32, i32
  }
}

module attributes {stable_mosaic.version = 11 : i64} {
  func.func @_res_block_kernel(%arg0: i32, %arg1: memref<1x3x96x128xbf16, #tpu.memory_space<vmem>>, %arg2: memref<9x128x128xbf16, #tpu.memory_space<vmem>>, %arg3: memref<1x128xf32, #tpu.memory_space<vmem>>, %arg4: memref<128x128xbf16, #tpu.memory_space<vmem>>, %arg5: memref<1x128xf32, #tpu.memory_space<vmem>>, %arg6: memref<1x64x128xbf16, #tpu.memory_space<vmem>>) attributes {dimension_semantics = [#tpu.dimension_semantics<parallel>], iteration_bounds = array<i64: 2>, scalar_prefetch = 0 : i64, scratch_operands = 0 : i64, tpu.core_type = #tpu.core_type<tc>, window_params = [{transform_indices = @transform_0, window_bounds = array<i64: 1, 3, 96, 128>}, {pipeline_mode = #tpu.pipeline_mode<synchronous>, transform_indices = @transform_1, window_bounds = array<i64: 9, 128, 128>}, {pipeline_mode = #tpu.pipeline_mode<synchronous>, transform_indices = @transform_2, window_bounds = array<i64: 1, 128>}, {pipeline_mode = #tpu.pipeline_mode<synchronous>, transform_indices = @transform_3, window_bounds = array<i64: 128, 128>}, {pipeline_mode = #tpu.pipeline_mode<synchronous>, transform_indices = @transform_4, window_bounds = array<i64: 1, 128>}, {transform_indices = @transform_5, window_bounds = array<i64: 1, 64, 128>}]} {
    %cst = arith.constant 0.000000e+00 : f32
    %0 = vector.broadcast %cst : f32 to vector<64x128xf32>
    %c0 = arith.constant 0 : index
    %c0_0 = arith.constant 0 : index
    %c0_1 = arith.constant 0 : index
    %c0_2 = arith.constant 0 : index
    %1 = vector.load %arg1[%c0, %c0_0, %c0_1, %c0_2] : memref<1x3x96x128xbf16, #tpu.memory_space<vmem>>, vector<1x1x96x128xbf16>
    %2 = vector.shape_cast %1 : vector<1x1x96x128xbf16> to vector<96x128xbf16>
    %3 = vector.extract_strided_slice %2 {offsets = [0, 0], sizes = [64, 128], strides = [1, 1]} : vector<96x128xbf16> to vector<64x128xbf16>
    %c0_3 = arith.constant 0 : index
    %c0_4 = arith.constant 0 : index
    %c0_5 = arith.constant 0 : index
    %4 = vector.load %arg2[%c0_3, %c0_4, %c0_5] : memref<9x128x128xbf16, #tpu.memory_space<vmem>>, vector<1x128x128xbf16>
    %5 = vector.shape_cast %4 : vector<1x128x128xbf16> to vector<128x128xbf16>
    %cst_6 = arith.constant dense<0.000000e+00> : vector<64x128xf32>
    %6 = tpu.matmul %3, %5, %cst_6 {dimension_numbers = #tpu.dot_dimension_numbers<[1], [0], [0], [1], [0, 0, 1, 1], [], []>} : vector<64x128xbf16>, vector<128x128xbf16>, vector<64x128xf32> -> vector<64x128xf32>
    %7 = arith.addf %0, %6 : vector<64x128xf32>
    %8 = vector.extract_strided_slice %2 {offsets = [16, 0], sizes = [64, 128], strides = [1, 1]} : vector<96x128xbf16> to vector<64x128xbf16>
    %c3 = arith.constant 3 : index
    %c0_7 = arith.constant 0 : index
    %c0_8 = arith.constant 0 : index
    %9 = vector.load %arg2[%c3, %c0_7, %c0_8] : memref<9x128x128xbf16, #tpu.memory_space<vmem>>, vector<1x128x128xbf16>
    %10 = vector.shape_cast %9 : vector<1x128x128xbf16> to vector<128x128xbf16>
    %cst_9 = arith.constant dense<0.000000e+00> : vector<64x128xf32>
    %11 = tpu.matmul %8, %10, %cst_9 {dimension_numbers = #tpu.dot_dimension_numbers<[1], [0], [0], [1], [0, 0, 1, 1], [], []>} : vector<64x128xbf16>, vector<128x128xbf16>, vector<64x128xf32> -> vector<64x128xf32>
    %12 = arith.addf %7, %11 : vector<64x128xf32>
    %13 = vector.extract_strided_slice %2 {offsets = [32, 0], sizes = [64, 128], strides = [1, 1]} : vector<96x128xbf16> to vector<64x128xbf16>
    %c6 = arith.constant 6 : index
    %c0_10 = arith.constant 0 : index
    %c0_11 = arith.constant 0 : index
    %14 = vector.load %arg2[%c6, %c0_10, %c0_11] : memref<9x128x128xbf16, #tpu.memory_space<vmem>>, vector<1x128x128xbf16>
    %15 = vector.shape_cast %14 : vector<1x128x128xbf16> to vector<128x128xbf16>
    %cst_12 = arith.constant dense<0.000000e+00> : vector<64x128xf32>
    %16 = tpu.matmul %13, %15, %cst_12 {dimension_numbers = #tpu.dot_dimension_numbers<[1], [0], [0], [1], [0, 0, 1, 1], [], []>} : vector<64x128xbf16>, vector<128x128xbf16>, vector<64x128xf32> -> vector<64x128xf32>
    %17 = arith.addf %12, %16 : vector<64x128xf32>
    %c0_13 = arith.constant 0 : index
    %c1 = arith.constant 1 : index
    %c0_14 = arith.constant 0 : index
    %c0_15 = arith.constant 0 : index
    %18 = vector.load %arg1[%c0_13, %c1, %c0_14, %c0_15] : memref<1x3x96x128xbf16, #tpu.memory_space<vmem>>, vector<1x1x96x128xbf16>
    %19 = vector.shape_cast %18 : vector<1x1x96x128xbf16> to vector<96x128xbf16>
    %20 = vector.extract_strided_slice %19 {offsets = [0, 0], sizes = [64, 128], strides = [1, 1]} : vector<96x128xbf16> to vector<64x128xbf16>
    %c1_16 = arith.constant 1 : index
    %c0_17 = arith.constant 0 : index
    %c0_18 = arith.constant 0 : index
    %21 = vector.load %arg2[%c1_16, %c0_17, %c0_18] : memref<9x128x128xbf16, #tpu.memory_space<vmem>>, vector<1x128x128xbf16>
    %22 = vector.shape_cast %21 : vector<1x128x128xbf16> to vector<128x128xbf16>
    %cst_19 = arith.constant dense<0.000000e+00> : vector<64x128xf32>
    %23 = tpu.matmul %20, %22, %cst_19 {dimension_numbers = #tpu.dot_dimension_numbers<[1], [0], [0], [1], [0, 0, 1, 1], [], []>} : vector<64x128xbf16>, vector<128x128xbf16>, vector<64x128xf32> -> vector<64x128xf32>
    %24 = arith.addf %17, %23 : vector<64x128xf32>
    %25 = vector.extract_strided_slice %19 {offsets = [16, 0], sizes = [64, 128], strides = [1, 1]} : vector<96x128xbf16> to vector<64x128xbf16>
    %c4 = arith.constant 4 : index
    %c0_20 = arith.constant 0 : index
    %c0_21 = arith.constant 0 : index
    %26 = vector.load %arg2[%c4, %c0_20, %c0_21] : memref<9x128x128xbf16, #tpu.memory_space<vmem>>, vector<1x128x128xbf16>
    %27 = vector.shape_cast %26 : vector<1x128x128xbf16> to vector<128x128xbf16>
    %cst_22 = arith.constant dense<0.000000e+00> : vector<64x128xf32>
    %28 = tpu.matmul %25, %27, %cst_22 {dimension_numbers = #tpu.dot_dimension_numbers<[1], [0], [0], [1], [0, 0, 1, 1], [], []>} : vector<64x128xbf16>, vector<128x128xbf16>, vector<64x128xf32> -> vector<64x128xf32>
    %29 = arith.addf %24, %28 : vector<64x128xf32>
    %30 = vector.extract_strided_slice %19 {offsets = [32, 0], sizes = [64, 128], strides = [1, 1]} : vector<96x128xbf16> to vector<64x128xbf16>
    %c7 = arith.constant 7 : index
    %c0_23 = arith.constant 0 : index
    %c0_24 = arith.constant 0 : index
    %31 = vector.load %arg2[%c7, %c0_23, %c0_24] : memref<9x128x128xbf16, #tpu.memory_space<vmem>>, vector<1x128x128xbf16>
    %32 = vector.shape_cast %31 : vector<1x128x128xbf16> to vector<128x128xbf16>
    %cst_25 = arith.constant dense<0.000000e+00> : vector<64x128xf32>
    %33 = tpu.matmul %30, %32, %cst_25 {dimension_numbers = #tpu.dot_dimension_numbers<[1], [0], [0], [1], [0, 0, 1, 1], [], []>} : vector<64x128xbf16>, vector<128x128xbf16>, vector<64x128xf32> -> vector<64x128xf32>
    %34 = arith.addf %29, %33 : vector<64x128xf32>
    %c0_26 = arith.constant 0 : index
    %c2 = arith.constant 2 : index
    %c0_27 = arith.constant 0 : index
    %c0_28 = arith.constant 0 : index
    %35 = vector.load %arg1[%c0_26, %c2, %c0_27, %c0_28] : memref<1x3x96x128xbf16, #tpu.memory_space<vmem>>, vector<1x1x96x128xbf16>
    %36 = vector.shape_cast %35 : vector<1x1x96x128xbf16> to vector<96x128xbf16>
    %37 = vector.extract_strided_slice %36 {offsets = [0, 0], sizes = [64, 128], strides = [1, 1]} : vector<96x128xbf16> to vector<64x128xbf16>
    %c2_29 = arith.constant 2 : index
    %c0_30 = arith.constant 0 : index
    %c0_31 = arith.constant 0 : index
    %38 = vector.load %arg2[%c2_29, %c0_30, %c0_31] : memref<9x128x128xbf16, #tpu.memory_space<vmem>>, vector<1x128x128xbf16>
    %39 = vector.shape_cast %38 : vector<1x128x128xbf16> to vector<128x128xbf16>
    %cst_32 = arith.constant dense<0.000000e+00> : vector<64x128xf32>
    %40 = tpu.matmul %37, %39, %cst_32 {dimension_numbers = #tpu.dot_dimension_numbers<[1], [0], [0], [1], [0, 0, 1, 1], [], []>} : vector<64x128xbf16>, vector<128x128xbf16>, vector<64x128xf32> -> vector<64x128xf32>
    %41 = arith.addf %34, %40 : vector<64x128xf32>
    %42 = vector.extract_strided_slice %36 {offsets = [16, 0], sizes = [64, 128], strides = [1, 1]} : vector<96x128xbf16> to vector<64x128xbf16>
    %c5 = arith.constant 5 : index
    %c0_33 = arith.constant 0 : index
    %c0_34 = arith.constant 0 : index
    %43 = vector.load %arg2[%c5, %c0_33, %c0_34] : memref<9x128x128xbf16, #tpu.memory_space<vmem>>, vector<1x128x128xbf16>
    %44 = vector.shape_cast %43 : vector<1x128x128xbf16> to vector<128x128xbf16>
    %cst_35 = arith.constant dense<0.000000e+00> : vector<64x128xf32>
    %45 = tpu.matmul %42, %44, %cst_35 {dimension_numbers = #tpu.dot_dimension_numbers<[1], [0], [0], [1], [0, 0, 1, 1], [], []>} : vector<64x128xbf16>, vector<128x128xbf16>, vector<64x128xf32> -> vector<64x128xf32>
    %46 = arith.addf %41, %45 : vector<64x128xf32>
    %47 = vector.extract_strided_slice %36 {offsets = [32, 0], sizes = [64, 128], strides = [1, 1]} : vector<96x128xbf16> to vector<64x128xbf16>
    %c8 = arith.constant 8 : index
    %c0_36 = arith.constant 0 : index
    %c0_37 = arith.constant 0 : index
    %48 = vector.load %arg2[%c8, %c0_36, %c0_37] : memref<9x128x128xbf16, #tpu.memory_space<vmem>>, vector<1x128x128xbf16>
    %49 = vector.shape_cast %48 : vector<1x128x128xbf16> to vector<128x128xbf16>
    %cst_38 = arith.constant dense<0.000000e+00> : vector<64x128xf32>
    %50 = tpu.matmul %47, %49, %cst_38 {dimension_numbers = #tpu.dot_dimension_numbers<[1], [0], [0], [1], [0, 0, 1, 1], [], []>} : vector<64x128xbf16>, vector<128x128xbf16>, vector<64x128xf32> -> vector<64x128xf32>
    %51 = arith.addf %46, %50 : vector<64x128xf32>
    %c0_39 = arith.constant 0 : index
    %c0_40 = arith.constant 0 : index
    %52 = vector.load %arg3[%c0_39, %c0_40] : memref<1x128xf32, #tpu.memory_space<vmem>>, vector<1x128xf32>
    %53 = vector.broadcast %52 : vector<1x128xf32> to vector<64x128xf32>
    %54 = arith.addf %51, %53 : vector<64x128xf32>
    %cst_41 = arith.constant 0.000000e+00 : f32
    %55 = vector.broadcast %cst_41 : f32 to vector<64x128xf32>
    %56 = arith.maximumf %54, %55 : vector<64x128xf32>
    %57 = arith.truncf %56 : vector<64x128xf32> to vector<64x128xbf16>
    %c0_42 = arith.constant 0 : index
    %c0_43 = arith.constant 0 : index
    %58 = vector.load %arg4[%c0_42, %c0_43] : memref<128x128xbf16, #tpu.memory_space<vmem>>, vector<128x128xbf16>
    %cst_44 = arith.constant dense<0.000000e+00> : vector<64x128xf32>
    %59 = tpu.matmul %57, %58, %cst_44 {dimension_numbers = #tpu.dot_dimension_numbers<[1], [0], [0], [1], [0, 0, 1, 1], [], []>} : vector<64x128xbf16>, vector<128x128xbf16>, vector<64x128xf32> -> vector<64x128xf32>
    %c0_45 = arith.constant 0 : index
    %c0_46 = arith.constant 0 : index
    %60 = vector.load %arg5[%c0_45, %c0_46] : memref<1x128xf32, #tpu.memory_space<vmem>>, vector<1x128xf32>
    %61 = vector.broadcast %60 : vector<1x128xf32> to vector<64x128xf32>
    %62 = arith.addf %59, %61 : vector<64x128xf32>
    %63 = arith.extf %25 : vector<64x128xbf16> to vector<64x128xf32>
    %64 = arith.addf %62, %63 : vector<64x128xf32>
    %cst_47 = arith.constant 0.000000e+00 : f32
    %65 = vector.broadcast %cst_47 : f32 to vector<64x128xf32>
    %66 = arith.maximumf %64, %65 : vector<64x128xf32>
    %67 = arith.truncf %66 : vector<64x128xf32> to vector<64x128xbf16>
    %c0_48 = arith.constant 0 : index
    %c0_49 = arith.constant 0 : index
    %c0_50 = arith.constant 0 : index
    %68 = vector.load %arg6[%c0_48, %c0_49, %c0_50] : memref<1x64x128xbf16, #tpu.memory_space<vmem>>, vector<1x64x128xbf16>
    %69 = vector.shape_cast %68 : vector<1x64x128xbf16> to vector<64x128xbf16>
    %70 = vector.shape_cast %67 : vector<64x128xbf16> to vector<1x64x128xbf16>
    tpu.vector_store %arg6[%c0_48, %c0_49, %c0_50], %70 {strides = array<i32>} : memref<1x64x128xbf16, #tpu.memory_space<vmem>>, vector<1x64x128xbf16>,
    return
  }
  func.func @transform_0(%arg0: i32) -> (i32, i32, i32, i32) {
    %c0_i32 = arith.constant 0 : i32
    %c0_i32_0 = arith.constant 0 : i32
    %c0_i32_1 = arith.constant 0 : i32
    %c0_i32_2 = arith.constant 0 : i32
    return %arg0, %c0_i32, %c0_i32_0, %c0_i32_1 : i32, i32, i32, i32
  }
  func.func @transform_1(%arg0: i32) -> (i32, i32, i32) {
    %c0_i32 = arith.constant 0 : i32
    %c0_i32_0 = arith.constant 0 : i32
    %c0_i32_1 = arith.constant 0 : i32
    %c0_i32_2 = arith.constant 0 : i32
    return %c0_i32, %c0_i32_0, %c0_i32_1 : i32, i32, i32
  }
  func.func @transform_2(%arg0: i32) -> (i32, i32) {
    %c0_i32 = arith.constant 0 : i32
    %c0_i32_0 = arith.constant 0 : i32
    %c0_i32_1 = arith.constant 0 : i32
    return %c0_i32, %c0_i32_0 : i32, i32
  }
  func.func @transform_3(%arg0: i32) -> (i32, i32) {
    %c0_i32 = arith.constant 0 : i32
    %c0_i32_0 = arith.constant 0 : i32
    %c0_i32_1 = arith.constant 0 : i32
    return %c0_i32, %c0_i32_0 : i32, i32
  }
  func.func @transform_4(%arg0: i32) -> (i32, i32) {
    %c0_i32 = arith.constant 0 : i32
    %c0_i32_0 = arith.constant 0 : i32
    %c0_i32_1 = arith.constant 0 : i32
    return %c0_i32, %c0_i32_0 : i32, i32
  }
  func.func @transform_5(%arg0: i32) -> (i32, i32, i32) {
    %c0_i32 = arith.constant 0 : i32
    %c0_i32_0 = arith.constant 0 : i32
    %c0_i32_1 = arith.constant 0 : i32
    return %arg0, %c0_i32, %c0_i32_0 : i32, i32, i32
  }
}

</mosaic_0001>

<llo_original>
// kernel: encoder_forward.5
$region0: #{encoder_forward.5}
  #allocation0 [shape = 'u32[]', space=smem, size = 0x4, offset = 0x4, fixed_abs, tag = 'smem constant byte address 0x4 - core index']
  #allocation1 [shape = 'u32[144,128]{1,0:T(1,128)}', space=vmem, size = 0x12000, scoped, tag = 'internal scratch']
  %s0 = inlined_call_operand.vmem [shape: bf16[2,2,144,128], index: 0, kind: input, shape index: {}]
  %s1 = inlined_call_operand.vmem [shape: bf16[4,128,128], index: 1, kind: input, shape index: {}]
  %s2 = inlined_call_operand.vmem [shape: f32[1,128], index: 2, kind: input, shape index: {}]
  %s3 = inlined_call_operand.vmem [shape: bf16[2,128,128], index: 3, kind: output, shape index: {}]
  %s4 = sld [smem:[#allocation0]]
  $region45: #{encoder_forward.5} parent=0
    _
  %s6 = ssub.s32 1, %s4
  %s7 = scalar_select 0, %s6, %s4
  loop: start=0, step=1, limit=4
  $region2: #{encoder_forward.5} parent=0 // loop_pre_header
    _
  $region3: #{encoder_forward.5} parent=0 // loop_header
    %s9 = sphi 0, %s13
    %p10 = scmp.ge.s32.totalorder %s9, 4
    %s19 = sphi 0, %s21
    %s22 = sphi 0, %s19
    %s23 = sphi 0, %s22
    %s39 = sphi 0, %s23
    %s43 = sphi 0, %s43
    %s45 = sphi 0, %s43
    %s46 = sphi 0, %s45
    %s60 = sphi 0, %s46
    %s64 = sphi 0, %s64
    %s66 = sphi 0, %s64
    %s67 = sphi 0, %s66
    %s81 = sphi 0, %s67
    %s87 = sphi 0, %s89
    %s90 = sphi 0, %s87
    %s91 = sphi 0, %s90
    %s107 = sphi 0, %s91
  $region4: #{encoder_forward.5} parent=0 // loop_header_branch
    %12 = sbr.rel (%p10) target = $region8
  $region5: #{encoder_forward.5} parent=0 // loop_body
    %s14 = ssub.s32 %s9, 1
    %s15 = ssub.s32 %s9, 2
    %s16 = sadd.s32 %s9, 1
    %s17 = ssub.s32 %s9, %s16
    %p18 = scmp.eq.s32.totalorder %s17, 0
    %s20 = sadd.s32 %s19, 1
    %s21 = scalar_select %p18, %s19, %s20
    %p24 = pneg %p18
    %p25 = scmp.eq.s32.totalorder %s9, 1
    %p26 = por %p24, %p25
    %p27 = scmp.ne.s32.totalorder %s19, %s22
    %p28 = scmp.eq.s32.totalorder %s9, 0
    %p29 = por %p27, %p28
    %p30 = scmp.ne.s32.totalorder %s19, %s22
    %p31 = scmp.eq.s32.totalorder %s14, 1
    %p32 = por %p30, %p31
    %p33 = scmp.ne.s32.totalorder %s22, %s23
    %p34 = scmp.eq.s32.totalorder %s14, 0
    %p35 = por %p33, %p34
    %p36 = scmp.ne.s32.totalorder %s22, %s23
    %p37 = scmp.eq.s32.totalorder %s15, 1
    %p38 = por %p36, %p37
    %p40 = scmp.ne.s32.totalorder %s23, %s39
    %p41 = scmp.eq.s32.totalorder %s15, 0
    %p42 = por %p40, %p41
    %s44 = sadd.s32 %s43, 1
    %p47 = scmp.eq.s32.totalorder %s9, 1
    %p48 = scmp.ne.s32.totalorder %s43, %s45
    %p49 = scmp.eq.s32.totalorder %s9, 0
    %p50 = por %p48, %p49
    %p51 = scmp.ne.s32.totalorder %s43, %s45
    %p52 = scmp.eq.s32.totalorder %s14, 1
    %p53 = por %p51, %p52
    %p54 = scmp.ne.s32.totalorder %s45, %s46
    %p55 = scmp.eq.s32.totalorder %s14, 0
    %p56 = por %p54, %p55
    %p57 = scmp.ne.s32.totalorder %s45, %s46
    %p58 = scmp.eq.s32.totalorder %s15, 1
    %p59 = por %p57, %p58
    %p61 = scmp.ne.s32.totalorder %s46, %s60
    %p62 = scmp.eq.s32.totalorder %s15, 0
    %p63 = por %p61, %p62
    %s65 = sadd.s32 %s64, 1
    %p68 = scmp.eq.s32.totalorder %s9, 1
    %p69 = scmp.ne.s32.totalorder %s64, %s66
    %p70 = scmp.eq.s32.totalorder %s9, 0
    %p71 = por %p69, %p70
    %p72 = scmp.ne.s32.totalorder %s64, %s66
    %p73 = scmp.eq.s32.totalorder %s14, 1
    %p74 = por %p72, %p73
    %p75 = scmp.ne.s32.totalorder %s66, %s67
    %p76 = scmp.eq.s32.totalorder %s14, 0
    %p77 = por %p75, %p76
    %p78 = scmp.ne.s32.totalorder %s66, %s67
    %p79 = scmp.eq.s32.totalorder %s15, 1
    %p80 = por %p78, %p79
    %p82 = scmp.ne.s32.totalorder %s67, %s81
    %p83 = scmp.eq.s32.totalorder %s15, 0
    %p84 = por %p82, %p83
    %s85 = ssub.s32 %s9, %s16
    %p86 = scmp.eq.s32.totalorder %s85, 0
    %s88 = sadd.s32 %s87, 1
    %s89 = scalar_select %p86, %s87, %s88
    %p92 = pneg %p86
    %p93 = scmp.eq.s32.totalorder %s9, 1
    %p94 = por %p92, %p93
    %p95 = scmp.ne.s32.totalorder %s87, %s90
    %p96 = scmp.eq.s32.totalorder %s9, 0
    %p97 = por %p95, %p96
    %p98 = scmp.ne.s32.totalorder %s87, %s90
    %p99 = scmp.eq.s32.totalorder %s14, 1
    %p100 = por %p98, %p99
    %p101 = scmp.ne.s32.totalorder %s90, %s91
    %p102 = scmp.eq.s32.totalorder %s14, 0
    %p103 = por %p101, %p102
    %p104 = scmp.ne.s32.totalorder %s90, %s91
    %p105 = scmp.eq.s32.totalorder %s15, 1
    %p106 = por %p104, %p105
    %p108 = scmp.ne.s32.totalorder %s91, %s107
    %p109 = scmp.eq.s32.totalorder %s15, 0
    %p110 = por %p108, %p109
    %p111 = scmp.le.s32.totalorder 1, %s9
    %p112 = scmp.lt.s32.totalorder %s9, 3
    %p113 = pnand %p111, %p112
    %p114 = pneg %p113
    // Predicated region
    $region9: #{encoder_forward.5} parent=5 // pred_check
      _
    $region10: #{encoder_forward.5} parent=5 // pred_check_branch
      %116 = sbr.rel (%p113) target = $region12
    $region11: #{encoder_forward.5} parent=5 // pred_region
      %s117 = ssub.s32 %s9, 1
      // Predicated region
      $region13: #{encoder_forward.5} parent=11 // pred_check
        %p118 = pneg %p56
      $region14: #{encoder_forward.5} parent=11 // pred_check_branch
        %120 = sbr.rel (%p118) target = $region16
      $region15: #{encoder_forward.5} parent=11 // pred_region
        _
      $region16: #{encoder_forward.5} parent=11 // pred_fallthru
        _
      // Predicated region
      $region17: #{encoder_forward.5} parent=11 // pred_check
        %p121 = pneg %p77
      $region18: #{encoder_forward.5} parent=11 // pred_check_branch
        %123 = sbr.rel (%p121) target = $region20
      $region19: #{encoder_forward.5} parent=11 // pred_region
        _
      $region20: #{encoder_forward.5} parent=11 // pred_fallthru
        _
    $region12: #{encoder_forward.5} parent=5 // pred_fallthru
      _
    %p124 = scmp.lt.s32.totalorder %s9, 2
    // Predicated region
    $region21: #{encoder_forward.5} parent=5 // pred_check
      %p125 = pneg %p124
    $region22: #{encoder_forward.5} parent=5 // pred_check_branch
      %127 = sbr.rel (%p125) target = $region24
    $region23: #{encoder_forward.5} parent=5 // pred_region
      // Predicated region
      $region25: #{encoder_forward.5} parent=23 // pred_check
        %p128 = pneg %p29
      $region26: #{encoder_forward.5} parent=23 // pred_check_branch
        %130 = sbr.rel (%p128) target = $region28
      $region27: #{encoder_forward.5} parent=23 // pred_region
        %p131 = scmp.lt.s32.totalorder %s9, 1
        %s132 = scalar_select %p131, %s9, 1
        %s133 = smul.addr %s132, 36
        %s134 = smul.addr %s133, 4
        %s135 = scalar_lea.vmem %s0, %s134
      $region28: #{encoder_forward.5} parent=23 // pred_fallthru
        _
    $region24: #{encoder_forward.5} parent=5 // pred_fallthru
      _
    %p136 = scmp.le.s32.totalorder 1, %s9
    %p137 = scmp.lt.s32.totalorder %s9, 3
    %p138 = pnand %p136, %p137
    %p139 = pneg %p138
    // Predicated region
    $region29: #{encoder_forward.5} parent=5 // pred_check
      _
    $region30: #{encoder_forward.5} parent=5 // pred_check_branch
      %141 = sbr.rel (%p138) target = $region32
    $region31: #{encoder_forward.5} parent=5 // pred_region
      %s142 = ssub.s32 %s9, 1
      %p143 = scmp.lt.s32.totalorder %s14, 1
      %s144 = scalar_select %p143, %s14, 1
      %s145 = smul.addr %s144, 36
      %s146 = smul.addr %s145, 4
      %s147 = scalar_lea.vmem %s0, %s146
      %p148 = pneg %p35
      %p149 = pneg %p32
      %p150 = pneg %p56
      %p151 = pneg %p53
      %p152 = pneg %p77
      %p153 = pneg %p74
      %p154 = pneg %p103
      %p155 = pneg %p100
      %p156 = scmp.lt.s32.totalorder %s14, 1
      %s157 = scalar_select %p156, %s14, 1
      %s158 = smul.addr %s157, 16
      %s159 = smul.addr %s158, 4
      %s160 = scalar_lea.vmem %s3, %s159
      %p161 = scmp.lt.s32.totalorder %s14, 1
      %s162 = scalar_select %p161, %s14, 1
      %s163 = smul.addr %s162, 36
      %s164 = smul.addr %s163, 4
      %s165 = scalar_lea.vmem %s0, %s164
      %p166 = scmp.lt.s32.totalorder %s14, 1
      %s167 = scalar_select %p166, %s14, 1
      %s168 = smul.addr %s167, 16
      %s169 = smul.addr %s168, 4
      %s170 = scalar_lea.vmem %s3, %s169
      %v172 = vld [vmem:[%s165] sm:$0xf]
      %v173 = vld [vmem:[%s165 + $0x4] sm:$0xf]
      %v174 = vld [vmem:[%s165 + $0x8] sm:$0xf]
      %v175 = vld [vmem:[%s165 + $0xc] sm:$0xf]
      %v176 = vld [vmem:[%s165 + $0x10] sm:$0xf]
      %v177 = vld [vmem:[%s165 + $0x14] sm:$0xf]
      %v178 = vld [vmem:[%s165 + $0x18] sm:$0xf]
      %v179 = vld [vmem:[%s165 + $0x1c] sm:$0xf]
      %v180 = vld [vmem:[%s165 + $0x20] sm:$0xf]
      %v181 = vld [vmem:[%s165 + $0x24] sm:$0xf]
      %v182 = vld [vmem:[%s165 + $0x28] sm:$0xf]
      %v183 = vld [vmem:[%s165 + $0x2c] sm:$0xf]
      %v184 = vld [vmem:[%s165 + $0x30] sm:$0xf]
      %v185 = vld [vmem:[%s165 + $0x34] sm:$0xf]
      %v186 = vld [vmem:[%s165 + $0x38] sm:$0xf]
      %v187 = vld [vmem:[%s165 + $0x3c] sm:$0xf]
      %v188 = vld [vmem:[%s165 + $0x40] sm:$0xf]
      %v189 = vld [vmem:[%s165 + $0x44] sm:$0xf]
      %v190 = vld [vmem:[%s1] sm:$0xf]
      %v191 = vld [vmem:[%s1 + $0x4] sm:$0xf]
      %v192 = vld [vmem:[%s1 + $0x8] sm:$0xf]
      %v193 = vld [vmem:[%s1 + $0xc] sm:$0xf]
      %v194 = vld [vmem:[%s1 + $0x10] sm:$0xf]
      %v195 = vld [vmem:[%s1 + $0x14] sm:$0xf]
      %v196 = vld [vmem:[%s1 + $0x18] sm:$0xf]
      %v197 = vld [vmem:[%s1 + $0x1c] sm:$0xf]
      %v198 = vld [vmem:[%s1 + $0x20] sm:$0xf]
      %v199 = vld [vmem:[%s1 + $0x24] sm:$0xf]
      %v200 = vld [vmem:[%s1 + $0x28] sm:$0xf]
      %v201 = vld [vmem:[%s1 + $0x2c] sm:$0xf]
      %v202 = vld [vmem:[%s1 + $0x30] sm:$0xf]
      %v203 = vld [vmem:[%s1 + $0x34] sm:$0xf]
      %v204 = vld [vmem:[%s1 + $0x38] sm:$0xf]
      %v205 = vld [vmem:[%s1 + $0x3c] sm:$0xf]
      %s206 = scalar_lea.vmem %s1, 128
      %v207 = vld [vmem:[%s206] sm:$0xf]
      %v208 = vld [vmem:[%s206 + $0x4] sm:$0xf]
      %v209 = vld [vmem:[%s206 + $0x8] sm:$0xf]
      %v210 = vld [vmem:[%s206 + $0xc] sm:$0xf]
      %v211 = vld [vmem:[%s206 + $0x10] sm:$0xf]
      %v212 = vld [vmem:[%s206 + $0x14] sm:$0xf]
      %v213 = vld [vmem:[%s206 + $0x18] sm:$0xf]
      %v214 = vld [vmem:[%s206 + $0x1c] sm:$0xf]
      %v215 = vld [vmem:[%s206 + $0x20] sm:$0xf]
      %v216 = vld [vmem:[%s206 + $0x24] sm:$0xf]
      %v217 = vld [vmem:[%s206 + $0x28] sm:$0xf]
      %v218 = vld [vmem:[%s206 + $0x2c] sm:$0xf]
      %v219 = vld [vmem:[%s206 + $0x30] sm:$0xf]
      %v220 = vld [vmem:[%s206 + $0x34] sm:$0xf]
      %v221 = vld [vmem:[%s206 + $0x38] sm:$0xf]
      %v222 = vld [vmem:[%s206 + $0x3c] sm:$0xf]
      %v239 = vunpack.c.l.b16 %v174
      %v240 = vunpack.c.l.b16 %v175
      %v241 = vunpack.c.l.b16 %v176
      %v242 = vunpack.c.l.b16 %v177
      %v243 = vunpack.c.l.b16 %v178
      %v244 = vunpack.c.l.b16 %v179
      %v245 = vunpack.c.l.b16 %v180
      %v246 = vunpack.c.l.b16 %v181
      %v247 = vunpack.c.l.b16 %v182
      %v248 = vunpack.c.l.b16 %v183
      %v249 = vunpack.c.l.b16 %v184
      %v250 = vunpack.c.l.b16 %v185
      %v251 = vunpack.c.l.b16 %v186
      %v252 = vunpack.c.l.b16 %v187
      %v253 = vunpack.c.l.b16 %v188
      %v254 = vunpack.c.l.b16 %v189
      %v255 = vpack.c.b16 %v240, %v239
      %v256 = vpack.c.b16 %v242, %v241
      %v257 = vpack.c.b16 %v244, %v243
      %v258 = vpack.c.b16 %v246, %v245
      %v259 = vpack.c.b16 %v248, %v247
      %v260 = vpack.c.b16 %v250, %v249
      %v261 = vpack.c.b16 %v252, %v251
      %v262 = vpack.c.b16 %v254, %v253
      %v287 = vunpack.c.l.b16 %v207
      %v288 = vunpack.c.l.b16 %v208
      %v289 = vunpack.c.l.b16 %v209
      %v290 = vunpack.c.l.b16 %v210
      %v291 = vunpack.c.l.b16 %v211
      %v292 = vunpack.c.l.b16 %v212
      %v293 = vunpack.c.l.b16 %v213
      %v294 = vunpack.c.l.b16 %v214
      %v295 = vunpack.c.l.b16 %v215
      %v296 = vunpack.c.l.b16 %v216
      %v297 = vunpack.c.l.b16 %v217
      %v298 = vunpack.c.l.b16 %v218
      %v299 = vunpack.c.l.b16 %v219
      %v300 = vunpack.c.l.b16 %v220
      %v301 = vunpack.c.l.b16 %v221
      %v302 = vunpack.c.l.b16 %v222
      %v303 = vpack.c.b16 %v288, %v287
      %v304 = vpack.c.b16 %v290, %v289
      %v305 = vpack.c.b16 %v292, %v291
      %v306 = vpack.c.b16 %v294, %v293
      %v307 = vpack.c.b16 %v296, %v295
      %v308 = vpack.c.b16 %v298, %v297
      %v309 = vpack.c.b16 %v300, %v299
      %v310 = vpack.c.b16 %v302, %v301
      %319 = vmatprep.subr.bf16.mxu0 0
      %320 = vmatpush1.bf16.msra.mxu0 %v303
      %321 = vmatprep.subr.bf16.mxu0 0
      %322 = vmatpush1.bf16.msra.mxu0 %v304
      %323 = vmatprep.subr.bf16.mxu0 0
      %324 = vmatpush1.bf16.msra.mxu0 %v305
      %325 = vmatprep.subr.bf16.mxu0 0
      %326 = vmatpush1.bf16.msra.mxu0 %v306
      %327 = vmatprep.subr.bf16.mxu0 0
      %328 = vmatpush1.bf16.msra.mxu0 %v307
      %329 = vmatprep.subr.bf16.mxu0 0
      %330 = vmatpush1.bf16.msra.mxu0 %v308
      %331 = vmatprep.subr.bf16.mxu0 0
      %332 = vmatpush1.bf16.msra.mxu0 %v309
      %333 = vmatprep.subr.bf16.mxu0 0
      %334 = vmatpush1.bf16.msra.mxu0 %v310
      %335 = vmatprep.subr.bf16.mxu0 0
      %336 = vmatpush1.bf16.msra.mxu0 0
      %337 = vmatprep.subr.bf16.mxu0 0
      %338 = vmatpush1.bf16.msra.mxu0 0
      %339 = vmatprep.subr.bf16.mxu0 0
      %340 = vmatpush1.bf16.msra.mxu0 0
      %341 = vmatprep.subr.bf16.mxu0 0
      %342 = vmatpush1.bf16.msra.mxu0 0
      %343 = vmatprep.subr.bf16.mxu0 0
      %344 = vmatpush1.bf16.msra.mxu0 0
      %345 = vmatprep.subr.bf16.mxu0 0
      %346 = vmatpush1.bf16.msra.mxu0 0
      %347 = vmatprep.subr.bf16.mxu0 0
      %348 = vmatpush1.bf16.msra.mxu0 0
      %349 = vmatprep.subr.bf16.mxu0 0
      %350 = vmatpush1.bf16.msra.mxu0 0
      %351 = vmatprep.mubr.bf16.mxu0 0
      %352 = vmatmul.mubr.bf16.gmra.mrb[0].mxu0 %v255
      %v353 = vpop.f32.mrb[0].mxu0
      %v354 = vadd.f32 0.0, %v353
      %v355 = vpop.f32.mrb[0].mxu0
      %v356 = vpop.f32.mrb[0].mxu0
      %v357 = vadd.f32 0.0, %v356
      %v358 = vpop.f32.mrb[0].mxu0
      %359 = vmatprep.mubr.bf16.mxu0 0
      %360 = vmatmul.mubr.bf16.gmra.mrb[0].mxu0 %v256
      %v361 = vpop.f32.mrb[0].mxu0
      %v362 = vadd.f32 0.0, %v361
      %v363 = vpop.f32.mrb[0].mxu0
      %v364 = vpop.f32.mrb[0].mxu0
      %v365 = vadd.f32 0.0, %v364
      %v366 = vpop.f32.mrb[0].mxu0
      %367 = vmatprep.mubr.bf16.mxu0 0
      %368 = vmatmul.mubr.bf16.gmra.mrb[0].mxu0 %v257
      %v369 = vpop.f32.mrb[0].mxu0
      %v370 = vadd.f32 0.0, %v369
      %v371 = vpop.f32.mrb[0].mxu0
      %v372 = vpop.f32.mrb[0].mxu0
      %v373 = vadd.f32 0.0, %v372
      %v374 = vpop.f32.mrb[0].mxu0
      %375 = vmatprep.mubr.bf16.mxu0 0
      %376 = vmatmul.mubr.bf16.gmra.mrb[0].mxu0 %v258
      %v377 = vpop.f32.mrb[0].mxu0
      %v378 = vadd.f32 0.0, %v377
      %v379 = vpop.f32.mrb[0].mxu0
      %v380 = vpop.f32.mrb[0].mxu0
      %v381 = vadd.f32 0.0, %v380
      %v382 = vpop.f32.mrb[0].mxu0
      %383 = vmatprep.mubr.bf16.mxu0 0
      %384 = vmatmul.mubr.bf16.gmra.mrb[0].mxu0 %v259
      %v385 = vpop.f32.mrb[0].mxu0
      %v386 = vadd.f32 0.0, %v385
      %v387 = vpop.f32.mrb[0].mxu0
      %v388 = vpop.f32.mrb[0].mxu0
      %v389 = vadd.f32 0.0, %v388
      %v390 = vpop.f32.mrb[0].mxu0
      %391 = vmatprep.mubr.bf16.mxu0 0
      %392 = vmatmul.mubr.bf16.gmra.mrb[0].mxu0 %v260
      %v393 = vpop.f32.mrb[0].mxu0
      %v394 = vadd.f32 0.0, %v393
      %v395 = vpop.f32.mrb[0].mxu0
      %v396 = vpop.f32.mrb[0].mxu0
      %v397 = vadd.f32 0.0, %v396
      %v398 = vpop.f32.mrb[0].mxu0
      %399 = vmatprep.mubr.bf16.mxu0 0
      %400 = vmatmul.mubr.bf16.gmra.mrb[0].mxu0 %v261
      %v401 = vpop.f32.mrb[0].mxu0
      %v402 = vadd.f32 0.0, %v401
      %v403 = vpop.f32.mrb[0].mxu0
      %v404 = vpop.f32.mrb[0].mxu0
      %v405 = vadd.f32 0.0, %v404
      %v406 = vpop.f32.mrb[0].mxu0
      %407 = vmatprep.mubr.bf16.mxu0 0
      %408 = vmatmul.mubr.bf16.gmra.mrb[0].mxu0 %v262
      %v409 = vpop.f32.mrb[0].mxu0
      %v410 = vadd.f32 0.0, %v409
      %v411 = vpop.f32.mrb[0].mxu0
      %v412 = vpop.f32.mrb[0].mxu0
      %v413 = vadd.f32 0.0, %v412
      %v414 = vpop.f32.mrb[0].mxu0
      %415 = vdwg.mxu0
      %v418 = vunpack.c.l.b16 %v172
      %v419 = vunpack.c.l.b16 %v173
      %v420 = vpack.c.b16 %v419, %v418
      %v438 = vunpack.c.l.b16 %v190
      %v439 = vunpack.c.l.b16 %v191
      %v440 = vunpack.c.l.b16 %v192
      %v441 = vunpack.c.l.b16 %v193
      %v442 = vunpack.c.l.b16 %v194
      %v443 = vunpack.c.l.b16 %v195
      %v444 = vunpack.c.l.b16 %v196
      %v445 = vunpack.c.l.b16 %v197
      %v446 = vunpack.c.l.b16 %v198
      %v447 = vunpack.c.l.b16 %v199
      %v448 = vunpack.c.l.b16 %v200
      %v449 = vunpack.c.l.b16 %v201
      %v450 = vunpack.c.l.b16 %v202
      %v451 = vunpack.c.l.b16 %v203
      %v452 = vunpack.c.l.b16 %v204
      %v453 = vunpack.c.l.b16 %v205
      %v454 = vpack.c.b16 %v439, %v438
      %v455 = vpack.c.b16 %v441, %v440
      %v456 = vpack.c.b16 %v443, %v442
      %v457 = vpack.c.b16 %v445, %v444
      %v458 = vpack.c.b16 %v447, %v446
      %v459 = vpack.c.b16 %v449, %v448
      %v460 = vpack.c.b16 %v451, %v450
      %v461 = vpack.c.b16 %v453, %v452
      %470 = vmatprep.subr.bf16.mxu0 0
      %471 = vmatpush1.bf16.msra.mxu0 %v454
      %472 = vmatprep.subr.bf16.mxu0 0
      %473 = vmatpush1.bf16.msra.mxu0 %v455
      %474 = vmatprep.subr.bf16.mxu0 0
      %475 = vmatpush1.bf16.msra.mxu0 %v456
      %476 = vmatprep.subr.bf16.mxu0 0
      %477 = vmatpush1.bf16.msra.mxu0 %v457
      %478 = vmatprep.subr.bf16.mxu0 0
      %479 = vmatpush1.bf16.msra.mxu0 %v458
      %480 = vmatprep.subr.bf16.mxu0 0
      %481 = vmatpush1.bf16.msra.mxu0 %v459
      %482 = vmatprep.subr.bf16.mxu0 0
      %483 = vmatpush1.bf16.msra.mxu0 %v460
      %484 = vmatprep.subr.bf16.mxu0 0
      %485 = vmatpush1.bf16.msra.mxu0 %v461
      %486 = vmatprep.subr.bf16.mxu0 0
      %487 = vmatpush1.bf16.msra.mxu0 0
      %488 = vmatprep.subr.bf16.mxu0 0
      %489 = vmatpush1.bf16.msra.mxu0 0
      %490 = vmatprep.subr.bf16.mxu0 0
      %491 = vmatpush1.bf16.msra.mxu0 0
      %492 = vmatprep.subr.bf16.mxu0 0
      %493 = vmatpush1.bf16.msra.mxu0 0
      %494 = vmatprep.subr.bf16.mxu0 0
      %495 = vmatpush1.bf16.msra.mxu0 0
      %496 = vmatprep.subr.bf16.mxu0 0
      %497 = vmatpush1.bf16.msra.mxu0 0
      %498 = vmatprep.subr.bf16.mxu0 0
      %499 = vmatpush1.bf16.msra.mxu0 0
      %500 = vmatprep.subr.bf16.mxu0 0
      %501 = vmatpush1.bf16.msra.mxu0 0
      %502 = vmatprep.mubr.bf16.mxu0 0
      %503 = vmatmul.mubr.bf16.gmra.mrb[0].mxu0 %v420
      %v504 = vpop.f32.mrb[0].mxu0
      %v505 = vadd.f32 %v354, %v504
      %v506 = vpop.f32.mrb[0].mxu0
      %v507 = vpop.f32.mrb[0].mxu0
      %v508 = vadd.f32 %v357, %v507
      %v509 = vpop.f32.mrb[0].mxu0
      %510 = vmatprep.mubr.bf16.mxu0 0
      %511 = vmatmul.mubr.bf16.gmra.mrb[0].mxu0 %v255
      %v512 = vpop.f32.mrb[0].mxu0
      %v513 = vadd.f32 %v362, %v512
      %v514 = vpop.f32.mrb[0].mxu0
      %v515 = vpop.f32.mrb[0].mxu0
      %v516 = vadd.f32 %v365, %v515
      %v517 = vpop.f32.mrb[0].mxu0
      %518 = vmatprep.mubr.bf16.mxu0 0
      %519 = vmatmul.mubr.bf16.gmra.mrb[0].mxu0 %v256
      %v520 = vpop.f32.mrb[0].mxu0
      %v521 = vadd.f32 %v370, %v520
      %v522 = vpop.f32.mrb[0].mxu0
      %v523 = vpop.f32.mrb[0].mxu0
      %v524 = vadd.f32 %v373, %v523
      %v525 = vpop.f32.mrb[0].mxu0
      %526 = vmatprep.mubr.bf16.mxu0 0
      %527 = vmatmul.mubr.bf16.gmra.mrb[0].mxu0 %v257
      %v528 = vpop.f32.mrb[0].mxu0
      %v529 = vadd.f32 %v378, %v528
      %v530 = vpop.f32.mrb[0].mxu0
      %v531 = vpop.f32.mrb[0].mxu0
      %v532 = vadd.f32 %v381, %v531
      %v533 = vpop.f32.mrb[0].mxu0
      %534 = vmatprep.mubr.bf16.mxu0 0
      %535 = vmatmul.mubr.bf16.gmra.mrb[0].mxu0 %v258
      %v536 = vpop.f32.mrb[0].mxu0
      %v537 = vadd.f32 %v386, %v536
      %v538 = vpop.f32.mrb[0].mxu0
      %v539 = vpop.f32.mrb[0].mxu0
      %v540 = vadd.f32 %v389, %v539
      %v541 = vpop.f32.mrb[0].mxu0
      %542 = vmatprep.mubr.bf16.mxu0 0
      %543 = vmatmul.mubr.bf16.gmra.mrb[0].mxu0 %v259
      %v544 = vpop.f32.mrb[0].mxu0
      %v545 = vadd.f32 %v394, %v544
      %v546 = vpop.f32.mrb[0].mxu0
      %v547 = vpop.f32.mrb[0].mxu0
      %v548 = vadd.f32 %v397, %v547
      %v549 = vpop.f32.mrb[0].mxu0
      %550 = vmatprep.mubr.bf16.mxu0 0
      %551 = vmatmul.mubr.bf16.gmra.mrb[0].mxu0 %v260
      %v552 = vpop.f32.mrb[0].mxu0
      %v553 = vadd.f32 %v402, %v552
      %v554 = vpop.f32.mrb[0].mxu0
      %v555 = vpop.f32.mrb[0].mxu0
      %v556 = vadd.f32 %v405, %v555
      %v557 = vpop.f32.mrb[0].mxu0
      %558 = vmatprep.mubr.bf16.mxu0 0
      %559 = vmatmul.mubr.bf16.gmra.mrb[0].mxu0 %v261
      %v560 = vpop.f32.mrb[0].mxu0
      %v561 = vadd.f32 %v410, %v560
      %v562 = vpop.f32.mrb[0].mxu0
      %v563 = vpop.f32.mrb[0].mxu0
      %v564 = vadd.f32 %v413, %v563
      %v565 = vpop.f32.mrb[0].mxu0
      %566 = vdwg.mxu0
      %s567 = scalar_lea.vmem %s165, 72
      %v568 = vld [vmem:[%s567] sm:$0xf]
      %v569 = vld [vmem:[%s567 + $0x4] sm:$0xf]
      %v570 = vld [vmem:[%s567 + $0x8] sm:$0xf]
      %v571 = vld [vmem:[%s567 + $0xc] sm:$0xf]
      %v572 = vld [vmem:[%s567 + $0x10] sm:$0xf]
      %v573 = vld [vmem:[%s567 + $0x14] sm:$0xf]
      %v574 = vld [vmem:[%s567 + $0x18] sm:$0xf]
      %v575 = vld [vmem:[%s567 + $0x1c] sm:$0xf]
      %v576 = vld [vmem:[%s567 + $0x20] sm:$0xf]
      %v577 = vld [vmem:[%s567 + $0x24] sm:$0xf]
      %v578 = vld [vmem:[%s567 + $0x28] sm:$0xf]
      %v579 = vld [vmem:[%s567 + $0x2c] sm:$0xf]
      %v580 = vld [vmem:[%s567 + $0x30] sm:$0xf]
      %v581 = vld [vmem:[%s567 + $0x34] sm:$0xf]
      %v582 = vld [vmem:[%s567 + $0x38] sm:$0xf]
      %v583 = vld [vmem:[%s567 + $0x3c] sm:$0xf]
      %v584 = vld [vmem:[%s567 + $0x40] sm:$0xf]
      %v585 = vld [vmem:[%s567 + $0x44] sm:$0xf]
      %s586 = scalar_lea.vmem %s1, 64
      %v587 = vld [vmem:[%s586] sm:$0xf]
      %v588 = vld [vmem:[%s586 + $0x4] sm:$0xf]
      %v589 = vld [vmem:[%s586 + $0x8] sm:$0xf]
      %v590 = vld [vmem:[%s586 + $0xc] sm:$0xf]
      %v591 = vld [vmem:[%s586 + $0x10] sm:$0xf]
      %v592 = vld [vmem:[%s586 + $0x14] sm:$0xf]
      %v593 = vld [vmem:[%s586 + $0x18] sm:$0xf]
      %v594 = vld [vmem:[%s586 + $0x1c] sm:$0xf]
      %v595 = vld [vmem:[%s586 + $0x20] sm:$0xf]
      %v596 = vld [vmem:[%s586 + $0x24] sm:$0xf]
      %v597 = vld [vmem:[%s586 + $0x28] sm:$0xf]
      %v598 = vld [vmem:[%s586 + $0x2c] sm:$0xf]
      %v599 = vld [vmem:[%s586 + $0x30] sm:$0xf]
      %v600 = vld [vmem:[%s586 + $0x34] sm:$0xf]
      %v601 = vld [vmem:[%s586 + $0x38] sm:$0xf]
      %v602 = vld [vmem:[%s586 + $0x3c] sm:$0xf]
      %v619 = vunpack.c.l.b16 %v568
      %v620 = vunpack.c.l.b16 %v569
      %v621 = vunpack.c.l.b16 %v570
      %v622 = vunpack.c.l.b16 %v571
      %v623 = vunpack.c.l.b16 %v572
      %v624 = vunpack.c.l.b16 %v573
      %v625 = vunpack.c.l.b16 %v574
      %v626 = vunpack.c.l.b16 %v575
      %v627 = vunpack.c.l.b16 %v576
      %v628 = vunpack.c.l.b16 %v577
      %v629 = vunpack.c.l.b16 %v578
      %v630 = vunpack.c.l.b16 %v579
      %v631 = vunpack.c.l.b16 %v580
      %v632 = vunpack.c.l.b16 %v581
      %v633 = vunpack.c.l.b16 %v582
      %v634 = vunpack.c.l.b16 %v583
      %v635 = vpack.c.b16 %v620, %v619
      %v636 = vpack.c.b16 %v622, %v621
      %v637 = vpack.c.b16 %v624, %v623
      %v638 = vpack.c.b16 %v626, %v625
      %v639 = vpack.c.b16 %v628, %v627
      %v640 = vpack.c.b16 %v630, %v629
      %v641 = vpack.c.b16 %v632, %v631
      %v642 = vpack.c.b16 %v634, %v633
      %v667 = vunpack.c.l.b16 %v587
      %v668 = vunpack.c.l.b16 %v588
      %v669 = vunpack.c.l.b16 %v589
      %v670 = vunpack.c.l.b16 %v590
      %v671 = vunpack.c.l.b16 %v591
      %v672 = vunpack.c.l.b16 %v592
      %v673 = vunpack.c.l.b16 %v593
      %v674 = vunpack.c.l.b16 %v594
      %v675 = vunpack.c.l.b16 %v595
      %v676 = vunpack.c.l.b16 %v596
      %v677 = vunpack.c.l.b16 %v597
      %v678 = vunpack.c.l.b16 %v598
      %v679 = vunpack.c.l.b16 %v599
      %v680 = vunpack.c.l.b16 %v600
      %v681 = vunpack.c.l.b16 %v601
      %v682 = vunpack.c.l.b16 %v602
      %v683 = vpack.c.b16 %v668, %v667
      %v684 = vpack.c.b16 %v670, %v669
      %v685 = vpack.c.b16 %v672, %v671
      %v686 = vpack.c.b16 %v674, %v673
      %v687 = vpack.c.b16 %v676, %v675
      %v688 = vpack.c.b16 %v678, %v677
      %v689 = vpack.c.b16 %v680, %v679
      %v690 = vpack.c.b16 %v682, %v681
      %699 = vmatprep.subr.bf16.mxu0 0
      %700 = vmatpush1.bf16.msra.mxu0 %v683
      %701 = vmatprep.subr.bf16.mxu0 0
      %702 = vmatpush1.bf16.msra.mxu0 %v684
      %703 = vmatprep.subr.bf16.mxu0 0
      %704 = vmatpush1.bf16.msra.mxu0 %v685
      %705 = vmatprep.subr.bf16.mxu0 0
      %706 = vmatpush1.bf16.msra.mxu0 %v686
      %707 = vmatprep.subr.bf16.mxu0 0
      %708 = vmatpush1.bf16.msra.mxu0 %v687
      %709 = vmatprep.subr.bf16.mxu0 0
      %710 = vmatpush1.bf16.msra.mxu0 %v688
      %711 = vmatprep.subr.bf16.mxu0 0
      %712 = vmatpush1.bf16.msra.mxu0 %v689
      %713 = vmatprep.subr.bf16.mxu0 0
      %714 = vmatpush1.bf16.msra.mxu0 %v690
      %715 = vmatprep.subr.bf16.mxu0 0
      %716 = vmatpush1.bf16.msra.mxu0 0
      %717 = vmatprep.subr.bf16.mxu0 0
      %718 = vmatpush1.bf16.msra.mxu0 0
      %719 = vmatprep.subr.bf16.mxu0 0
      %720 = vmatpush1.bf16.msra.mxu0 0
      %721 = vmatprep.subr.bf16.mxu0 0
      %722 = vmatpush1.bf16.msra.mxu0 0
      %723 = vmatprep.subr.bf16.mxu0 0
      %724 = vmatpush1.bf16.msra.mxu0 0
      %725 = vmatprep.subr.bf16.mxu0 0
      %726 = vmatpush1.bf16.msra.mxu0 0
      %727 = vmatprep.subr.bf16.mxu0 0
      %728 = vmatpush1.bf16.msra.mxu0 0
      %729 = vmatprep.subr.bf16.mxu0 0
      %730 = vmatpush1.bf16.msra.mxu0 0
      %731 = vmatprep.mubr.bf16.mxu0 0
      %732 = vmatmul.mubr.bf16.gmra.mrb[0].mxu0 %v635
      %v733 = vpop.f32.mrb[0].mxu0
      %v734 = vadd.f32 0.0, %v733
      %v735 = vpop.f32.mrb[0].mxu0
      %v736 = vpop.f32.mrb[0].mxu0
      %v737 = vadd.f32 0.0, %v736
      %v738 = vpop.f32.mrb[0].mxu0
      %739 = vmatprep.mubr.bf16.mxu0 0
      %740 = vmatmul.mubr.bf16.gmra.mrb[0].mxu0 %v636
      %v741 = vpop.f32.mrb[0].mxu0
      %v742 = vadd.f32 0.0, %v741
      %v743 = vpop.f32.mrb[0].mxu0
      %v744 = vpop.f32.mrb[0].mxu0
      %v745 = vadd.f32 0.0, %v744
      %v746 = vpop.f32.mrb[0].mxu0
      %747 = vmatprep.mubr.bf16.mxu0 0
      %748 = vmatmul.mubr.bf16.gmra.mrb[0].mxu0 %v637
      %v749 = vpop.f32.mrb[0].mxu0
      %v750 = vadd.f32 0.0, %v749
      %v751 = vpop.f32.mrb[0].mxu0
      %v752 = vpop.f32.mrb[0].mxu0
      %v753 = vadd.f32 0.0, %v752
      %v754 = vpop.f32.mrb[0].mxu0
      %755 = vmatprep.mubr.bf16.mxu0 0
      %756 = vmatmul.mubr.bf16.gmra.mrb[0].mxu0 %v638
      %v757 = vpop.f32.mrb[0].mxu0
      %v758 = vadd.f32 0.0, %v757
      %v759 = vpop.f32.mrb[0].mxu0
      %v760 = vpop.f32.mrb[0].mxu0
      %v761 = vadd.f32 0.0, %v760
      %v762 = vpop.f32.mrb[0].mxu0
      %763 = vmatprep.mubr.bf16.mxu0 0
      %764 = vmatmul.mubr.bf16.gmra.mrb[0].mxu0 %v639
      %v765 = vpop.f32.mrb[0].mxu0
      %v766 = vadd.f32 0.0, %v765
      %v767 = vpop.f32.mrb[0].mxu0
      %v768 = vpop.f32.mrb[0].mxu0
      %v769 = vadd.f32 0.0, %v768
      %v770 = vpop.f32.mrb[0].mxu0
      %771 = vmatprep.mubr.bf16.mxu0 0
      %772 = vmatmul.mubr.bf16.gmra.mrb[0].mxu0 %v640
      %v773 = vpop.f32.mrb[0].mxu0
      %v774 = vadd.f32 0.0, %v773
      %v775 = vpop.f32.mrb[0].mxu0
      %v776 = vpop.f32.mrb[0].mxu0
      %v777 = vadd.f32 0.0, %v776
      %v778 = vpop.f32.mrb[0].mxu0
      %779 = vmatprep.mubr.bf16.mxu0 0
      %780 = vmatmul.mubr.bf16.gmra.mrb[0].mxu0 %v641
      %v781 = vpop.f32.mrb[0].mxu0
      %v782 = vadd.f32 0.0, %v781
      %v783 = vpop.f32.mrb[0].mxu0
      %v784 = vpop.f32.mrb[0].mxu0
      %v785 = vadd.f32 0.0, %v784
      %v786 = vpop.f32.mrb[0].mxu0
      %787 = vmatprep.mubr.bf16.mxu0 0
      %788 = vmatmul.mubr.bf16.gmra.mrb[0].mxu0 %v642
      %v789 = vpop.f32.mrb[0].mxu0
      %v790 = vadd.f32 0.0, %v789
      %v791 = vpop.f32.mrb[0].mxu0
      %v792 = vpop.f32.mrb[0].mxu0
      %v793 = vadd.f32 0.0, %v792
      %v794 = vpop.f32.mrb[0].mxu0
      %795 = vdwg.mxu0
      %v796 = vadd.f32 %v505, %v734
      %v797 = vadd.f32 %v508, %v737
      %v798 = vadd.f32 %v513, %v742
      %v799 = vadd.f32 %v516, %v745
      %v800 = vadd.f32 %v521, %v750
      %v801 = vadd.f32 %v524, %v753
      %v802 = vadd.f32 %v529, %v758
      %v803 = vadd.f32 %v532, %v761
      %v804 = vadd.f32 %v537, %v766
      %v805 = vadd.f32 %v540, %v769
      %v806 = vadd.f32 %v545, %v774
      %v807 = vadd.f32 %v548, %v777
      %v808 = vadd.f32 %v553, %v782
      %v809 = vadd.f32 %v556, %v785
      %v810 = vadd.f32 %v561, %v790
      %v811 = vadd.f32 %v564, %v793
      %s812 = scalar_lea.vmem %s1, 192
      %v813 = vld [vmem:[%s812] sm:$0xf]
      %v814 = vld [vmem:[%s812 + $0x4] sm:$0xf]
      %v815 = vld [vmem:[%s812 + $0x8] sm:$0xf]
      %v816 = vld [vmem:[%s812 + $0xc] sm:$0xf]
      %v817 = vld [vmem:[%s812 + $0x10] sm:$0xf]
      %v818 = vld [vmem:[%s812 + $0x14] sm:$0xf]
      %v819 = vld [vmem:[%s812 + $0x18] sm:$0xf]
      %v820 = vld [vmem:[%s812 + $0x1c] sm:$0xf]
      %v821 = vld [vmem:[%s812 + $0x20] sm:$0xf]
      %v822 = vld [vmem:[%s812 + $0x24] sm:$0xf]
      %v823 = vld [vmem:[%s812 + $0x28] sm:$0xf]
      %v824 = vld [vmem:[%s812 + $0x2c] sm:$0xf]
      %v825 = vld [vmem:[%s812 + $0x30] sm:$0xf]
      %v826 = vld [vmem:[%s812 + $0x34] sm:$0xf]
      %v827 = vld [vmem:[%s812 + $0x38] sm:$0xf]
      %v828 = vld [vmem:[%s812 + $0x3c] sm:$0xf]
      %v831 = vunpack.c.l.b16 %v584
      %v832 = vunpack.c.l.b16 %v585
      %v833 = vpack.c.b16 %v832, %v831
      %v851 = vunpack.c.l.b16 %v813
      %v852 = vunpack.c.l.b16 %v814
      %v853 = vunpack.c.l.b16 %v815
      %v854 = vunpack.c.l.b16 %v816
      %v855 = vunpack.c.l.b16 %v817
      %v856 = vunpack.c.l.b16 %v818
      %v857 = vunpack.c.l.b16 %v819
      %v858 = vunpack.c.l.b16 %v820
      %v859 = vunpack.c.l.b16 %v821
      %v860 = vunpack.c.l.b16 %v822
      %v861 = vunpack.c.l.b16 %v823
      %v862 = vunpack.c.l.b16 %v824
      %v863 = vunpack.c.l.b16 %v825
      %v864 = vunpack.c.l.b16 %v826
      %v865 = vunpack.c.l.b16 %v827
      %v866 = vunpack.c.l.b16 %v828
      %v867 = vpack.c.b16 %v852, %v851
      %v868 = vpack.c.b16 %v854, %v853
      %v869 = vpack.c.b16 %v856, %v855
      %v870 = vpack.c.b16 %v858, %v857
      %v871 = vpack.c.b16 %v860, %v859
      %v872 = vpack.c.b16 %v862, %v861
      %v873 = vpack.c.b16 %v864, %v863
      %v874 = vpack.c.b16 %v866, %v865
      %883 = vmatprep.subr.bf16.mxu0 0
      %884 = vmatpush1.bf16.msra.mxu0 %v867
      %885 = vmatprep.subr.bf16.mxu0 0
      %886 = vmatpush1.bf16.msra.mxu0 %v868
      %887 = vmatprep.subr.bf16.mxu0 0
      %888 = vmatpush1.bf16.msra.mxu0 %v869
      %889 = vmatprep.subr.bf16.mxu0 0
      %890 = vmatpush1.bf16.msra.mxu0 %v870
      %891 = vmatprep.subr.bf16.mxu0 0
      %892 = vmatpush1.bf16.msra.mxu0 %v871
      %893 = vmatprep.subr.bf16.mxu0 0
      %894 = vmatpush1.bf16.msra.mxu0 %v872
      %895 = vmatprep.subr.bf16.mxu0 0
      %896 = vmatpush1.bf16.msra.mxu0 %v873
      %897 = vmatprep.subr.bf16.mxu0 0
      %898 = vmatpush1.bf16.msra.mxu0 %v874
      %899 = vmatprep.subr.bf16.mxu0 0
      %900 = vmatpush1.bf16.msra.mxu0 0
      %901 = vmatprep.subr.bf16.mxu0 0
      %902 = vmatpush1.bf16.msra.mxu0 0
      %903 = vmatprep.subr.bf16.mxu0 0
      %904 = vmatpush1.bf16.msra.mxu0 0
      %905 = vmatprep.subr.bf16.mxu0 0
      %906 = vmatpush1.bf16.msra.mxu0 0
      %907 = vmatprep.subr.bf16.mxu0 0
      %908 = vmatpush1.bf16.msra.mxu0 0
      %909 = vmatprep.subr.bf16.mxu0 0
      %910 = vmatpush1.bf16.msra.mxu0 0
      %911 = vmatprep.subr.bf16.mxu0 0
      %912 = vmatpush1.bf16.msra.mxu0 0
      %913 = vmatprep.subr.bf16.mxu0 0
      %914 = vmatpush1.bf16.msra.mxu0 0
      %915 = vmatprep.mubr.bf16.mxu0 0
      %916 = vmatmul.mubr.bf16.gmra.mrb[0].mxu0 %v636
      %v917 = vpop.f32.mrb[0].mxu0
      %v918 = vadd.f32 0.0, %v917
      %v919 = vpop.f32.mrb[0].mxu0
      %v920 = vpop.f32.mrb[0].mxu0
      %v921 = vadd.f32 0.0, %v920
      %v922 = vpop.f32.mrb[0].mxu0
      %923 = vmatprep.mubr.bf16.mxu0 0
      %924 = vmatmul.mubr.bf16.gmra.mrb[0].mxu0 %v637
      %v925 = vpop.f32.mrb[0].mxu0
      %v926 = vadd.f32 0.0, %v925
      %v927 = vpop.f32.mrb[0].mxu0
      %v928 = vpop.f32.mrb[0].mxu0
      %v929 = vadd.f32 0.0, %v928
      %v930 = vpop.f32.mrb[0].mxu0
      %931 = vmatprep.mubr.bf16.mxu0 0
      %932 = vmatmul.mubr.bf16.gmra.mrb[0].mxu0 %v638
      %v933 = vpop.f32.mrb[0].mxu0
      %v934 = vadd.f32 0.0, %v933
      %v935 = vpop.f32.mrb[0].mxu0
      %v936 = vpop.f32.mrb[0].mxu0
      %v937 = vadd.f32 0.0, %v936
      %v938 = vpop.f32.mrb[0].mxu0
      %939 = vmatprep.mubr.bf16.mxu0 0
      %940 = vmatmul.mubr.bf16.gmra.mrb[0].mxu0 %v639
      %v941 = vpop.f32.mrb[0].mxu0
      %v942 = vadd.f32 0.0, %v941
      %v943 = vpop.f32.mrb[0].mxu0
      %v944 = vpop.f32.mrb[0].mxu0
      %v945 = vadd.f32 0.0, %v944
      %v946 = vpop.f32.mrb[0].mxu0
      %947 = vmatprep.mubr.bf16.mxu0 0
      %948 = vmatmul.mubr.bf16.gmra.mrb[0].mxu0 %v640
      %v949 = vpop.f32.mrb[0].mxu0
      %v950 = vadd.f32 0.0, %v949
      %v951 = vpop.f32.mrb[0].mxu0
      %v952 = vpop.f32.mrb[0].mxu0
      %v953 = vadd.f32 0.0, %v952
      %v954 = vpop.f32.mrb[0].mxu0
      %955 = vmatprep.mubr.bf16.mxu0 0
      %956 = vmatmul.mubr.bf16.gmra.mrb[0].mxu0 %v641
      %v957 = vpop.f32.mrb[0].mxu0
      %v958 = vadd.f32 0.0, %v957
      %v959 = vpop.f32.mrb[0].mxu0
      %v960 = vpop.f32.mrb[0].mxu0
      %v961 = vadd.f32 0.0, %v960
      %v962 = vpop.f32.mrb[0].mxu0
      %963 = vmatprep.mubr.bf16.mxu0 0
      %964 = vmatmul.mubr.bf16.gmra.mrb[0].mxu0 %v642
      %v965 = vpop.f32.mrb[0].mxu0
      %v966 = vadd.f32 0.0, %v965
      %v967 = vpop.f32.mrb[0].mxu0
      %v968 = vpop.f32.mrb[0].mxu0
      %v969 = vadd.f32 0.0, %v968
      %v970 = vpop.f32.mrb[0].mxu0
      %971 = vmatprep.mubr.bf16.mxu0 0
      %972 = vmatmul.mubr.bf16.gmra.mrb[0].mxu0 %v833
      %v973 = vpop.f32.mrb[0].mxu0
      %v974 = vadd.f32 0.0, %v973
      %v975 = vpop.f32.mrb[0].mxu0
      %v976 = vpop.f32.mrb[0].mxu0
      %v977 = vadd.f32 0.0, %v976
      %v978 = vpop.f32.mrb[0].mxu0
      %979 = vdwg.mxu0
      %v980 = vadd.f32 %v796, %v918
      %v981 = vadd.f32 %v797, %v921
      %v982 = vadd.f32 %v798, %v926
      %v983 = vadd.f32 %v799, %v929
      %v984 = vadd.f32 %v800, %v934
      %v985 = vadd.f32 %v801, %v937
      %v986 = vadd.f32 %v802, %v942
      %v987 = vadd.f32 %v803, %v945
      %v988 = vadd.f32 %v804, %v950
      %v989 = vadd.f32 %v805, %v953
      %v990 = vadd.f32 %v806, %v958
      %v991 = vadd.f32 %v807, %v961
      %v992 = vadd.f32 %v808, %v966
      %v993 = vadd.f32 %v809, %v969
      %v994 = vadd.f32 %v810, %v974
      %v995 = vadd.f32 %v811, %v977
      %v996 = vld [vmem:[%s2] sm:$0x1]
      %v998 = vlaneseq
      %v999 = vshrl.u32 %v998, 7
      %v1000 = vsub.s32 0, %v999
      %v1001 = vrot.slane %v996, %v1000
      %v1003 = vadd.f32 %v980, %v1001
      %v1004 = vadd.f32 %v981, %v1001
      %v1005 = vadd.f32 %v982, %v1001
      %v1006 = vadd.f32 %v983, %v1001
      %v1007 = vadd.f32 %v984, %v1001
      %v1008 = vadd.f32 %v985, %v1001
      %v1009 = vadd.f32 %v986, %v1001
      %v1010 = vadd.f32 %v987, %v1001
      %v1011 = vadd.f32 %v988, %v1001
      %v1012 = vadd.f32 %v989, %v1001
      %v1013 = vadd.f32 %v990, %v1001
      %v1014 = vadd.f32 %v991, %v1001
      %v1015 = vadd.f32 %v992, %v1001
      %v1016 = vadd.f32 %v993, %v1001
      %v1017 = vadd.f32 %v994, %v1001
      %v1018 = vadd.f32 %v995, %v1001
      %v1019 = vmax.f32 %v1003, 0.0
      %v1020 = vmax.f32 %v1004, 0.0
      %v1021 = vmax.f32 %v1005, 0.0
      %v1022 = vmax.f32 %v1006, 0.0
      %v1023 = vmax.f32 %v1007, 0.0
      %v1024 = vmax.f32 %v1008, 0.0
      %v1025 = vmax.f32 %v1009, 0.0
      %v1026 = vmax.f32 %v1010, 0.0
      %v1027 = vmax.f32 %v1011, 0.0
      %v1028 = vmax.f32 %v1012, 0.0
      %v1029 = vmax.f32 %v1013, 0.0
      %v1030 = vmax.f32 %v1014, 0.0
      %v1031 = vmax.f32 %v1015, 0.0
      %v1032 = vmax.f32 %v1016, 0.0
      %v1033 = vmax.f32 %v1017, 0.0
      %v1034 = vmax.f32 %v1018, 0.0
      %v1035 = vpack.c.bf16 %v1020, %v1019
      %v1036 = vpack.c.bf16 %v1022, %v1021
      %v1037 = vpack.c.bf16 %v1024, %v1023
      %v1038 = vpack.c.bf16 %v1026, %v1025
      %v1039 = vpack.c.bf16 %v1028, %v1027
      %v1040 = vpack.c.bf16 %v1030, %v1029
      %v1041 = vpack.c.bf16 %v1032, %v1031
      %v1042 = vpack.c.bf16 %v1034, %v1033
      %v1051 = vunpack.c.l.b16 %v1035
      %v1052 = vunpack.c.h.b16 %v1035
      %v1053 = vunpack.c.l.b16 %v1036
      %v1054 = vunpack.c.h.b16 %v1036
      %v1055 = vunpack.c.l.b16 %v1037
      %v1056 = vunpack.c.h.b16 %v1037
      %v1057 = vunpack.c.l.b16 %v1038
      %v1058 = vunpack.c.h.b16 %v1038
      %v1059 = vunpack.c.l.b16 %v1039
      %v1060 = vunpack.c.h.b16 %v1039
      %v1061 = vunpack.c.l.b16 %v1040
      %v1062 = vunpack.c.h.b16 %v1040
      %v1063 = vunpack.c.l.b16 %v1041
      %v1064 = vunpack.c.h.b16 %v1041
      %v1065 = vunpack.c.l.b16 %v1042
      %v1066 = vunpack.c.h.b16 %v1042
      %v1067 = vpack.c.b16 %v1051, %v1051
      %v1068 = vpack.c.b16 %v1052, %v1052
      %v1069 = vpack.c.b16 %v1053, %v1053
      %v1070 = vpack.c.b16 %v1054, %v1054
      %v1071 = vpack.c.b16 %v1055, %v1055
      %v1072 = vpack.c.b16 %v1056, %v1056
      %v1073 = vpack.c.b16 %v1057, %v1057
      %v1074 = vpack.c.b16 %v1058, %v1058
      %v1075 = vpack.c.b16 %v1059, %v1059
      %v1076 = vpack.c.b16 %v1060, %v1060
      %v1077 = vpack.c.b16 %v1061, %v1061
      %v1078 = vpack.c.b16 %v1062, %v1062
      %v1079 = vpack.c.b16 %v1063, %v1063
      %v1080 = vpack.c.b16 %v1064, %v1064
      %v1081 = vpack.c.b16 %v1065, %v1065
      %v1082 = vpack.c.b16 %v1066, %v1066
      %1099 = vst [vmem:[%s170] sm:$0xf] %v1067
      %1100 = vst [vmem:[%s170 + $0x4] sm:$0xf] %v1068
      %1101 = vst [vmem:[%s170 + $0x8] sm:$0xf] %v1069
      %1102 = vst [vmem:[%s170 + $0xc] sm:$0xf] %v1070
      %1103 = vst [vmem:[%s170 + $0x10] sm:$0xf] %v1071
      %1104 = vst [vmem:[%s170 + $0x14] sm:$0xf] %v1072
      %1105 = vst [vmem:[%s170 + $0x18] sm:$0xf] %v1073
      %1106 = vst [vmem:[%s170 + $0x1c] sm:$0xf] %v1074
      %1107 = vst [vmem:[%s170 + $0x20] sm:$0xf] %v1075
      %1108 = vst [vmem:[%s170 + $0x24] sm:$0xf] %v1076
      %1109 = vst [vmem:[%s170 + $0x28] sm:$0xf] %v1077
      %1110 = vst [vmem:[%s170 + $0x2c] sm:$0xf] %v1078
      %1111 = vst [vmem:[%s170 + $0x30] sm:$0xf] %v1079
      %1112 = vst [vmem:[%s170 + $0x34] sm:$0xf] %v1080
      %1113 = vst [vmem:[%s170 + $0x38] sm:$0xf] %v1081
      %1114 = vst [vmem:[%s170 + $0x3c] sm:$0xf] %v1082
      %p1115 = scmp.lt.s32.totalorder %s14, 1
      %s1116 = scalar_select %p1115, %s14, 1
      %s1117 = smul.addr %s1116, 16
      %s1118 = smul.addr %s1117, 4
      %s1119 = scalar_lea.vmem %s3, %s1118
      // Predicated region
      $region33: #{encoder_forward.5} parent=31 // pred_check
        %p1120 = pneg %p100
      $region34: #{encoder_forward.5} parent=31 // pred_check_branch
        %1122 = sbr.rel (%p1120) target = $region36
      $region35: #{encoder_forward.5} parent=31 // pred_region
        _
      $region36: #{encoder_forward.5} parent=31 // pred_fallthru
        _
    $region32: #{encoder_forward.5} parent=5 // pred_fallthru
      _
    %p1123 = scmp.le.s32.totalorder 2, %s9
    // Predicated region
    $region37: #{encoder_forward.5} parent=5 // pred_check
      %p1124 = pneg %p1123
    $region38: #{encoder_forward.5} parent=5 // pred_check_branch
      %1126 = sbr.rel (%p1124) target = $region40
    $region39: #{encoder_forward.5} parent=5 // pred_region
      %s1127 = ssub.s32 %s9, 2
      // Predicated region
      $region41: #{encoder_forward.5} parent=39 // pred_check
        %p1128 = pneg %p106
      $region42: #{encoder_forward.5} parent=39 // pred_check_branch
        %1130 = sbr.rel (%p1128) target = $region44
      $region43: #{encoder_forward.5} parent=39 // pred_region
        %p1131 = scmp.lt.s32.totalorder %s15, 1
        %s1132 = scalar_select %p1131, %s15, 1
        %s1133 = smul.addr %s1132, 16
        %s1134 = smul.addr %s1133, 4
        %s1135 = scalar_lea.vmem %s3, %s1134
      $region44: #{encoder_forward.5} parent=39 // pred_fallthru
        _
    $region40: #{encoder_forward.5} parent=5 // pred_fallthru
      _
  $region6: #{encoder_forward.5} parent=0 // loop_footer
    %s13 = sadd.s32 1, %s9
  $region7: #{encoder_forward.5} parent=0 // loop_footer_branch
    %8 = sbr.rel target = $region3
  $region8: #{encoder_forward.5} parent=0 // loop_exit
    _

// kernel: encoder_forward.6
$region0: #{encoder_forward.6}
  #allocation0 [shape = 'u32[]', space=smem, size = 0x4, offset = 0x4, fixed_abs, tag = 'smem constant byte address 0x4 - core index']
  #allocation1 [shape = 'u32[144,128]{1,0:T(1,128)}', space=vmem, size = 0x12000, scoped, tag = 'internal scratch']
  %s0 = inlined_call_operand.vmem [shape: bf16[2,2,80,128], index: 0, kind: input, shape index: {}]
  %s1 = inlined_call_operand.vmem [shape: bf16[4,128,128], index: 1, kind: input, shape index: {}]
  %s2 = inlined_call_operand.vmem [shape: f32[1,128], index: 2, kind: input, shape index: {}]
  %s3 = inlined_call_operand.vmem [shape: bf16[2,64,128], index: 3, kind: output, shape index: {}]
  %s4 = sld [smem:[#allocation0]]
  $region45: #{encoder_forward.6} parent=0
    _
  %s6 = ssub.s32 1, %s4
  %s7 = scalar_select 0, %s6, %s4
  loop: start=0, step=1, limit=4
  $region2: #{encoder_forward.6} parent=0 // loop_pre_header
    _
  $region3: #{encoder_forward.6} parent=0 // loop_header
    %s9 = sphi 0, %s13
    %p10 = scmp.ge.s32.totalorder %s9, 4
    %s19 = sphi 0, %s21
    %s22 = sphi 0, %s19
    %s23 = sphi 0, %s22
    %s39 = sphi 0, %s23
    %s43 = sphi 0, %s43
    %s45 = sphi 0, %s43
    %s46 = sphi 0, %s45
    %s60 = sphi 0, %s46
    %s64 = sphi 0, %s64
    %s66 = sphi 0, %s64
    %s67 = sphi 0, %s66
    %s81 = sphi 0, %s67
    %s87 = sphi 0, %s89
    %s90 = sphi 0, %s87
    %s91 = sphi 0, %s90
    %s107 = sphi 0, %s91
  $region4: #{encoder_forward.6} parent=0 // loop_header_branch
    %12 = sbr.rel (%p10) target = $region8
  $region5: #{encoder_forward.6} parent=0 // loop_body
    %s14 = ssub.s32 %s9, 1
    %s15 = ssub.s32 %s9, 2
    %s16 = sadd.s32 %s9, 1
    %s17 = ssub.s32 %s9, %s16
    %p18 = scmp.eq.s32.totalorder %s17, 0
    %s20 = sadd.s32 %s19, 1
    %s21 = scalar_select %p18, %s19, %s20
    %p24 = pneg %p18
    %p25 = scmp.eq.s32.totalorder %s9, 1
    %p26 = por %p24, %p25
    %p27 = scmp.ne.s32.totalorder %s19, %s22
    %p28 = scmp.eq.s32.totalorder %s9, 0
    %p29 = por %p27, %p28
    %p30 = scmp.ne.s32.totalorder %s19, %s22
    %p31 = scmp.eq.s32.totalorder %s14, 1
    %p32 = por %p30, %p31
    %p33 = scmp.ne.s32.totalorder %s22, %s23
    %p34 = scmp.eq.s32.totalorder %s14, 0
    %p35 = por %p33, %p34
    %p36 = scmp.ne.s32.totalorder %s22, %s23
    %p37 = scmp.eq.s32.totalorder %s15, 1
    %p38 = por %p36, %p37
    %p40 = scmp.ne.s32.totalorder %s23, %s39
    %p41 = scmp.eq.s32.totalorder %s15, 0
    %p42 = por %p40, %p41
    %s44 = sadd.s32 %s43, 1
    %p47 = scmp.eq.s32.totalorder %s9, 1
    %p48 = scmp.ne.s32.totalorder %s43, %s45
    %p49 = scmp.eq.s32.totalorder %s9, 0
    %p50 = por %p48, %p49
    %p51 = scmp.ne.s32.totalorder %s43, %s45
    %p52 = scmp.eq.s32.totalorder %s14, 1
    %p53 = por %p51, %p52
    %p54 = scmp.ne.s32.totalorder %s45, %s46
    %p55 = scmp.eq.s32.totalorder %s14, 0
    %p56 = por %p54, %p55
    %p57 = scmp.ne.s32.totalorder %s45, %s46
    %p58 = scmp.eq.s32.totalorder %s15, 1
    %p59 = por %p57, %p58
    %p61 = scmp.ne.s32.totalorder %s46, %s60
    %p62 = scmp.eq.s32.totalorder %s15, 0
    %p63 = por %p61, %p62
    %s65 = sadd.s32 %s64, 1
    %p68 = scmp.eq.s32.totalorder %s9, 1
    %p69 = scmp.ne.s32.totalorder %s64, %s66
    %p70 = scmp.eq.s32.totalorder %s9, 0
    %p71 = por %p69, %p70
    %p72 = scmp.ne.s32.totalorder %s64, %s66
    %p73 = scmp.eq.s32.totalorder %s14, 1
    %p74 = por %p72, %p73
    %p75 = scmp.ne.s32.totalorder %s66, %s67
    %p76 = scmp.eq.s32.totalorder %s14, 0
    %p77 = por %p75, %p76
    %p78 = scmp.ne.s32.totalorder %s66, %s67
    %p79 = scmp.eq.s32.totalorder %s15, 1
    %p80 = por %p78, %p79
    %p82 = scmp.ne.s32.totalorder %s67, %s81
    %p83 = scmp.eq.s32.totalorder %s15, 0
    %p84 = por %p82, %p83
    %s85 = ssub.s32 %s9, %s16
    %p86 = scmp.eq.s32.totalorder %s85, 0
    %s88 = sadd.s32 %s87, 1
    %s89 = scalar_select %p86, %s87, %s88
    %p92 = pneg %p86
    %p93 = scmp.eq.s32.totalorder %s9, 1
    %p94 = por %p92, %p93
    %p95 = scmp.ne.s32.totalorder %s87, %s90
    %p96 = scmp.eq.s32.totalorder %s9, 0
    %p97 = por %p95, %p96
    %p98 = scmp.ne.s32.totalorder %s87, %s90
    %p99 = scmp.eq.s32.totalorder %s14, 1
    %p100 = por %p98, %p99
    %p101 = scmp.ne.s32.totalorder %s90, %s91
    %p102 = scmp.eq.s32.totalorder %s14, 0
    %p103 = por %p101, %p102
    %p104 = scmp.ne.s32.totalorder %s90, %s91
    %p105 = scmp.eq.s32.totalorder %s15, 1
    %p106 = por %p104, %p105
    %p108 = scmp.ne.s32.totalorder %s91, %s107
    %p109 = scmp.eq.s32.totalorder %s15, 0
    %p110 = por %p108, %p109
    %p111 = scmp.le.s32.totalorder 1, %s9
    %p112 = scmp.lt.s32.totalorder %s9, 3
    %p113 = pnand %p111, %p112
    %p114 = pneg %p113
    // Predicated region
    $region9: #{encoder_forward.6} parent=5 // pred_check
      _
    $region10: #{encoder_forward.6} parent=5 // pred_check_branch
      %116 = sbr.rel (%p113) target = $region12
    $region11: #{encoder_forward.6} parent=5 // pred_region
      %s117 = ssub.s32 %s9, 1
      // Predicated region
      $region13: #{encoder_forward.6} parent=11 // pred_check
        %p118 = pneg %p56
      $region14: #{encoder_forward.6} parent=11 // pred_check_branch
        %120 = sbr.rel (%p118) target = $region16
      $region15: #{encoder_forward.6} parent=11 // pred_region
        _
      $region16: #{encoder_forward.6} parent=11 // pred_fallthru
        _
      // Predicated region
      $region17: #{encoder_forward.6} parent=11 // pred_check
        %p121 = pneg %p77
      $region18: #{encoder_forward.6} parent=11 // pred_check_branch
        %123 = sbr.rel (%p121) target = $region20
      $region19: #{encoder_forward.6} parent=11 // pred_region
        _
      $region20: #{encoder_forward.6} parent=11 // pred_fallthru
        _
    $region12: #{encoder_forward.6} parent=5 // pred_fallthru
      _
    %p124 = scmp.lt.s32.totalorder %s9, 2
    // Predicated region
    $region21: #{encoder_forward.6} parent=5 // pred_check
      %p125 = pneg %p124
    $region22: #{encoder_forward.6} parent=5 // pred_check_branch
      %127 = sbr.rel (%p125) target = $region24
    $region23: #{encoder_forward.6} parent=5 // pred_region
      // Predicated region
      $region25: #{encoder_forward.6} parent=23 // pred_check
        %p128 = pneg %p29
      $region26: #{encoder_forward.6} parent=23 // pred_check_branch
        %130 = sbr.rel (%p128) target = $region28
      $region27: #{encoder_forward.6} parent=23 // pred_region
        %p131 = scmp.lt.s32.totalorder %s9, 1
        %s132 = scalar_select %p131, %s9, 1
        %s133 = smul.addr %s132, 20
        %s134 = smul.addr %s133, 4
        %s135 = scalar_lea.vmem %s0, %s134
      $region28: #{encoder_forward.6} parent=23 // pred_fallthru
        _
    $region24: #{encoder_forward.6} parent=5 // pred_fallthru
      _
    %p136 = scmp.le.s32.totalorder 1, %s9
    %p137 = scmp.lt.s32.totalorder %s9, 3
    %p138 = pnand %p136, %p137
    %p139 = pneg %p138
    // Predicated region
    $region29: #{encoder_forward.6} parent=5 // pred_check
      _
    $region30: #{encoder_forward.6} parent=5 // pred_check_branch
      %141 = sbr.rel (%p138) target = $region32
    $region31: #{encoder_forward.6} parent=5 // pred_region
      %s142 = ssub.s32 %s9, 1
      %p143 = scmp.lt.s32.totalorder %s14, 1
      %s144 = scalar_select %p143, %s14, 1
      %s145 = smul.addr %s144, 20
      %s146 = smul.addr %s145, 4
      %s147 = scalar_lea.vmem %s0, %s146
      %p148 = pneg %p35
      %p149 = pneg %p32
      %p150 = pneg %p56
      %p151 = pneg %p53
      %p152 = pneg %p77
      %p153 = pneg %p74
      %p154 = pneg %p103
      %p155 = pneg %p100
      %p156 = scmp.lt.s32.totalorder %s14, 1
      %s157 = scalar_select %p156, %s14, 1
      %s158 = smul.addr %s157, 8
      %s159 = smul.addr %s158, 4
      %s160 = scalar_lea.vmem %s3, %s159
      %p161 = scmp.lt.s32.totalorder %s14, 1
      %s162 = scalar_select %p161, %s14, 1
      %s163 = smul.addr %s162, 20
      %s164 = smul.addr %s163, 4
      %s165 = scalar_lea.vmem %s0, %s164
      %p166 = scmp.lt.s32.totalorder %s14, 1
      %s167 = scalar_select %p166, %s14, 1
      %s168 = smul.addr %s167, 8
      %s169 = smul.addr %s168, 4
      %s170 = scalar_lea.vmem %s3, %s169
      %v172 = vld [vmem:[%s165] sm:$0xf]
      %v173 = vld [vmem:[%s165 + $0x4] sm:$0xf]
      %v174 = vld [vmem:[%s165 + $0x8] sm:$0xf]
      %v175 = vld [vmem:[%s165 + $0xc] sm:$0xf]
      %v176 = vld [vmem:[%s165 + $0x10] sm:$0xf]
      %v177 = vld [vmem:[%s165 + $0x14] sm:$0xf]
      %v178 = vld [vmem:[%s165 + $0x18] sm:$0xf]
      %v179 = vld [vmem:[%s165 + $0x1c] sm:$0xf]
      %v180 = vld [vmem:[%s165 + $0x20] sm:$0xf]
      %v181 = vld [vmem:[%s165 + $0x24] sm:$0xf]
      %v182 = vld [vmem:[%s1] sm:$0xf]
      %v183 = vld [vmem:[%s1 + $0x4] sm:$0xf]
      %v184 = vld [vmem:[%s1 + $0x8] sm:$0xf]
      %v185 = vld [vmem:[%s1 + $0xc] sm:$0xf]
      %v186 = vld [vmem:[%s1 + $0x10] sm:$0xf]
      %v187 = vld [vmem:[%s1 + $0x14] sm:$0xf]
      %v188 = vld [vmem:[%s1 + $0x18] sm:$0xf]
      %v189 = vld [vmem:[%s1 + $0x1c] sm:$0xf]
      %v190 = vld [vmem:[%s1 + $0x20] sm:$0xf]
      %v191 = vld [vmem:[%s1 + $0x24] sm:$0xf]
      %v192 = vld [vmem:[%s1 + $0x28] sm:$0xf]
      %v193 = vld [vmem:[%s1 + $0x2c] sm:$0xf]
      %v194 = vld [vmem:[%s1 + $0x30] sm:$0xf]
      %v195 = vld [vmem:[%s1 + $0x34] sm:$0xf]
      %v196 = vld [vmem:[%s1 + $0x38] sm:$0xf]
      %v197 = vld [vmem:[%s1 + $0x3c] sm:$0xf]
      %s198 = scalar_lea.vmem %s1, 128
      %v199 = vld [vmem:[%s198] sm:$0xf]
      %v200 = vld [vmem:[%s198 + $0x4] sm:$0xf]
      %v201 = vld [vmem:[%s198 + $0x8] sm:$0xf]
      %v202 = vld [vmem:[%s198 + $0xc] sm:$0xf]
      %v203 = vld [vmem:[%s198 + $0x10] sm:$0xf]
      %v204 = vld [vmem:[%s198 + $0x14] sm:$0xf]
      %v205 = vld [vmem:[%s198 + $0x18] sm:$0xf]
      %v206 = vld [vmem:[%s198 + $0x1c] sm:$0xf]
      %v207 = vld [vmem:[%s198 + $0x20] sm:$0xf]
      %v208 = vld [vmem:[%s198 + $0x24] sm:$0xf]
      %v209 = vld [vmem:[%s198 + $0x28] sm:$0xf]
      %v210 = vld [vmem:[%s198 + $0x2c] sm:$0xf]
      %v211 = vld [vmem:[%s198 + $0x30] sm:$0xf]
      %v212 = vld [vmem:[%s198 + $0x34] sm:$0xf]
      %v213 = vld [vmem:[%s198 + $0x38] sm:$0xf]
      %v214 = vld [vmem:[%s198 + $0x3c] sm:$0xf]
      %v223 = vunpack.c.l.b16 %v174
      %v224 = vunpack.c.l.b16 %v175
      %v225 = vunpack.c.l.b16 %v176
      %v226 = vunpack.c.l.b16 %v177
      %v227 = vunpack.c.l.b16 %v178
      %v228 = vunpack.c.l.b16 %v179
      %v229 = vunpack.c.l.b16 %v180
      %v230 = vunpack.c.l.b16 %v181
      %v231 = vpack.c.b16 %v224, %v223
      %v232 = vpack.c.b16 %v226, %v225
      %v233 = vpack.c.b16 %v228, %v227
      %v234 = vpack.c.b16 %v230, %v229
      %v255 = vunpack.c.l.b16 %v199
      %v256 = vunpack.c.l.b16 %v200
      %v257 = vunpack.c.l.b16 %v201
      %v258 = vunpack.c.l.b16 %v202
      %v259 = vunpack.c.l.b16 %v203
      %v260 = vunpack.c.l.b16 %v204
      %v261 = vunpack.c.l.b16 %v205
      %v262 = vunpack.c.l.b16 %v206
      %v263 = vunpack.c.l.b16 %v207
      %v264 = vunpack.c.l.b16 %v208
      %v265 = vunpack.c.l.b16 %v209
      %v266 = vunpack.c.l.b16 %v210
      %v267 = vunpack.c.l.b16 %v211
      %v268 = vunpack.c.l.b16 %v212
      %v269 = vunpack.c.l.b16 %v213
      %v270 = vunpack.c.l.b16 %v214
      %v271 = vpack.c.b16 %v256, %v255
      %v272 = vpack.c.b16 %v258, %v257
      %v273 = vpack.c.b16 %v260, %v259
      %v274 = vpack.c.b16 %v262, %v261
      %v275 = vpack.c.b16 %v264, %v263
      %v276 = vpack.c.b16 %v266, %v265
      %v277 = vpack.c.b16 %v268, %v267
      %v278 = vpack.c.b16 %v270, %v269
      %287 = vmatprep.subr.bf16.mxu0 0
      %288 = vmatpush1.bf16.msra.mxu0 %v271
      %289 = vmatprep.subr.bf16.mxu0 0
      %290 = vmatpush1.bf16.msra.mxu0 %v272
      %291 = vmatprep.subr.bf16.mxu0 0
      %292 = vmatpush1.bf16.msra.mxu0 %v273
      %293 = vmatprep.subr.bf16.mxu0 0
      %294 = vmatpush1.bf16.msra.mxu0 %v274
      %295 = vmatprep.subr.bf16.mxu0 0
      %296 = vmatpush1.bf16.msra.mxu0 %v275
      %297 = vmatprep.subr.bf16.mxu0 0
      %298 = vmatpush1.bf16.msra.mxu0 %v276
      %299 = vmatprep.subr.bf16.mxu0 0
      %300 = vmatpush1.bf16.msra.mxu0 %v277
      %301 = vmatprep.subr.bf16.mxu0 0
      %302 = vmatpush1.bf16.msra.mxu0 %v278
      %303 = vmatprep.subr.bf16.mxu0 0
      %304 = vmatpush1.bf16.msra.mxu0 0
      %305 = vmatprep.subr.bf16.mxu0 0
      %306 = vmatpush1.bf16.msra.mxu0 0
      %307 = vmatprep.subr.bf16.mxu0 0
      %308 = vmatpush1.bf16.msra.mxu0 0
      %309 = vmatprep.subr.bf16.mxu0 0
      %310 = vmatpush1.bf16.msra.mxu0 0
      %311 = vmatprep.subr.bf16.mxu0 0
      %312 = vmatpush1.bf16.msra.mxu0 0
      %313 = vmatprep.subr.bf16.mxu0 0
      %314 = vmatpush1.bf16.msra.mxu0 0
      %315 = vmatprep.subr.bf16.mxu0 0
      %316 = vmatpush1.bf16.msra.mxu0 0
      %317 = vmatprep.subr.bf16.mxu0 0
      %318 = vmatpush1.bf16.msra.mxu0 0
      %319 = vmatprep.mubr.bf16.mxu0 0
      %320 = vmatmul.mubr.bf16.gmra.mrb[0].mxu0 %v231
      %v321 = vpop.f32.mrb[0].mxu0
      %v322 = vadd.f32 0.0, %v321
      %v323 = vpop.f32.mrb[0].mxu0
      %v324 = vpop.f32.mrb[0].mxu0
      %v325 = vadd.f32 0.0, %v324
      %v326 = vpop.f32.mrb[0].mxu0
      %327 = vmatprep.mubr.bf16.mxu0 0
      %328 = vmatmul.mubr.bf16.gmra.mrb[0].mxu0 %v232
      %v329 = vpop.f32.mrb[0].mxu0
      %v330 = vadd.f32 0.0, %v329
      %v331 = vpop.f32.mrb[0].mxu0
      %v332 = vpop.f32.mrb[0].mxu0
      %v333 = vadd.f32 0.0, %v332
      %v334 = vpop.f32.mrb[0].mxu0
      %335 = vmatprep.mubr.bf16.mxu0 0
      %336 = vmatmul.mubr.bf16.gmra.mrb[0].mxu0 %v233
      %v337 = vpop.f32.mrb[0].mxu0
      %v338 = vadd.f32 0.0, %v337
      %v339 = vpop.f32.mrb[0].mxu0
      %v340 = vpop.f32.mrb[0].mxu0
      %v341 = vadd.f32 0.0, %v340
      %v342 = vpop.f32.mrb[0].mxu0
      %343 = vmatprep.mubr.bf16.mxu0 0
      %344 = vmatmul.mubr.bf16.gmra.mrb[0].mxu0 %v234
      %v345 = vpop.f32.mrb[0].mxu0
      %v346 = vadd.f32 0.0, %v345
      %v347 = vpop.f32.mrb[0].mxu0
      %v348 = vpop.f32.mrb[0].mxu0
      %v349 = vadd.f32 0.0, %v348
      %v350 = vpop.f32.mrb[0].mxu0
      %351 = vdwg.mxu0
      %v354 = vunpack.c.l.b16 %v172
      %v355 = vunpack.c.l.b16 %v173
      %v356 = vpack.c.b16 %v355, %v354
      %v374 = vunpack.c.l.b16 %v182
      %v375 = vunpack.c.l.b16 %v183
      %v376 = vunpack.c.l.b16 %v184
      %v377 = vunpack.c.l.b16 %v185
      %v378 = vunpack.c.l.b16 %v186
      %v379 = vunpack.c.l.b16 %v187
      %v380 = vunpack.c.l.b16 %v188
      %v381 = vunpack.c.l.b16 %v189
      %v382 = vunpack.c.l.b16 %v190
      %v383 = vunpack.c.l.b16 %v191
      %v384 = vunpack.c.l.b16 %v192
      %v385 = vunpack.c.l.b16 %v193
      %v386 = vunpack.c.l.b16 %v194
      %v387 = vunpack.c.l.b16 %v195
      %v388 = vunpack.c.l.b16 %v196
      %v389 = vunpack.c.l.b16 %v197
      %v390 = vpack.c.b16 %v375, %v374
      %v391 = vpack.c.b16 %v377, %v376
      %v392 = vpack.c.b16 %v379, %v378
      %v393 = vpack.c.b16 %v381, %v380
      %v394 = vpack.c.b16 %v383, %v382
      %v395 = vpack.c.b16 %v385, %v384
      %v396 = vpack.c.b16 %v387, %v386
      %v397 = vpack.c.b16 %v389, %v388
      %406 = vmatprep.subr.bf16.mxu0 0
      %407 = vmatpush1.bf16.msra.mxu0 %v390
      %408 = vmatprep.subr.bf16.mxu0 0
      %409 = vmatpush1.bf16.msra.mxu0 %v391
      %410 = vmatprep.subr.bf16.mxu0 0
      %411 = vmatpush1.bf16.msra.mxu0 %v392
      %412 = vmatprep.subr.bf16.mxu0 0
      %413 = vmatpush1.bf16.msra.mxu0 %v393
      %414 = vmatprep.subr.bf16.mxu0 0
      %415 = vmatpush1.bf16.msra.mxu0 %v394
      %416 = vmatprep.subr.bf16.mxu0 0
      %417 = vmatpush1.bf16.msra.mxu0 %v395
      %418 = vmatprep.subr.bf16.mxu0 0
      %419 = vmatpush1.bf16.msra.mxu0 %v396
      %420 = vmatprep.subr.bf16.mxu0 0
      %421 = vmatpush1.bf16.msra.mxu0 %v397
      %422 = vmatprep.subr.bf16.mxu0 0
      %423 = vmatpush1.bf16.msra.mxu0 0
      %424 = vmatprep.subr.bf16.mxu0 0
      %425 = vmatpush1.bf16.msra.mxu0 0
      %426 = vmatprep.subr.bf16.mxu0 0
      %427 = vmatpush1.bf16.msra.mxu0 0
      %428 = vmatprep.subr.bf16.mxu0 0
      %429 = vmatpush1.bf16.msra.mxu0 0
      %430 = vmatprep.subr.bf16.mxu0 0
      %431 = vmatpush1.bf16.msra.mxu0 0
      %432 = vmatprep.subr.bf16.mxu0 0
      %433 = vmatpush1.bf16.msra.mxu0 0
      %434 = vmatprep.subr.bf16.mxu0 0
      %435 = vmatpush1.bf16.msra.mxu0 0
      %436 = vmatprep.subr.bf16.mxu0 0
      %437 = vmatpush1.bf16.msra.mxu0 0
      %438 = vmatprep.mubr.bf16.mxu0 0
      %439 = vmatmul.mubr.bf16.gmra.mrb[0].mxu0 %v356
      %v440 = vpop.f32.mrb[0].mxu0
      %v441 = vadd.f32 %v322, %v440
      %v442 = vpop.f32.mrb[0].mxu0
      %v443 = vpop.f32.mrb[0].mxu0
      %v444 = vadd.f32 %v325, %v443
      %v445 = vpop.f32.mrb[0].mxu0
      %446 = vmatprep.mubr.bf16.mxu0 0
      %447 = vmatmul.mubr.bf16.gmra.mrb[0].mxu0 %v231
      %v448 = vpop.f32.mrb[0].mxu0
      %v449 = vadd.f32 %v330, %v448
      %v450 = vpop.f32.mrb[0].mxu0
      %v451 = vpop.f32.mrb[0].mxu0
      %v452 = vadd.f32 %v333, %v451
      %v453 = vpop.f32.mrb[0].mxu0
      %454 = vmatprep.mubr.bf16.mxu0 0
      %455 = vmatmul.mubr.bf16.gmra.mrb[0].mxu0 %v232
      %v456 = vpop.f32.mrb[0].mxu0
      %v457 = vadd.f32 %v338, %v456
      %v458 = vpop.f32.mrb[0].mxu0
      %v459 = vpop.f32.mrb[0].mxu0
      %v460 = vadd.f32 %v341, %v459
      %v461 = vpop.f32.mrb[0].mxu0
      %462 = vmatprep.mubr.bf16.mxu0 0
      %463 = vmatmul.mubr.bf16.gmra.mrb[0].mxu0 %v233
      %v464 = vpop.f32.mrb[0].mxu0
      %v465 = vadd.f32 %v346, %v464
      %v466 = vpop.f32.mrb[0].mxu0
      %v467 = vpop.f32.mrb[0].mxu0
      %v468 = vadd.f32 %v349, %v467
      %v469 = vpop.f32.mrb[0].mxu0
      %470 = vdwg.mxu0
      %s471 = scalar_lea.vmem %s165, 40
      %v472 = vld [vmem:[%s471] sm:$0xf]
      %v473 = vld [vmem:[%s471 + $0x4] sm:$0xf]
      %v474 = vld [vmem:[%s471 + $0x8] sm:$0xf]
      %v475 = vld [vmem:[%s471 + $0xc] sm:$0xf]
      %v476 = vld [vmem:[%s471 + $0x10] sm:$0xf]
      %v477 = vld [vmem:[%s471 + $0x14] sm:$0xf]
      %v478 = vld [vmem:[%s471 + $0x18] sm:$0xf]
      %v479 = vld [vmem:[%s471 + $0x1c] sm:$0xf]
      %v480 = vld [vmem:[%s471 + $0x20] sm:$0xf]
      %v481 = vld [vmem:[%s471 + $0x24] sm:$0xf]
      %s482 = scalar_lea.vmem %s1, 64
      %v483 = vld [vmem:[%s482] sm:$0xf]
      %v484 = vld [vmem:[%s482 + $0x4] sm:$0xf]
      %v485 = vld [vmem:[%s482 + $0x8] sm:$0xf]
      %v486 = vld [vmem:[%s482 + $0xc] sm:$0xf]
      %v487 = vld [vmem:[%s482 + $0x10] sm:$0xf]
      %v488 = vld [vmem:[%s482 + $0x14] sm:$0xf]
      %v489 = vld [vmem:[%s482 + $0x18] sm:$0xf]
      %v490 = vld [vmem:[%s482 + $0x1c] sm:$0xf]
      %v491 = vld [vmem:[%s482 + $0x20] sm:$0xf]
      %v492 = vld [vmem:[%s482 + $0x24] sm:$0xf]
      %v493 = vld [vmem:[%s482 + $0x28] sm:$0xf]
      %v494 = vld [vmem:[%s482 + $0x2c] sm:$0xf]
      %v495 = vld [vmem:[%s482 + $0x30] sm:$0xf]
      %v496 = vld [vmem:[%s482 + $0x34] sm:$0xf]
      %v497 = vld [vmem:[%s482 + $0x38] sm:$0xf]
      %v498 = vld [vmem:[%s482 + $0x3c] sm:$0xf]
      %v507 = vunpack.c.l.b16 %v472
      %v508 = vunpack.c.l.b16 %v473
      %v509 = vunpack.c.l.b16 %v474
      %v510 = vunpack.c.l.b16 %v475
      %v511 = vunpack.c.l.b16 %v476
      %v512 = vunpack.c.l.b16 %v477
      %v513 = vunpack.c.l.b16 %v478
      %v514 = vunpack.c.l.b16 %v479
      %v515 = vpack.c.b16 %v508, %v507
      %v516 = vpack.c.b16 %v510, %v509
      %v517 = vpack.c.b16 %v512, %v511
      %v518 = vpack.c.b16 %v514, %v513
      %v539 = vunpack.c.l.b16 %v483
      %v540 = vunpack.c.l.b16 %v484
      %v541 = vunpack.c.l.b16 %v485
      %v542 = vunpack.c.l.b16 %v486
      %v543 = vunpack.c.l.b16 %v487
      %v544 = vunpack.c.l.b16 %v488
      %v545 = vunpack.c.l.b16 %v489
      %v546 = vunpack.c.l.b16 %v490
      %v547 = vunpack.c.l.b16 %v491
      %v548 = vunpack.c.l.b16 %v492
      %v549 = vunpack.c.l.b16 %v493
      %v550 = vunpack.c.l.b16 %v494
      %v551 = vunpack.c.l.b16 %v495
      %v552 = vunpack.c.l.b16 %v496
      %v553 = vunpack.c.l.b16 %v497
      %v554 = vunpack.c.l.b16 %v498
      %v555 = vpack.c.b16 %v540, %v539
      %v556 = vpack.c.b16 %v542, %v541
      %v557 = vpack.c.b16 %v544, %v543
      %v558 = vpack.c.b16 %v546, %v545
      %v559 = vpack.c.b16 %v548, %v547
      %v560 = vpack.c.b16 %v550, %v549
      %v561 = vpack.c.b16 %v552, %v551
      %v562 = vpack.c.b16 %v554, %v553
      %571 = vmatprep.subr.bf16.mxu0 0
      %572 = vmatpush1.bf16.msra.mxu0 %v555
      %573 = vmatprep.subr.bf16.mxu0 0
      %574 = vmatpush1.bf16.msra.mxu0 %v556
      %575 = vmatprep.subr.bf16.mxu0 0
      %576 = vmatpush1.bf16.msra.mxu0 %v557
      %577 = vmatprep.subr.bf16.mxu0 0
      %578 = vmatpush1.bf16.msra.mxu0 %v558
      %579 = vmatprep.subr.bf16.mxu0 0
      %580 = vmatpush1.bf16.msra.mxu0 %v559
      %581 = vmatprep.subr.bf16.mxu0 0
      %582 = vmatpush1.bf16.msra.mxu0 %v560
      %583 = vmatprep.subr.bf16.mxu0 0
      %584 = vmatpush1.bf16.msra.mxu0 %v561
      %585 = vmatprep.subr.bf16.mxu0 0
      %586 = vmatpush1.bf16.msra.mxu0 %v562
      %587 = vmatprep.subr.bf16.mxu0 0
      %588 = vmatpush1.bf16.msra.mxu0 0
      %589 = vmatprep.subr.bf16.mxu0 0
      %590 = vmatpush1.bf16.msra.mxu0 0
      %591 = vmatprep.subr.bf16.mxu0 0
      %592 = vmatpush1.bf16.msra.mxu0 0
      %593 = vmatprep.subr.bf16.mxu0 0
      %594 = vmatpush1.bf16.msra.mxu0 0
      %595 = vmatprep.subr.bf16.mxu0 0
      %596 = vmatpush1.bf16.msra.mxu0 0
      %597 = vmatprep.subr.bf16.mxu0 0
      %598 = vmatpush1.bf16.msra.mxu0 0
      %599 = vmatprep.subr.bf16.mxu0 0
      %600 = vmatpush1.bf16.msra.mxu0 0
      %601 = vmatprep.subr.bf16.mxu0 0
      %602 = vmatpush1.bf16.msra.mxu0 0
      %603 = vmatprep.mubr.bf16.mxu0 0
      %604 = vmatmul.mubr.bf16.gmra.mrb[0].mxu0 %v515
      %v605 = vpop.f32.mrb[0].mxu0
      %v606 = vadd.f32 0.0, %v605
      %v607 = vpop.f32.mrb[0].mxu0
      %v608 = vpop.f32.mrb[0].mxu0
      %v609 = vadd.f32 0.0, %v608
      %v610 = vpop.f32.mrb[0].mxu0
      %611 = vmatprep.mubr.bf16.mxu0 0
      %612 = vmatmul.mubr.bf16.gmra.mrb[0].mxu0 %v516
      %v613 = vpop.f32.mrb[0].mxu0
      %v614 = vadd.f32 0.0, %v613
      %v615 = vpop.f32.mrb[0].mxu0
      %v616 = vpop.f32.mrb[0].mxu0
      %v617 = vadd.f32 0.0, %v616
      %v618 = vpop.f32.mrb[0].mxu0
      %619 = vmatprep.mubr.bf16.mxu0 0
      %620 = vmatmul.mubr.bf16.gmra.mrb[0].mxu0 %v517
      %v621 = vpop.f32.mrb[0].mxu0
      %v622 = vadd.f32 0.0, %v621
      %v623 = vpop.f32.mrb[0].mxu0
      %v624 = vpop.f32.mrb[0].mxu0
      %v625 = vadd.f32 0.0, %v624
      %v626 = vpop.f32.mrb[0].mxu0
      %627 = vmatprep.mubr.bf16.mxu0 0
      %628 = vmatmul.mubr.bf16.gmra.mrb[0].mxu0 %v518
      %v629 = vpop.f32.mrb[0].mxu0
      %v630 = vadd.f32 0.0, %v629
      %v631 = vpop.f32.mrb[0].mxu0
      %v632 = vpop.f32.mrb[0].mxu0
      %v633 = vadd.f32 0.0, %v632
      %v634 = vpop.f32.mrb[0].mxu0
      %635 = vdwg.mxu0
      %v636 = vadd.f32 %v441, %v606
      %v637 = vadd.f32 %v444, %v609
      %v638 = vadd.f32 %v449, %v614
      %v639 = vadd.f32 %v452, %v617
      %v640 = vadd.f32 %v457, %v622
      %v641 = vadd.f32 %v460, %v625
      %v642 = vadd.f32 %v465, %v630
      %v643 = vadd.f32 %v468, %v633
      %s644 = scalar_lea.vmem %s1, 192
      %v645 = vld [vmem:[%s644] sm:$0xf]
      %v646 = vld [vmem:[%s644 + $0x4] sm:$0xf]
      %v647 = vld [vmem:[%s644 + $0x8] sm:$0xf]
      %v648 = vld [vmem:[%s644 + $0xc] sm:$0xf]
      %v649 = vld [vmem:[%s644 + $0x10] sm:$0xf]
      %v650 = vld [vmem:[%s644 + $0x14] sm:$0xf]
      %v651 = vld [vmem:[%s644 + $0x18] sm:$0xf]
      %v652 = vld [vmem:[%s644 + $0x1c] sm:$0xf]
      %v653 = vld [vmem:[%s644 + $0x20] sm:$0xf]
      %v654 = vld [vmem:[%s644 + $0x24] sm:$0xf]
      %v655 = vld [vmem:[%s644 + $0x28] sm:$0xf]
      %v656 = vld [vmem:[%s644 + $0x2c] sm:$0xf]
      %v657 = vld [vmem:[%s644 + $0x30] sm:$0xf]
      %v658 = vld [vmem:[%s644 + $0x34] sm:$0xf]
      %v659 = vld [vmem:[%s644 + $0x38] sm:$0xf]
      %v660 = vld [vmem:[%s644 + $0x3c] sm:$0xf]
      %v663 = vunpack.c.l.b16 %v480
      %v664 = vunpack.c.l.b16 %v481
      %v665 = vpack.c.b16 %v664, %v663
      %v683 = vunpack.c.l.b16 %v645
      %v684 = vunpack.c.l.b16 %v646
      %v685 = vunpack.c.l.b16 %v647
      %v686 = vunpack.c.l.b16 %v648
      %v687 = vunpack.c.l.b16 %v649
      %v688 = vunpack.c.l.b16 %v650
      %v689 = vunpack.c.l.b16 %v651
      %v690 = vunpack.c.l.b16 %v652
      %v691 = vunpack.c.l.b16 %v653
      %v692 = vunpack.c.l.b16 %v654
      %v693 = vunpack.c.l.b16 %v655
      %v694 = vunpack.c.l.b16 %v656
      %v695 = vunpack.c.l.b16 %v657
      %v696 = vunpack.c.l.b16 %v658
      %v697 = vunpack.c.l.b16 %v659
      %v698 = vunpack.c.l.b16 %v660
      %v699 = vpack.c.b16 %v684, %v683
      %v700 = vpack.c.b16 %v686, %v685
      %v701 = vpack.c.b16 %v688, %v687
      %v702 = vpack.c.b16 %v690, %v689
      %v703 = vpack.c.b16 %v692, %v691
      %v704 = vpack.c.b16 %v694, %v693
      %v705 = vpack.c.b16 %v696, %v695
      %v706 = vpack.c.b16 %v698, %v697
      %715 = vmatprep.subr.bf16.mxu0 0
      %716 = vmatpush1.bf16.msra.mxu0 %v699
      %717 = vmatprep.subr.bf16.mxu0 0
      %718 = vmatpush1.bf16.msra.mxu0 %v700
      %719 = vmatprep.subr.bf16.mxu0 0
      %720 = vmatpush1.bf16.msra.mxu0 %v701
      %721 = vmatprep.subr.bf16.mxu0 0
      %722 = vmatpush1.bf16.msra.mxu0 %v702
      %723 = vmatprep.subr.bf16.mxu0 0
      %724 = vmatpush1.bf16.msra.mxu0 %v703
      %725 = vmatprep.subr.bf16.mxu0 0
      %726 = vmatpush1.bf16.msra.mxu0 %v704
      %727 = vmatprep.subr.bf16.mxu0 0
      %728 = vmatpush1.bf16.msra.mxu0 %v705
      %729 = vmatprep.subr.bf16.mxu0 0
      %730 = vmatpush1.bf16.msra.mxu0 %v706
      %731 = vmatprep.subr.bf16.mxu0 0
      %732 = vmatpush1.bf16.msra.mxu0 0
      %733 = vmatprep.subr.bf16.mxu0 0
      %734 = vmatpush1.bf16.msra.mxu0 0
      %735 = vmatprep.subr.bf16.mxu0 0
      %736 = vmatpush1.bf16.msra.mxu0 0
      %737 = vmatprep.subr.bf16.mxu0 0
      %738 = vmatpush1.bf16.msra.mxu0 0
      %739 = vmatprep.subr.bf16.mxu0 0
      %740 = vmatpush1.bf16.msra.mxu0 0
      %741 = vmatprep.subr.bf16.mxu0 0
      %742 = vmatpush1.bf16.msra.mxu0 0
      %743 = vmatprep.subr.bf16.mxu0 0
      %744 = vmatpush1.bf16.msra.mxu0 0
      %745 = vmatprep.subr.bf16.mxu0 0
      %746 = vmatpush1.bf16.msra.mxu0 0
      %747 = vmatprep.mubr.bf16.mxu0 0
      %748 = vmatmul.mubr.bf16.gmra.mrb[0].mxu0 %v516
      %v749 = vpop.f32.mrb[0].mxu0
      %v750 = vadd.f32 0.0, %v749
      %v751 = vpop.f32.mrb[0].mxu0
      %v752 = vpop.f32.mrb[0].mxu0
      %v753 = vadd.f32 0.0, %v752
      %v754 = vpop.f32.mrb[0].mxu0
      %755 = vmatprep.mubr.bf16.mxu0 0
      %756 = vmatmul.mubr.bf16.gmra.mrb[0].mxu0 %v517
      %v757 = vpop.f32.mrb[0].mxu0
      %v758 = vadd.f32 0.0, %v757
      %v759 = vpop.f32.mrb[0].mxu0
      %v760 = vpop.f32.mrb[0].mxu0
      %v761 = vadd.f32 0.0, %v760
      %v762 = vpop.f32.mrb[0].mxu0
      %763 = vmatprep.mubr.bf16.mxu0 0
      %764 = vmatmul.mubr.bf16.gmra.mrb[0].mxu0 %v518
      %v765 = vpop.f32.mrb[0].mxu0
      %v766 = vadd.f32 0.0, %v765
      %v767 = vpop.f32.mrb[0].mxu0
      %v768 = vpop.f32.mrb[0].mxu0
      %v769 = vadd.f32 0.0, %v768
      %v770 = vpop.f32.mrb[0].mxu0
      %771 = vmatprep.mubr.bf16.mxu0 0
      %772 = vmatmul.mubr.bf16.gmra.mrb[0].mxu0 %v665
      %v773 = vpop.f32.mrb[0].mxu0
      %v774 = vadd.f32 0.0, %v773
      %v775 = vpop.f32.mrb[0].mxu0
      %v776 = vpop.f32.mrb[0].mxu0
      %v777 = vadd.f32 0.0, %v776
      %v778 = vpop.f32.mrb[0].mxu0
      %779 = vdwg.mxu0
      %v780 = vadd.f32 %v636, %v750
      %v781 = vadd.f32 %v637, %v753
      %v782 = vadd.f32 %v638, %v758
      %v783 = vadd.f32 %v639, %v761
      %v784 = vadd.f32 %v640, %v766
      %v785 = vadd.f32 %v641, %v769
      %v786 = vadd.f32 %v642, %v774
      %v787 = vadd.f32 %v643, %v777
      %v788 = vld [vmem:[%s2] sm:$0x1]
      %v790 = vlaneseq
      %v791 = vshrl.u32 %v790, 7
      %v792 = vsub.s32 0, %v791
      %v793 = vrot.slane %v788, %v792
      %v795 = vadd.f32 %v780, %v793
      %v796 = vadd.f32 %v781, %v793
      %v797 = vadd.f32 %v782, %v793
      %v798 = vadd.f32 %v783, %v793
      %v799 = vadd.f32 %v784, %v793
      %v800 = vadd.f32 %v785, %v793
      %v801 = vadd.f32 %v786, %v793
      %v802 = vadd.f32 %v787, %v793
      %v803 = vmax.f32 %v795, 0.0
      %v804 = vmax.f32 %v796, 0.0
      %v805 = vmax.f32 %v797, 0.0
      %v806 = vmax.f32 %v798, 0.0
      %v807 = vmax.f32 %v799, 0.0
      %v808 = vmax.f32 %v800, 0.0
      %v809 = vmax.f32 %v801, 0.0
      %v810 = vmax.f32 %v802, 0.0
      %v811 = vpack.c.bf16 %v804, %v803
      %v812 = vpack.c.bf16 %v806, %v805
      %v813 = vpack.c.bf16 %v808, %v807
      %v814 = vpack.c.bf16 %v810, %v809
      %v819 = vunpack.c.l.b16 %v811
      %v820 = vunpack.c.h.b16 %v811
      %v821 = vunpack.c.l.b16 %v812
      %v822 = vunpack.c.h.b16 %v812
      %v823 = vunpack.c.l.b16 %v813
      %v824 = vunpack.c.h.b16 %v813
      %v825 = vunpack.c.l.b16 %v814
      %v826 = vunpack.c.h.b16 %v814
      %v827 = vpack.c.b16 %v819, %v819
      %v828 = vpack.c.b16 %v820, %v820
      %v829 = vpack.c.b16 %v821, %v821
      %v830 = vpack.c.b16 %v822, %v822
      %v831 = vpack.c.b16 %v823, %v823
      %v832 = vpack.c.b16 %v824, %v824
      %v833 = vpack.c.b16 %v825, %v825
      %v834 = vpack.c.b16 %v826, %v826
      %843 = vst [vmem:[%s170] sm:$0xf] %v827
      %844 = vst [vmem:[%s170 + $0x4] sm:$0xf] %v828
      %845 = vst [vmem:[%s170 + $0x8] sm:$0xf] %v829
      %846 = vst [vmem:[%s170 + $0xc] sm:$0xf] %v830
      %847 = vst [vmem:[%s170 + $0x10] sm:$0xf] %v831
      %848 = vst [vmem:[%s170 + $0x14] sm:$0xf] %v832
      %849 = vst [vmem:[%s170 + $0x18] sm:$0xf] %v833
      %850 = vst [vmem:[%s170 + $0x1c] sm:$0xf] %v834
      %p851 = scmp.lt.s32.totalorder %s14, 1
      %s852 = scalar_select %p851, %s14, 1
      %s853 = smul.addr %s852, 8
      %s854 = smul.addr %s853, 4
      %s855 = scalar_lea.vmem %s3, %s854
      // Predicated region
      $region33: #{encoder_forward.6} parent=31 // pred_check
        %p856 = pneg %p100
      $region34: #{encoder_forward.6} parent=31 // pred_check_branch
        %858 = sbr.rel (%p856) target = $region36
      $region35: #{encoder_forward.6} parent=31 // pred_region
        _
      $region36: #{encoder_forward.6} parent=31 // pred_fallthru
        _
    $region32: #{encoder_forward.6} parent=5 // pred_fallthru
      _
    %p859 = scmp.le.s32.totalorder 2, %s9
    // Predicated region
    $region37: #{encoder_forward.6} parent=5 // pred_check
      %p860 = pneg %p859
    $region38: #{encoder_forward.6} parent=5 // pred_check_branch
      %862 = sbr.rel (%p860) target = $region40
    $region39: #{encoder_forward.6} parent=5 // pred_region
      %s863 = ssub.s32 %s9, 2
      // Predicated region
      $region41: #{encoder_forward.6} parent=39 // pred_check
        %p864 = pneg %p106
      $region42: #{encoder_forward.6} parent=39 // pred_check_branch
        %866 = sbr.rel (%p864) target = $region44
      $region43: #{encoder_forward.6} parent=39 // pred_region
        %p867 = scmp.lt.s32.totalorder %s15, 1
        %s868 = scalar_select %p867, %s15, 1
        %s869 = smul.addr %s868, 8
        %s870 = smul.addr %s869, 4
        %s871 = scalar_lea.vmem %s3, %s870
      $region44: #{encoder_forward.6} parent=39 // pred_fallthru
        _
    $region40: #{encoder_forward.6} parent=5 // pred_fallthru
      _
  $region6: #{encoder_forward.6} parent=0 // loop_footer
    %s13 = sadd.s32 1, %s9
  $region7: #{encoder_forward.6} parent=0 // loop_footer_branch
    %8 = sbr.rel target = $region3
  $region8: #{encoder_forward.6} parent=0 // loop_exit
    _

// kernel: encoder_forward.9
$region0: #{encoder_forward.9}
  #allocation0 [shape = 'u32[]', space=smem, size = 0x4, offset = 0x4, fixed_abs, tag = 'smem constant byte address 0x4 - core index']
  #allocation1 [shape = 'u32[144,128]{1,0:T(1,128)}', space=vmem, size = 0x12000, scoped, tag = 'internal scratch']
  %s0 = inlined_call_operand.vmem [shape: bf16[2,3,96,128], index: 0, kind: input, shape index: {}]
  %s1 = inlined_call_operand.vmem [shape: bf16[9,128,128], index: 1, kind: input, shape index: {}]
  %s2 = inlined_call_operand.vmem [shape: f32[1,128], index: 2, kind: input, shape index: {}]
  %s3 = inlined_call_operand.vmem [shape: bf16[2,64,128], index: 3, kind: output, shape index: {}]
  %s4 = sld [smem:[#allocation0]]
  $region45: #{encoder_forward.9} parent=0
    _
  %s6 = ssub.s32 1, %s4
  %s7 = scalar_select 0, %s6, %s4
  loop: start=0, step=1, limit=4
  $region2: #{encoder_forward.9} parent=0 // loop_pre_header
    _
  $region3: #{encoder_forward.9} parent=0 // loop_header
    %s9 = sphi 0, %s13
    %p10 = scmp.ge.s32.totalorder %s9, 4
    %s19 = sphi 0, %s21
    %s22 = sphi 0, %s19
    %s23 = sphi 0, %s22
    %s39 = sphi 0, %s23
    %s43 = sphi 0, %s43
    %s45 = sphi 0, %s43
    %s46 = sphi 0, %s45
    %s60 = sphi 0, %s46
    %s64 = sphi 0, %s64
    %s66 = sphi 0, %s64
    %s67 = sphi 0, %s66
    %s81 = sphi 0, %s67
    %s87 = sphi 0, %s89
    %s90 = sphi 0, %s87
    %s91 = sphi 0, %s90
    %s107 = sphi 0, %s91
  $region4: #{encoder_forward.9} parent=0 // loop_header_branch
    %12 = sbr.rel (%p10) target = $region8
  $region5: #{encoder_forward.9} parent=0 // loop_body
    %s14 = ssub.s32 %s9, 1
    %s15 = ssub.s32 %s9, 2
    %s16 = sadd.s32 %s9, 1
    %s17 = ssub.s32 %s9, %s16
    %p18 = scmp.eq.s32.totalorder %s17, 0
    %s20 = sadd.s32 %s19, 1
    %s21 = scalar_select %p18, %s19, %s20
    %p24 = pneg %p18
    %p25 = scmp.eq.s32.totalorder %s9, 1
    %p26 = por %p24, %p25
    %p27 = scmp.ne.s32.totalorder %s19, %s22
    %p28 = scmp.eq.s32.totalorder %s9, 0
    %p29 = por %p27, %p28
    %p30 = scmp.ne.s32.totalorder %s19, %s22
    %p31 = scmp.eq.s32.totalorder %s14, 1
    %p32 = por %p30, %p31
    %p33 = scmp.ne.s32.totalorder %s22, %s23
    %p34 = scmp.eq.s32.totalorder %s14, 0
    %p35 = por %p33, %p34
    %p36 = scmp.ne.s32.totalorder %s22, %s23
    %p37 = scmp.eq.s32.totalorder %s15, 1
    %p38 = por %p36, %p37
    %p40 = scmp.ne.s32.totalorder %s23, %s39
    %p41 = scmp.eq.s32.totalorder %s15, 0
    %p42 = por %p40, %p41
    %s44 = sadd.s32 %s43, 1
    %p47 = scmp.eq.s32.totalorder %s9, 1
    %p48 = scmp.ne.s32.totalorder %s43, %s45
    %p49 = scmp.eq.s32.totalorder %s9, 0
    %p50 = por %p48, %p49
    %p51 = scmp.ne.s32.totalorder %s43, %s45
    %p52 = scmp.eq.s32.totalorder %s14, 1
    %p53 = por %p51, %p52
    %p54 = scmp.ne.s32.totalorder %s45, %s46
    %p55 = scmp.eq.s32.totalorder %s14, 0
    %p56 = por %p54, %p55
    %p57 = scmp.ne.s32.totalorder %s45, %s46
    %p58 = scmp.eq.s32.totalorder %s15, 1
    %p59 = por %p57, %p58
    %p61 = scmp.ne.s32.totalorder %s46, %s60
    %p62 = scmp.eq.s32.totalorder %s15, 0
    %p63 = por %p61, %p62
    %s65 = sadd.s32 %s64, 1
    %p68 = scmp.eq.s32.totalorder %s9, 1
    %p69 = scmp.ne.s32.totalorder %s64, %s66
    %p70 = scmp.eq.s32.totalorder %s9, 0
    %p71 = por %p69, %p70
    %p72 = scmp.ne.s32.totalorder %s64, %s66
    %p73 = scmp.eq.s32.totalorder %s14, 1
    %p74 = por %p72, %p73
    %p75 = scmp.ne.s32.totalorder %s66, %s67
    %p76 = scmp.eq.s32.totalorder %s14, 0
    %p77 = por %p75, %p76
    %p78 = scmp.ne.s32.totalorder %s66, %s67
    %p79 = scmp.eq.s32.totalorder %s15, 1
    %p80 = por %p78, %p79
    %p82 = scmp.ne.s32.totalorder %s67, %s81
    %p83 = scmp.eq.s32.totalorder %s15, 0
    %p84 = por %p82, %p83
    %s85 = ssub.s32 %s9, %s16
    %p86 = scmp.eq.s32.totalorder %s85, 0
    %s88 = sadd.s32 %s87, 1
    %s89 = scalar_select %p86, %s87, %s88
    %p92 = pneg %p86
    %p93 = scmp.eq.s32.totalorder %s9, 1
    %p94 = por %p92, %p93
    %p95 = scmp.ne.s32.totalorder %s87, %s90
    %p96 = scmp.eq.s32.totalorder %s9, 0
    %p97 = por %p95, %p96
    %p98 = scmp.ne.s32.totalorder %s87, %s90
    %p99 = scmp.eq.s32.totalorder %s14, 1
    %p100 = por %p98, %p99
    %p101 = scmp.ne.s32.totalorder %s90, %s91
    %p102 = scmp.eq.s32.totalorder %s14, 0
    %p103 = por %p101, %p102
    %p104 = scmp.ne.s32.totalorder %s90, %s91
    %p105 = scmp.eq.s32.totalorder %s15, 1
    %p106 = por %p104, %p105
    %p108 = scmp.ne.s32.totalorder %s91, %s107
    %p109 = scmp.eq.s32.totalorder %s15, 0
    %p110 = por %p108, %p109
    %p111 = scmp.le.s32.totalorder 1, %s9
    %p112 = scmp.lt.s32.totalorder %s9, 3
    %p113 = pnand %p111, %p112
    %p114 = pneg %p113
    // Predicated region
    $region9: #{encoder_forward.9} parent=5 // pred_check
      _
    $region10: #{encoder_forward.9} parent=5 // pred_check_branch
      %116 = sbr.rel (%p113) target = $region12
    $region11: #{encoder_forward.9} parent=5 // pred_region
      %s117 = ssub.s32 %s9, 1
      // Predicated region
      $region13: #{encoder_forward.9} parent=11 // pred_check
        %p118 = pneg %p56
      $region14: #{encoder_forward.9} parent=11 // pred_check_branch
        %120 = sbr.rel (%p118) target = $region16
      $region15: #{encoder_forward.9} parent=11 // pred_region
        _
      $region16: #{encoder_forward.9} parent=11 // pred_fallthru
        _
      // Predicated region
      $region17: #{encoder_forward.9} parent=11 // pred_check
        %p121 = pneg %p77
      $region18: #{encoder_forward.9} parent=11 // pred_check_branch
        %123 = sbr.rel (%p121) target = $region20
      $region19: #{encoder_forward.9} parent=11 // pred_region
        _
      $region20: #{encoder_forward.9} parent=11 // pred_fallthru
        _
    $region12: #{encoder_forward.9} parent=5 // pred_fallthru
      _
    %p124 = scmp.lt.s32.totalorder %s9, 2
    // Predicated region
    $region21: #{encoder_forward.9} parent=5 // pred_check
      %p125 = pneg %p124
    $region22: #{encoder_forward.9} parent=5 // pred_check_branch
      %127 = sbr.rel (%p125) target = $region24
    $region23: #{encoder_forward.9} parent=5 // pred_region
      // Predicated region
      $region25: #{encoder_forward.9} parent=23 // pred_check
        %p128 = pneg %p29
      $region26: #{encoder_forward.9} parent=23 // pred_check_branch
        %130 = sbr.rel (%p128) target = $region28
      $region27: #{encoder_forward.9} parent=23 // pred_region
        %p131 = scmp.lt.s32.totalorder %s9, 1
        %s132 = scalar_select %p131, %s9, 1
        %s133 = smul.addr %s132, 36
        %s134 = smul.addr %s133, 4
        %s135 = scalar_lea.vmem %s0, %s134
      $region28: #{encoder_forward.9} parent=23 // pred_fallthru
        _
    $region24: #{encoder_forward.9} parent=5 // pred_fallthru
      _
    %p136 = scmp.le.s32.totalorder 1, %s9
    %p137 = scmp.lt.s32.totalorder %s9, 3
    %p138 = pnand %p136, %p137
    %p139 = pneg %p138
    // Predicated region
    $region29: #{encoder_forward.9} parent=5 // pred_check
      _
    $region30: #{encoder_forward.9} parent=5 // pred_check_branch
      %141 = sbr.rel (%p138) target = $region32
    $region31: #{encoder_forward.9} parent=5 // pred_region
      %s142 = ssub.s32 %s9, 1
      %p143 = scmp.lt.s32.totalorder %s14, 1
      %s144 = scalar_select %p143, %s14, 1
      %s145 = smul.addr %s144, 36
      %s146 = smul.addr %s145, 4
      %s147 = scalar_lea.vmem %s0, %s146
      %p148 = pneg %p35
      %p149 = pneg %p32
      %p150 = pneg %p56
      %p151 = pneg %p53
      %p152 = pneg %p77
      %p153 = pneg %p74
      %p154 = pneg %p103
      %p155 = pneg %p100
      %p156 = scmp.lt.s32.totalorder %s14, 1
      %s157 = scalar_select %p156, %s14, 1
      %s158 = smul.addr %s157, 8
      %s159 = smul.addr %s158, 4
      %s160 = scalar_lea.vmem %s3, %s159
      %p161 = scmp.lt.s32.totalorder %s14, 1
      %s162 = scalar_select %p161, %s14, 1
      %s163 = smul.addr %s162, 36
      %s164 = smul.addr %s163, 4
      %s165 = scalar_lea.vmem %s0, %s164
      %p166 = scmp.lt.s32.totalorder %s14, 1
      %s167 = scalar_select %p166, %s14, 1
      %s168 = smul.addr %s167, 8
      %s169 = smul.addr %s168, 4
      %s170 = scalar_lea.vmem %s3, %s169
      %v172 = vld [vmem:[%s165] sm:$0xf]
      %v173 = vld [vmem:[%s165 + $0x4] sm:$0xf]
      %v174 = vld [vmem:[%s165 + $0x8] sm:$0xf]
      %v175 = vld [vmem:[%s165 + $0xc] sm:$0xf]
      %v176 = vld [vmem:[%s165 + $0x10] sm:$0xf]
      %v177 = vld [vmem:[%s165 + $0x14] sm:$0xf]
      %v178 = vld [vmem:[%s165 + $0x18] sm:$0xf]
      %v179 = vld [vmem:[%s165 + $0x1c] sm:$0xf]
      %v180 = vld [vmem:[%s165 + $0x20] sm:$0xf]
      %v181 = vld [vmem:[%s165 + $0x24] sm:$0xf]
      %v182 = vld [vmem:[%s165 + $0x28] sm:$0xf]
      %v183 = vld [vmem:[%s165 + $0x2c] sm:$0xf]
      %v184 = vld [vmem:[%s1] sm:$0xf]
      %v185 = vld [vmem:[%s1 + $0x4] sm:$0xf]
      %v186 = vld [vmem:[%s1 + $0x8] sm:$0xf]
      %v187 = vld [vmem:[%s1 + $0xc] sm:$0xf]
      %v188 = vld [vmem:[%s1 + $0x10] sm:$0xf]
      %v189 = vld [vmem:[%s1 + $0x14] sm:$0xf]
      %v190 = vld [vmem:[%s1 + $0x18] sm:$0xf]
      %v191 = vld [vmem:[%s1 + $0x1c] sm:$0xf]
      %v192 = vld [vmem:[%s1 + $0x20] sm:$0xf]
      %v193 = vld [vmem:[%s1 + $0x24] sm:$0xf]
      %v194 = vld [vmem:[%s1 + $0x28] sm:$0xf]
      %v195 = vld [vmem:[%s1 + $0x2c] sm:$0xf]
      %v196 = vld [vmem:[%s1 + $0x30] sm:$0xf]
      %v197 = vld [vmem:[%s1 + $0x34] sm:$0xf]
      %v198 = vld [vmem:[%s1 + $0x38] sm:$0xf]
      %v199 = vld [vmem:[%s1 + $0x3c] sm:$0xf]
      %s200 = scalar_lea.vmem %s1, 192
      %v201 = vld [vmem:[%s200] sm:$0xf]
      %v202 = vld [vmem:[%s200 + $0x4] sm:$0xf]
      %v203 = vld [vmem:[%s200 + $0x8] sm:$0xf]
      %v204 = vld [vmem:[%s200 + $0xc] sm:$0xf]
      %v205 = vld [vmem:[%s200 + $0x10] sm:$0xf]
      %v206 = vld [vmem:[%s200 + $0x14] sm:$0xf]
      %v207 = vld [vmem:[%s200 + $0x18] sm:$0xf]
      %v208 = vld [vmem:[%s200 + $0x1c] sm:$0xf]
      %v209 = vld [vmem:[%s200 + $0x20] sm:$0xf]
      %v210 = vld [vmem:[%s200 + $0x24] sm:$0xf]
      %v211 = vld [vmem:[%s200 + $0x28] sm:$0xf]
      %v212 = vld [vmem:[%s200 + $0x2c] sm:$0xf]
      %v213 = vld [vmem:[%s200 + $0x30] sm:$0xf]
      %v214 = vld [vmem:[%s200 + $0x34] sm:$0xf]
      %v215 = vld [vmem:[%s200 + $0x38] sm:$0xf]
      %v216 = vld [vmem:[%s200 + $0x3c] sm:$0xf]
      %v225 = vunpack.c.l.b16 %v174
      %v226 = vunpack.c.l.b16 %v175
      %v227 = vunpack.c.l.b16 %v176
      %v228 = vunpack.c.l.b16 %v177
      %v229 = vunpack.c.l.b16 %v178
      %v230 = vunpack.c.l.b16 %v179
      %v231 = vunpack.c.l.b16 %v180
      %v232 = vunpack.c.l.b16 %v181
      %v233 = vpack.c.b16 %v226, %v225
      %v234 = vpack.c.b16 %v228, %v227
      %v235 = vpack.c.b16 %v230, %v229
      %v236 = vpack.c.b16 %v232, %v231
      %v257 = vunpack.c.l.b16 %v201
      %v258 = vunpack.c.l.b16 %v202
      %v259 = vunpack.c.l.b16 %v203
      %v260 = vunpack.c.l.b16 %v204
      %v261 = vunpack.c.l.b16 %v205
      %v262 = vunpack.c.l.b16 %v206
      %v263 = vunpack.c.l.b16 %v207
      %v264 = vunpack.c.l.b16 %v208
      %v265 = vunpack.c.l.b16 %v209
      %v266 = vunpack.c.l.b16 %v210
      %v267 = vunpack.c.l.b16 %v211
      %v268 = vunpack.c.l.b16 %v212
      %v269 = vunpack.c.l.b16 %v213
      %v270 = vunpack.c.l.b16 %v214
      %v271 = vunpack.c.l.b16 %v215
      %v272 = vunpack.c.l.b16 %v216
      %v273 = vpack.c.b16 %v258, %v257
      %v274 = vpack.c.b16 %v260, %v259
      %v275 = vpack.c.b16 %v262, %v261
      %v276 = vpack.c.b16 %v264, %v263
      %v277 = vpack.c.b16 %v266, %v265
      %v278 = vpack.c.b16 %v268, %v267
      %v279 = vpack.c.b16 %v270, %v269
      %v280 = vpack.c.b16 %v272, %v271
      %289 = vmatprep.subr.bf16.mxu0 0
      %290 = vmatpush1.bf16.msra.mxu0 %v273
      %291 = vmatprep.subr.bf16.mxu0 0
      %292 = vmatpush1.bf16.msra.mxu0 %v274
      %293 = vmatprep.subr.bf16.mxu0 0
      %294 = vmatpush1.bf16.msra.mxu0 %v275
      %295 = vmatprep.subr.bf16.mxu0 0
      %296 = vmatpush1.bf16.msra.mxu0 %v276
      %297 = vmatprep.subr.bf16.mxu0 0
      %298 = vmatpush1.bf16.msra.mxu0 %v277
      %299 = vmatprep.subr.bf16.mxu0 0
      %300 = vmatpush1.bf16.msra.mxu0 %v278
      %301 = vmatprep.subr.bf16.mxu0 0
      %302 = vmatpush1.bf16.msra.mxu0 %v279
      %303 = vmatprep.subr.bf16.mxu0 0
      %304 = vmatpush1.bf16.msra.mxu0 %v280
      %305 = vmatprep.subr.bf16.mxu0 0
      %306 = vmatpush1.bf16.msra.mxu0 0
      %307 = vmatprep.subr.bf16.mxu0 0
      %308 = vmatpush1.bf16.msra.mxu0 0
      %309 = vmatprep.subr.bf16.mxu0 0
      %310 = vmatpush1.bf16.msra.mxu0 0
      %311 = vmatprep.subr.bf16.mxu0 0
      %312 = vmatpush1.bf16.msra.mxu0 0
      %313 = vmatprep.subr.bf16.mxu0 0
      %314 = vmatpush1.bf16.msra.mxu0 0
      %315 = vmatprep.subr.bf16.mxu0 0
      %316 = vmatpush1.bf16.msra.mxu0 0
      %317 = vmatprep.subr.bf16.mxu0 0
      %318 = vmatpush1.bf16.msra.mxu0 0
      %319 = vmatprep.subr.bf16.mxu0 0
      %320 = vmatpush1.bf16.msra.mxu0 0
      %321 = vmatprep.mubr.bf16.mxu0 0
      %322 = vmatmul.mubr.bf16.gmra.mrb[0].mxu0 %v233
      %v323 = vpop.f32.mrb[0].mxu0
      %v324 = vadd.f32 0.0, %v323
      %v325 = vpop.f32.mrb[0].mxu0
      %v326 = vpop.f32.mrb[0].mxu0
      %v327 = vadd.f32 0.0, %v326
      %v328 = vpop.f32.mrb[0].mxu0
      %329 = vmatprep.mubr.bf16.mxu0 0
      %330 = vmatmul.mubr.bf16.gmra.mrb[0].mxu0 %v234
      %v331 = vpop.f32.mrb[0].mxu0
      %v332 = vadd.f32 0.0, %v331
      %v333 = vpop.f32.mrb[0].mxu0
      %v334 = vpop.f32.mrb[0].mxu0
      %v335 = vadd.f32 0.0, %v334
      %v336 = vpop.f32.mrb[0].mxu0
      %337 = vmatprep.mubr.bf16.mxu0 0
      %338 = vmatmul.mubr.bf16.gmra.mrb[0].mxu0 %v235
      %v339 = vpop.f32.mrb[0].mxu0
      %v340 = vadd.f32 0.0, %v339
      %v341 = vpop.f32.mrb[0].mxu0
      %v342 = vpop.f32.mrb[0].mxu0
      %v343 = vadd.f32 0.0, %v342
      %v344 = vpop.f32.mrb[0].mxu0
      %345 = vmatprep.mubr.bf16.mxu0 0
      %346 = vmatmul.mubr.bf16.gmra.mrb[0].mxu0 %v236
      %v347 = vpop.f32.mrb[0].mxu0
      %v348 = vadd.f32 0.0, %v347
      %v349 = vpop.f32.mrb[0].mxu0
      %v350 = vpop.f32.mrb[0].mxu0
      %v351 = vadd.f32 0.0, %v350
      %v352 = vpop.f32.mrb[0].mxu0
      %353 = vdwg.mxu0
      %v356 = vunpack.c.l.b16 %v172
      %v357 = vunpack.c.l.b16 %v173
      %v358 = vpack.c.b16 %v357, %v356
      %v376 = vunpack.c.l.b16 %v184
      %v377 = vunpack.c.l.b16 %v185
      %v378 = vunpack.c.l.b16 %v186
      %v379 = vunpack.c.l.b16 %v187
      %v380 = vunpack.c.l.b16 %v188
      %v381 = vunpack.c.l.b16 %v189
      %v382 = vunpack.c.l.b16 %v190
      %v383 = vunpack.c.l.b16 %v191
      %v384 = vunpack.c.l.b16 %v192
      %v385 = vunpack.c.l.b16 %v193
      %v386 = vunpack.c.l.b16 %v194
      %v387 = vunpack.c.l.b16 %v195
      %v388 = vunpack.c.l.b16 %v196
      %v389 = vunpack.c.l.b16 %v197
      %v390 = vunpack.c.l.b16 %v198
      %v391 = vunpack.c.l.b16 %v199
      %v392 = vpack.c.b16 %v377, %v376
      %v393 = vpack.c.b16 %v379, %v378
      %v394 = vpack.c.b16 %v381, %v380
      %v395 = vpack.c.b16 %v383, %v382
      %v396 = vpack.c.b16 %v385, %v384
      %v397 = vpack.c.b16 %v387, %v386
      %v398 = vpack.c.b16 %v389, %v388
      %v399 = vpack.c.b16 %v391, %v390
      %408 = vmatprep.subr.bf16.mxu0 0
      %409 = vmatpush1.bf16.msra.mxu0 %v392
      %410 = vmatprep.subr.bf16.mxu0 0
      %411 = vmatpush1.bf16.msra.mxu0 %v393
      %412 = vmatprep.subr.bf16.mxu0 0
      %413 = vmatpush1.bf16.msra.mxu0 %v394
      %414 = vmatprep.subr.bf16.mxu0 0
      %415 = vmatpush1.bf16.msra.mxu0 %v395
      %416 = vmatprep.subr.bf16.mxu0 0
      %417 = vmatpush1.bf16.msra.mxu0 %v396
      %418 = vmatprep.subr.bf16.mxu0 0
      %419 = vmatpush1.bf16.msra.mxu0 %v397
      %420 = vmatprep.subr.bf16.mxu0 0
      %421 = vmatpush1.bf16.msra.mxu0 %v398
      %422 = vmatprep.subr.bf16.mxu0 0
      %423 = vmatpush1.bf16.msra.mxu0 %v399
      %424 = vmatprep.subr.bf16.mxu0 0
      %425 = vmatpush1.bf16.msra.mxu0 0
      %426 = vmatprep.subr.bf16.mxu0 0
      %427 = vmatpush1.bf16.msra.mxu0 0
      %428 = vmatprep.subr.bf16.mxu0 0
      %429 = vmatpush1.bf16.msra.mxu0 0
      %430 = vmatprep.subr.bf16.mxu0 0
      %431 = vmatpush1.bf16.msra.mxu0 0
      %432 = vmatprep.subr.bf16.mxu0 0
      %433 = vmatpush1.bf16.msra.mxu0 0
      %434 = vmatprep.subr.bf16.mxu0 0
      %435 = vmatpush1.bf16.msra.mxu0 0
      %436 = vmatprep.subr.bf16.mxu0 0
      %437 = vmatpush1.bf16.msra.mxu0 0
      %438 = vmatprep.subr.bf16.mxu0 0
      %439 = vmatpush1.bf16.msra.mxu0 0
      %440 = vmatprep.mubr.bf16.mxu0 0
      %441 = vmatmul.mubr.bf16.gmra.mrb[0].mxu0 %v358
      %v442 = vpop.f32.mrb[0].mxu0
      %v443 = vadd.f32 %v324, %v442
      %v444 = vpop.f32.mrb[0].mxu0
      %v445 = vpop.f32.mrb[0].mxu0
      %v446 = vadd.f32 %v327, %v445
      %v447 = vpop.f32.mrb[0].mxu0
      %448 = vmatprep.mubr.bf16.mxu0 0
      %449 = vmatmul.mubr.bf16.gmra.mrb[0].mxu0 %v233
      %v450 = vpop.f32.mrb[0].mxu0
      %v451 = vadd.f32 %v332, %v450
      %v452 = vpop.f32.mrb[0].mxu0
      %v453 = vpop.f32.mrb[0].mxu0
      %v454 = vadd.f32 %v335, %v453
      %v455 = vpop.f32.mrb[0].mxu0
      %456 = vmatprep.mubr.bf16.mxu0 0
      %457 = vmatmul.mubr.bf16.gmra.mrb[0].mxu0 %v234
      %v458 = vpop.f32.mrb[0].mxu0
      %v459 = vadd.f32 %v340, %v458
      %v460 = vpop.f32.mrb[0].mxu0
      %v461 = vpop.f32.mrb[0].mxu0
      %v462 = vadd.f32 %v343, %v461
      %v463 = vpop.f32.mrb[0].mxu0
      %464 = vmatprep.mubr.bf16.mxu0 0
      %465 = vmatmul.mubr.bf16.gmra.mrb[0].mxu0 %v235
      %v466 = vpop.f32.mrb[0].mxu0
      %v467 = vadd.f32 %v348, %v466
      %v468 = vpop.f32.mrb[0].mxu0
      %v469 = vpop.f32.mrb[0].mxu0
      %v470 = vadd.f32 %v351, %v469
      %v471 = vpop.f32.mrb[0].mxu0
      %472 = vdwg.mxu0
      %s473 = scalar_lea.vmem %s1, 384
      %v474 = vld [vmem:[%s473] sm:$0xf]
      %v475 = vld [vmem:[%s473 + $0x4] sm:$0xf]
      %v476 = vld [vmem:[%s473 + $0x8] sm:$0xf]
      %v477 = vld [vmem:[%s473 + $0xc] sm:$0xf]
      %v478 = vld [vmem:[%s473 + $0x10] sm:$0xf]
      %v479 = vld [vmem:[%s473 + $0x14] sm:$0xf]
      %v480 = vld [vmem:[%s473 + $0x18] sm:$0xf]
      %v481 = vld [vmem:[%s473 + $0x1c] sm:$0xf]
      %v482 = vld [vmem:[%s473 + $0x20] sm:$0xf]
      %v483 = vld [vmem:[%s473 + $0x24] sm:$0xf]
      %v484 = vld [vmem:[%s473 + $0x28] sm:$0xf]
      %v485 = vld [vmem:[%s473 + $0x2c] sm:$0xf]
      %v486 = vld [vmem:[%s473 + $0x30] sm:$0xf]
      %v487 = vld [vmem:[%s473 + $0x34] sm:$0xf]
      %v488 = vld [vmem:[%s473 + $0x38] sm:$0xf]
      %v489 = vld [vmem:[%s473 + $0x3c] sm:$0xf]
      %v492 = vunpack.c.l.b16 %v182
      %v493 = vunpack.c.l.b16 %v183
      %v494 = vpack.c.b16 %v493, %v492
      %v512 = vunpack.c.l.b16 %v474
      %v513 = vunpack.c.l.b16 %v475
      %v514 = vunpack.c.l.b16 %v476
      %v515 = vunpack.c.l.b16 %v477
      %v516 = vunpack.c.l.b16 %v478
      %v517 = vunpack.c.l.b16 %v479
      %v518 = vunpack.c.l.b16 %v480
      %v519 = vunpack.c.l.b16 %v481
      %v520 = vunpack.c.l.b16 %v482
      %v521 = vunpack.c.l.b16 %v483
      %v522 = vunpack.c.l.b16 %v484
      %v523 = vunpack.c.l.b16 %v485
      %v524 = vunpack.c.l.b16 %v486
      %v525 = vunpack.c.l.b16 %v487
      %v526 = vunpack.c.l.b16 %v488
      %v527 = vunpack.c.l.b16 %v489
      %v528 = vpack.c.b16 %v513, %v512
      %v529 = vpack.c.b16 %v515, %v514
      %v530 = vpack.c.b16 %v517, %v516
      %v531 = vpack.c.b16 %v519, %v518
      %v532 = vpack.c.b16 %v521, %v520
      %v533 = vpack.c.b16 %v523, %v522
      %v534 = vpack.c.b16 %v525, %v524
      %v535 = vpack.c.b16 %v527, %v526
      %544 = vmatprep.subr.bf16.mxu0 0
      %545 = vmatpush1.bf16.msra.mxu0 %v528
      %546 = vmatprep.subr.bf16.mxu0 0
      %547 = vmatpush1.bf16.msra.mxu0 %v529
      %548 = vmatprep.subr.bf16.mxu0 0
      %549 = vmatpush1.bf16.msra.mxu0 %v530
      %550 = vmatprep.subr.bf16.mxu0 0
      %551 = vmatpush1.bf16.msra.mxu0 %v531
      %552 = vmatprep.subr.bf16.mxu0 0
      %553 = vmatpush1.bf16.msra.mxu0 %v532
      %554 = vmatprep.subr.bf16.mxu0 0
      %555 = vmatpush1.bf16.msra.mxu0 %v533
      %556 = vmatprep.subr.bf16.mxu0 0
      %557 = vmatpush1.bf16.msra.mxu0 %v534
      %558 = vmatprep.subr.bf16.mxu0 0
      %559 = vmatpush1.bf16.msra.mxu0 %v535
      %560 = vmatprep.subr.bf16.mxu0 0
      %561 = vmatpush1.bf16.msra.mxu0 0
      %562 = vmatprep.subr.bf16.mxu0 0
      %563 = vmatpush1.bf16.msra.mxu0 0
      %564 = vmatprep.subr.bf16.mxu0 0
      %565 = vmatpush1.bf16.msra.mxu0 0
      %566 = vmatprep.subr.bf16.mxu0 0
      %567 = vmatpush1.bf16.msra.mxu0 0
      %568 = vmatprep.subr.bf16.mxu0 0
      %569 = vmatpush1.bf16.msra.mxu0 0
      %570 = vmatprep.subr.bf16.mxu0 0
      %571 = vmatpush1.bf16.msra.mxu0 0
      %572 = vmatprep.subr.bf16.mxu0 0
      %573 = vmatpush1.bf16.msra.mxu0 0
      %574 = vmatprep.subr.bf16.mxu0 0
      %575 = vmatpush1.bf16.msra.mxu0 0
      %576 = vmatprep.mubr.bf16.mxu0 0
      %577 = vmatmul.mubr.bf16.gmra.mrb[0].mxu0 %v234
      %v578 = vpop.f32.mrb[0].mxu0
      %v579 = vadd.f32 0.0, %v578
      %v580 = vpop.f32.mrb[0].mxu0
      %v581 = vpop.f32.mrb[0].mxu0
      %v582 = vadd.f32 0.0, %v581
      %v583 = vpop.f32.mrb[0].mxu0
      %584 = vmatprep.mubr.bf16.mxu0 0
      %585 = vmatmul.mubr.bf16.gmra.mrb[0].mxu0 %v235
      %v586 = vpop.f32.mrb[0].mxu0
      %v587 = vadd.f32 0.0, %v586
      %v588 = vpop.f32.mrb[0].mxu0
      %v589 = vpop.f32.mrb[0].mxu0
      %v590 = vadd.f32 0.0, %v589
      %v591 = vpop.f32.mrb[0].mxu0
      %592 = vmatprep.mubr.bf16.mxu0 0
      %593 = vmatmul.mubr.bf16.gmra.mrb[0].mxu0 %v236
      %v594 = vpop.f32.mrb[0].mxu0
      %v595 = vadd.f32 0.0, %v594
      %v596 = vpop.f32.mrb[0].mxu0
      %v597 = vpop.f32.mrb[0].mxu0
      %v598 = vadd.f32 0.0, %v597
      %v599 = vpop.f32.mrb[0].mxu0
      %600 = vmatprep.mubr.bf16.mxu0 0
      %601 = vmatmul.mubr.bf16.gmra.mrb[0].mxu0 %v494
      %v602 = vpop.f32.mrb[0].mxu0
      %v603 = vadd.f32 0.0, %v602
      %v604 = vpop.f32.mrb[0].mxu0
      %v605 = vpop.f32.mrb[0].mxu0
      %v606 = vadd.f32 0.0, %v605
      %v607 = vpop.f32.mrb[0].mxu0
      %608 = vdwg.mxu0
      %v609 = vadd.f32 %v443, %v579
      %v610 = vadd.f32 %v446, %v582
      %v611 = vadd.f32 %v451, %v587
      %v612 = vadd.f32 %v454, %v590
      %v613 = vadd.f32 %v459, %v595
      %v614 = vadd.f32 %v462, %v598
      %v615 = vadd.f32 %v467, %v603
      %v616 = vadd.f32 %v470, %v606
      %s617 = scalar_lea.vmem %s165, 48
      %v618 = vld [vmem:[%s617] sm:$0xf]
      %v619 = vld [vmem:[%s617 + $0x4] sm:$0xf]
      %v620 = vld [vmem:[%s617 + $0x8] sm:$0xf]
      %v621 = vld [vmem:[%s617 + $0xc] sm:$0xf]
      %v622 = vld [vmem:[%s617 + $0x10] sm:$0xf]
      %v623 = vld [vmem:[%s617 + $0x14] sm:$0xf]
      %v624 = vld [vmem:[%s617 + $0x18] sm:$0xf]
      %v625 = vld [vmem:[%s617 + $0x1c] sm:$0xf]
      %v626 = vld [vmem:[%s617 + $0x20] sm:$0xf]
      %v627 = vld [vmem:[%s617 + $0x24] sm:$0xf]
      %v628 = vld [vmem:[%s617 + $0x28] sm:$0xf]
      %v629 = vld [vmem:[%s617 + $0x2c] sm:$0xf]
      %s630 = scalar_lea.vmem %s1, 64
      %v631 = vld [vmem:[%s630] sm:$0xf]
      %v632 = vld [vmem:[%s630 + $0x4] sm:$0xf]
      %v633 = vld [vmem:[%s630 + $0x8] sm:$0xf]
      %v634 = vld [vmem:[%s630 + $0xc] sm:$0xf]
      %v635 = vld [vmem:[%s630 + $0x10] sm:$0xf]
      %v636 = vld [vmem:[%s630 + $0x14] sm:$0xf]
      %v637 = vld [vmem:[%s630 + $0x18] sm:$0xf]
      %v638 = vld [vmem:[%s630 + $0x1c] sm:$0xf]
      %v639 = vld [vmem:[%s630 + $0x20] sm:$0xf]
      %v640 = vld [vmem:[%s630 + $0x24] sm:$0xf]
      %v641 = vld [vmem:[%s630 + $0x28] sm:$0xf]
      %v642 = vld [vmem:[%s630 + $0x2c] sm:$0xf]
      %v643 = vld [vmem:[%s630 + $0x30] sm:$0xf]
      %v644 = vld [vmem:[%s630 + $0x34] sm:$0xf]
      %v645 = vld [vmem:[%s630 + $0x38] sm:$0xf]
      %v646 = vld [vmem:[%s630 + $0x3c] sm:$0xf]
      %v655 = vunpack.c.l.b16 %v618
      %v656 = vunpack.c.l.b16 %v619
      %v657 = vunpack.c.l.b16 %v620
      %v658 = vunpack.c.l.b16 %v621
      %v659 = vunpack.c.l.b16 %v622
      %v660 = vunpack.c.l.b16 %v623
      %v661 = vunpack.c.l.b16 %v624
      %v662 = vunpack.c.l.b16 %v625
      %v663 = vpack.c.b16 %v656, %v655
      %v664 = vpack.c.b16 %v658, %v657
      %v665 = vpack.c.b16 %v660, %v659
      %v666 = vpack.c.b16 %v662, %v661
      %v687 = vunpack.c.l.b16 %v631
      %v688 = vunpack.c.l.b16 %v632
      %v689 = vunpack.c.l.b16 %v633
      %v690 = vunpack.c.l.b16 %v634
      %v691 = vunpack.c.l.b16 %v635
      %v692 = vunpack.c.l.b16 %v636
      %v693 = vunpack.c.l.b16 %v637
      %v694 = vunpack.c.l.b16 %v638
      %v695 = vunpack.c.l.b16 %v639
      %v696 = vunpack.c.l.b16 %v640
      %v697 = vunpack.c.l.b16 %v641
      %v698 = vunpack.c.l.b16 %v642
      %v699 = vunpack.c.l.b16 %v643
      %v700 = vunpack.c.l.b16 %v644
      %v701 = vunpack.c.l.b16 %v645
      %v702 = vunpack.c.l.b16 %v646
      %v703 = vpack.c.b16 %v688, %v687
      %v704 = vpack.c.b16 %v690, %v689
      %v705 = vpack.c.b16 %v692, %v691
      %v706 = vpack.c.b16 %v694, %v693
      %v707 = vpack.c.b16 %v696, %v695
      %v708 = vpack.c.b16 %v698, %v697
      %v709 = vpack.c.b16 %v700, %v699
      %v710 = vpack.c.b16 %v702, %v701
      %719 = vmatprep.subr.bf16.mxu0 0
      %720 = vmatpush1.bf16.msra.mxu0 %v703
      %721 = vmatprep.subr.bf16.mxu0 0
      %722 = vmatpush1.bf16.msra.mxu0 %v704
      %723 = vmatprep.subr.bf16.mxu0 0
      %724 = vmatpush1.bf16.msra.mxu0 %v705
      %725 = vmatprep.subr.bf16.mxu0 0
      %726 = vmatpush1.bf16.msra.mxu0 %v706
      %727 = vmatprep.subr.bf16.mxu0 0
      %728 = vmatpush1.bf16.msra.mxu0 %v707
      %729 = vmatprep.subr.bf16.mxu0 0
      %730 = vmatpush1.bf16.msra.mxu0 %v708
      %731 = vmatprep.subr.bf16.mxu0 0
      %732 = vmatpush1.bf16.msra.mxu0 %v709
      %733 = vmatprep.subr.bf16.mxu0 0
      %734 = vmatpush1.bf16.msra.mxu0 %v710
      %735 = vmatprep.subr.bf16.mxu0 0
      %736 = vmatpush1.bf16.msra.mxu0 0
      %737 = vmatprep.subr.bf16.mxu0 0
      %738 = vmatpush1.bf16.msra.mxu0 0
      %739 = vmatprep.subr.bf16.mxu0 0
      %740 = vmatpush1.bf16.msra.mxu0 0
      %741 = vmatprep.subr.bf16.mxu0 0
      %742 = vmatpush1.bf16.msra.mxu0 0
      %743 = vmatprep.subr.bf16.mxu0 0
      %744 = vmatpush1.bf16.msra.mxu0 0
      %745 = vmatprep.subr.bf16.mxu0 0
      %746 = vmatpush1.bf16.msra.mxu0 0
      %747 = vmatprep.subr.bf16.mxu0 0
      %748 = vmatpush1.bf16.msra.mxu0 0
      %749 = vmatprep.subr.bf16.mxu0 0
      %750 = vmatpush1.bf16.msra.mxu0 0
      %751 = vmatprep.mubr.bf16.mxu0 0
      %752 = vmatmul.mubr.bf16.gmra.mrb[0].mxu0 %v663
      %v753 = vpop.f32.mrb[0].mxu0
      %v754 = vadd.f32 0.0, %v753
      %v755 = vpop.f32.mrb[0].mxu0
      %v756 = vpop.f32.mrb[0].mxu0
      %v757 = vadd.f32 0.0, %v756
      %v758 = vpop.f32.mrb[0].mxu0
      %759 = vmatprep.mubr.bf16.mxu0 0
      %760 = vmatmul.mubr.bf16.gmra.mrb[0].mxu0 %v664
      %v761 = vpop.f32.mrb[0].mxu0
      %v762 = vadd.f32 0.0, %v761
      %v763 = vpop.f32.mrb[0].mxu0
      %v764 = vpop.f32.mrb[0].mxu0
      %v765 = vadd.f32 0.0, %v764
      %v766 = vpop.f32.mrb[0].mxu0
      %767 = vmatprep.mubr.bf16.mxu0 0
      %768 = vmatmul.mubr.bf16.gmra.mrb[0].mxu0 %v665
      %v769 = vpop.f32.mrb[0].mxu0
      %v770 = vadd.f32 0.0, %v769
      %v771 = vpop.f32.mrb[0].mxu0
      %v772 = vpop.f32.mrb[0].mxu0
      %v773 = vadd.f32 0.0, %v772
      %v774 = vpop.f32.mrb[0].mxu0
      %775 = vmatprep.mubr.bf16.mxu0 0
      %776 = vmatmul.mubr.bf16.gmra.mrb[0].mxu0 %v666
      %v777 = vpop.f32.mrb[0].mxu0
      %v778 = vadd.f32 0.0, %v777
      %v779 = vpop.f32.mrb[0].mxu0
      %v780 = vpop.f32.mrb[0].mxu0
      %v781 = vadd.f32 0.0, %v780
      %v782 = vpop.f32.mrb[0].mxu0
      %783 = vdwg.mxu0
      %v784 = vadd.f32 %v609, %v754
      %v785 = vadd.f32 %v610, %v757
      %v786 = vadd.f32 %v611, %v762
      %v787 = vadd.f32 %v612, %v765
      %v788 = vadd.f32 %v613, %v770
      %v789 = vadd.f32 %v614, %v773
      %v790 = vadd.f32 %v615, %v778
      %v791 = vadd.f32 %v616, %v781
      %s792 = scalar_lea.vmem %s1, 256
      %v793 = vld [vmem:[%s792] sm:$0xf]
      %v794 = vld [vmem:[%s792 + $0x4] sm:$0xf]
      %v795 = vld [vmem:[%s792 + $0x8] sm:$0xf]
      %v796 = vld [vmem:[%s792 + $0xc] sm:$0xf]
      %v797 = vld [vmem:[%s792 + $0x10] sm:$0xf]
      %v798 = vld [vmem:[%s792 + $0x14] sm:$0xf]
      %v799 = vld [vmem:[%s792 + $0x18] sm:$0xf]
      %v800 = vld [vmem:[%s792 + $0x1c] sm:$0xf]
      %v801 = vld [vmem:[%s792 + $0x20] sm:$0xf]
      %v802 = vld [vmem:[%s792 + $0x24] sm:$0xf]
      %v803 = vld [vmem:[%s792 + $0x28] sm:$0xf]
      %v804 = vld [vmem:[%s792 + $0x2c] sm:$0xf]
      %v805 = vld [vmem:[%s792 + $0x30] sm:$0xf]
      %v806 = vld [vmem:[%s792 + $0x34] sm:$0xf]
      %v807 = vld [vmem:[%s792 + $0x38] sm:$0xf]
      %v808 = vld [vmem:[%s792 + $0x3c] sm:$0xf]
      %v811 = vunpack.c.l.b16 %v626
      %v812 = vunpack.c.l.b16 %v627
      %v813 = vpack.c.b16 %v812, %v811
      %v831 = vunpack.c.l.b16 %v793
      %v832 = vunpack.c.l.b16 %v794
      %v833 = vunpack.c.l.b16 %v795
      %v834 = vunpack.c.l.b16 %v796
      %v835 = vunpack.c.l.b16 %v797
      %v836 = vunpack.c.l.b16 %v798
      %v837 = vunpack.c.l.b16 %v799
      %v838 = vunpack.c.l.b16 %v800
      %v839 = vunpack.c.l.b16 %v801
      %v840 = vunpack.c.l.b16 %v802
      %v841 = vunpack.c.l.b16 %v803
      %v842 = vunpack.c.l.b16 %v804
      %v843 = vunpack.c.l.b16 %v805
      %v844 = vunpack.c.l.b16 %v806
      %v845 = vunpack.c.l.b16 %v807
      %v846 = vunpack.c.l.b16 %v808
      %v847 = vpack.c.b16 %v832, %v831
      %v848 = vpack.c.b16 %v834, %v833
      %v849 = vpack.c.b16 %v836, %v835
      %v850 = vpack.c.b16 %v838, %v837
      %v851 = vpack.c.b16 %v840, %v839
      %v852 = vpack.c.b16 %v842, %v841
      %v853 = vpack.c.b16 %v844, %v843
      %v854 = vpack.c.b16 %v846, %v845
      %863 = vmatprep.subr.bf16.mxu0 0
      %864 = vmatpush1.bf16.msra.mxu0 %v847
      %865 = vmatprep.subr.bf16.mxu0 0
      %866 = vmatpush1.bf16.msra.mxu0 %v848
      %867 = vmatprep.subr.bf16.mxu0 0
      %868 = vmatpush1.bf16.msra.mxu0 %v849
      %869 = vmatprep.subr.bf16.mxu0 0
      %870 = vmatpush1.bf16.msra.mxu0 %v850
      %871 = vmatprep.subr.bf16.mxu0 0
      %872 = vmatpush1.bf16.msra.mxu0 %v851
      %873 = vmatprep.subr.bf16.mxu0 0
      %874 = vmatpush1.bf16.msra.mxu0 %v852
      %875 = vmatprep.subr.bf16.mxu0 0
      %876 = vmatpush1.bf16.msra.mxu0 %v853
      %877 = vmatprep.subr.bf16.mxu0 0
      %878 = vmatpush1.bf16.msra.mxu0 %v854
      %879 = vmatprep.subr.bf16.mxu0 0
      %880 = vmatpush1.bf16.msra.mxu0 0
      %881 = vmatprep.subr.bf16.mxu0 0
      %882 = vmatpush1.bf16.msra.mxu0 0
      %883 = vmatprep.subr.bf16.mxu0 0
      %884 = vmatpush1.bf16.msra.mxu0 0
      %885 = vmatprep.subr.bf16.mxu0 0
      %886 = vmatpush1.bf16.msra.mxu0 0
      %887 = vmatprep.subr.bf16.mxu0 0
      %888 = vmatpush1.bf16.msra.mxu0 0
      %889 = vmatprep.subr.bf16.mxu0 0
      %890 = vmatpush1.bf16.msra.mxu0 0
      %891 = vmatprep.subr.bf16.mxu0 0
      %892 = vmatpush1.bf16.msra.mxu0 0
      %893 = vmatprep.subr.bf16.mxu0 0
      %894 = vmatpush1.bf16.msra.mxu0 0
      %895 = vmatprep.mubr.bf16.mxu0 0
      %896 = vmatmul.mubr.bf16.gmra.mrb[0].mxu0 %v664
      %v897 = vpop.f32.mrb[0].mxu0
      %v898 = vadd.f32 0.0, %v897
      %v899 = vpop.f32.mrb[0].mxu0
      %v900 = vpop.f32.mrb[0].mxu0
      %v901 = vadd.f32 0.0, %v900
      %v902 = vpop.f32.mrb[0].mxu0
      %903 = vmatprep.mubr.bf16.mxu0 0
      %904 = vmatmul.mubr.bf16.gmra.mrb[0].mxu0 %v665
      %v905 = vpop.f32.mrb[0].mxu0
      %v906 = vadd.f32 0.0, %v905
      %v907 = vpop.f32.mrb[0].mxu0
      %v908 = vpop.f32.mrb[0].mxu0
      %v909 = vadd.f32 0.0, %v908
      %v910 = vpop.f32.mrb[0].mxu0
      %911 = vmatprep.mubr.bf16.mxu0 0
      %912 = vmatmul.mubr.bf16.gmra.mrb[0].mxu0 %v666
      %v913 = vpop.f32.mrb[0].mxu0
      %v914 = vadd.f32 0.0, %v913
      %v915 = vpop.f32.mrb[0].mxu0
      %v916 = vpop.f32.mrb[0].mxu0
      %v917 = vadd.f32 0.0, %v916
      %v918 = vpop.f32.mrb[0].mxu0
      %919 = vmatprep.mubr.bf16.mxu0 0
      %920 = vmatmul.mubr.bf16.gmra.mrb[0].mxu0 %v813
      %v921 = vpop.f32.mrb[0].mxu0
      %v922 = vadd.f32 0.0, %v921
      %v923 = vpop.f32.mrb[0].mxu0
      %v924 = vpop.f32.mrb[0].mxu0
      %v925 = vadd.f32 0.0, %v924
      %v926 = vpop.f32.mrb[0].mxu0
      %927 = vdwg.mxu0
      %v928 = vadd.f32 %v784, %v898
      %v929 = vadd.f32 %v785, %v901
      %v930 = vadd.f32 %v786, %v906
      %v931 = vadd.f32 %v787, %v909
      %v932 = vadd.f32 %v788, %v914
      %v933 = vadd.f32 %v789, %v917
      %v934 = vadd.f32 %v790, %v922
      %v935 = vadd.f32 %v791, %v925
      %s936 = scalar_lea.vmem %s1, 448
      %v937 = vld [vmem:[%s936] sm:$0xf]
      %v938 = vld [vmem:[%s936 + $0x4] sm:$0xf]
      %v939 = vld [vmem:[%s936 + $0x8] sm:$0xf]
      %v940 = vld [vmem:[%s936 + $0xc] sm:$0xf]
      %v941 = vld [vmem:[%s936 + $0x10] sm:$0xf]
      %v942 = vld [vmem:[%s936 + $0x14] sm:$0xf]
      %v943 = vld [vmem:[%s936 + $0x18] sm:$0xf]
      %v944 = vld [vmem:[%s936 + $0x1c] sm:$0xf]
      %v945 = vld [vmem:[%s936 + $0x20] sm:$0xf]
      %v946 = vld [vmem:[%s936 + $0x24] sm:$0xf]
      %v947 = vld [vmem:[%s936 + $0x28] sm:$0xf]
      %v948 = vld [vmem:[%s936 + $0x2c] sm:$0xf]
      %v949 = vld [vmem:[%s936 + $0x30] sm:$0xf]
      %v950 = vld [vmem:[%s936 + $0x34] sm:$0xf]
      %v951 = vld [vmem:[%s936 + $0x38] sm:$0xf]
      %v952 = vld [vmem:[%s936 + $0x3c] sm:$0xf]
      %v955 = vunpack.c.l.b16 %v628
      %v956 = vunpack.c.l.b16 %v629
      %v957 = vpack.c.b16 %v956, %v955
      %v975 = vunpack.c.l.b16 %v937
      %v976 = vunpack.c.l.b16 %v938
      %v977 = vunpack.c.l.b16 %v939
      %v978 = vunpack.c.l.b16 %v940
      %v979 = vunpack.c.l.b16 %v941
      %v980 = vunpack.c.l.b16 %v942
      %v981 = vunpack.c.l.b16 %v943
      %v982 = vunpack.c.l.b16 %v944
      %v983 = vunpack.c.l.b16 %v945
      %v984 = vunpack.c.l.b16 %v946
      %v985 = vunpack.c.l.b16 %v947
      %v986 = vunpack.c.l.b16 %v948
      %v987 = vunpack.c.l.b16 %v949
      %v988 = vunpack.c.l.b16 %v950
      %v989 = vunpack.c.l.b16 %v951
      %v990 = vunpack.c.l.b16 %v952
      %v991 = vpack.c.b16 %v976, %v975
      %v992 = vpack.c.b16 %v978, %v977
      %v993 = vpack.c.b16 %v980, %v979
      %v994 = vpack.c.b16 %v982, %v981
      %v995 = vpack.c.b16 %v984, %v983
      %v996 = vpack.c.b16 %v986, %v985
      %v997 = vpack.c.b16 %v988, %v987
      %v998 = vpack.c.b16 %v990, %v989
      %1007 = vmatprep.subr.bf16.mxu0 0
      %1008 = vmatpush1.bf16.msra.mxu0 %v991
      %1009 = vmatprep.subr.bf16.mxu0 0
      %1010 = vmatpush1.bf16.msra.mxu0 %v992
      %1011 = vmatprep.subr.bf16.mxu0 0
      %1012 = vmatpush1.bf16.msra.mxu0 %v993
      %1013 = vmatprep.subr.bf16.mxu0 0
      %1014 = vmatpush1.bf16.msra.mxu0 %v994
      %1015 = vmatprep.subr.bf16.mxu0 0
      %1016 = vmatpush1.bf16.msra.mxu0 %v995
      %1017 = vmatprep.subr.bf16.mxu0 0
      %1018 = vmatpush1.bf16.msra.mxu0 %v996
      %1019 = vmatprep.subr.bf16.mxu0 0
      %1020 = vmatpush1.bf16.msra.mxu0 %v997
      %1021 = vmatprep.subr.bf16.mxu0 0
      %1022 = vmatpush1.bf16.msra.mxu0 %v998
      %1023 = vmatprep.subr.bf16.mxu0 0
      %1024 = vmatpush1.bf16.msra.mxu0 0
      %1025 = vmatprep.subr.bf16.mxu0 0
      %1026 = vmatpush1.bf16.msra.mxu0 0
      %1027 = vmatprep.subr.bf16.mxu0 0
      %1028 = vmatpush1.bf16.msra.mxu0 0
      %1029 = vmatprep.subr.bf16.mxu0 0
      %1030 = vmatpush1.bf16.msra.mxu0 0
      %1031 = vmatprep.subr.bf16.mxu0 0
      %1032 = vmatpush1.bf16.msra.mxu0 0
      %1033 = vmatprep.subr.bf16.mxu0 0
      %1034 = vmatpush1.bf16.msra.mxu0 0
      %1035 = vmatprep.subr.bf16.mxu0 0
      %1036 = vmatpush1.bf16.msra.mxu0 0
      %1037 = vmatprep.subr.bf16.mxu0 0
      %1038 = vmatpush1.bf16.msra.mxu0 0
      %1039 = vmatprep.mubr.bf16.mxu0 0
      %1040 = vmatmul.mubr.bf16.gmra.mrb[0].mxu0 %v665
      %v1041 = vpop.f32.mrb[0].mxu0
      %v1042 = vadd.f32 0.0, %v1041
      %v1043 = vpop.f32.mrb[0].mxu0
      %v1044 = vpop.f32.mrb[0].mxu0
      %v1045 = vadd.f32 0.0, %v1044
      %v1046 = vpop.f32.mrb[0].mxu0
      %1047 = vmatprep.mubr.bf16.mxu0 0
      %1048 = vmatmul.mubr.bf16.gmra.mrb[0].mxu0 %v666
      %v1049 = vpop.f32.mrb[0].mxu0
      %v1050 = vadd.f32 0.0, %v1049
      %v1051 = vpop.f32.mrb[0].mxu0
      %v1052 = vpop.f32.mrb[0].mxu0
      %v1053 = vadd.f32 0.0, %v1052
      %v1054 = vpop.f32.mrb[0].mxu0
      %1055 = vmatprep.mubr.bf16.mxu0 0
      %1056 = vmatmul.mubr.bf16.gmra.mrb[0].mxu0 %v813
      %v1057 = vpop.f32.mrb[0].mxu0
      %v1058 = vadd.f32 0.0, %v1057
      %v1059 = vpop.f32.mrb[0].mxu0
      %v1060 = vpop.f32.mrb[0].mxu0
      %v1061 = vadd.f32 0.0, %v1060
      %v1062 = vpop.f32.mrb[0].mxu0
      %1063 = vmatprep.mubr.bf16.mxu0 0
      %1064 = vmatmul.mubr.bf16.gmra.mrb[0].mxu0 %v957
      %v1065 = vpop.f32.mrb[0].mxu0
      %v1066 = vadd.f32 0.0, %v1065
      %v1067 = vpop.f32.mrb[0].mxu0
      %v1068 = vpop.f32.mrb[0].mxu0
      %v1069 = vadd.f32 0.0, %v1068
      %v1070 = vpop.f32.mrb[0].mxu0
      %1071 = vdwg.mxu0
      %v1072 = vadd.f32 %v928, %v1042
      %v1073 = vadd.f32 %v929, %v1045
      %v1074 = vadd.f32 %v930, %v1050
      %v1075 = vadd.f32 %v931, %v1053
      %v1076 = vadd.f32 %v932, %v1058
      %v1077 = vadd.f32 %v933, %v1061
      %v1078 = vadd.f32 %v934, %v1066
      %v1079 = vadd.f32 %v935, %v1069
      %s1080 = scalar_lea.vmem %s165, 96
      %v1081 = vld [vmem:[%s1080] sm:$0xf]
      %v1082 = vld [vmem:[%s1080 + $0x4] sm:$0xf]
      %v1083 = vld [vmem:[%s1080 + $0x8] sm:$0xf]
      %v1084 = vld [vmem:[%s1080 + $0xc] sm:$0xf]
      %v1085 = vld [vmem:[%s1080 + $0x10] sm:$0xf]
      %v1086 = vld [vmem:[%s1080 + $0x14] sm:$0xf]
      %v1087 = vld [vmem:[%s1080 + $0x18] sm:$0xf]
      %v1088 = vld [vmem:[%s1080 + $0x1c] sm:$0xf]
      %v1089 = vld [vmem:[%s1080 + $0x20] sm:$0xf]
      %v1090 = vld [vmem:[%s1080 + $0x24] sm:$0xf]
      %v1091 = vld [vmem:[%s1080 + $0x28] sm:$0xf]
      %v1092 = vld [vmem:[%s1080 + $0x2c] sm:$0xf]
      %s1093 = scalar_lea.vmem %s1, 128
      %v1094 = vld [vmem:[%s1093] sm:$0xf]
      %v1095 = vld [vmem:[%s1093 + $0x4] sm:$0xf]
      %v1096 = vld [vmem:[%s1093 + $0x8] sm:$0xf]
      %v1097 = vld [vmem:[%s1093 + $0xc] sm:$0xf]
      %v1098 = vld [vmem:[%s1093 + $0x10] sm:$0xf]
      %v1099 = vld [vmem:[%s1093 + $0x14] sm:$0xf]
      %v1100 = vld [vmem:[%s1093 + $0x18] sm:$0xf]
      %v1101 = vld [vmem:[%s1093 + $0x1c] sm:$0xf]
      %v1102 = vld [vmem:[%s1093 + $0x20] sm:$0xf]
      %v1103 = vld [vmem:[%s1093 + $0x24] sm:$0xf]
      %v1104 = vld [vmem:[%s1093 + $0x28] sm:$0xf]
      %v1105 = vld [vmem:[%s1093 + $0x2c] sm:$0xf]
      %v1106 = vld [vmem:[%s1093 + $0x30] sm:$0xf]
      %v1107 = vld [vmem:[%s1093 + $0x34] sm:$0xf]
      %v1108 = vld [vmem:[%s1093 + $0x38] sm:$0xf]
      %v1109 = vld [vmem:[%s1093 + $0x3c] sm:$0xf]
      %v1118 = vunpack.c.l.b16 %v1081
      %v1119 = vunpack.c.l.b16 %v1082
      %v1120 = vunpack.c.l.b16 %v1083
      %v1121 = vunpack.c.l.b16 %v1084
      %v1122 = vunpack.c.l.b16 %v1085
      %v1123 = vunpack.c.l.b16 %v1086
      %v1124 = vunpack.c.l.b16 %v1087
      %v1125 = vunpack.c.l.b16 %v1088
      %v1126 = vpack.c.b16 %v1119, %v1118
      %v1127 = vpack.c.b16 %v1121, %v1120
      %v1128 = vpack.c.b16 %v1123, %v1122
      %v1129 = vpack.c.b16 %v1125, %v1124
      %v1150 = vunpack.c.l.b16 %v1094
      %v1151 = vunpack.c.l.b16 %v1095
      %v1152 = vunpack.c.l.b16 %v1096
      %v1153 = vunpack.c.l.b16 %v1097
      %v1154 = vunpack.c.l.b16 %v1098
      %v1155 = vunpack.c.l.b16 %v1099
      %v1156 = vunpack.c.l.b16 %v1100
      %v1157 = vunpack.c.l.b16 %v1101
      %v1158 = vunpack.c.l.b16 %v1102
      %v1159 = vunpack.c.l.b16 %v1103
      %v1160 = vunpack.c.l.b16 %v1104
      %v1161 = vunpack.c.l.b16 %v1105
      %v1162 = vunpack.c.l.b16 %v1106
      %v1163 = vunpack.c.l.b16 %v1107
      %v1164 = vunpack.c.l.b16 %v1108
      %v1165 = vunpack.c.l.b16 %v1109
      %v1166 = vpack.c.b16 %v1151, %v1150
      %v1167 = vpack.c.b16 %v1153, %v1152
      %v1168 = vpack.c.b16 %v1155, %v1154
      %v1169 = vpack.c.b16 %v1157, %v1156
      %v1170 = vpack.c.b16 %v1159, %v1158
      %v1171 = vpack.c.b16 %v1161, %v1160
      %v1172 = vpack.c.b16 %v1163, %v1162
      %v1173 = vpack.c.b16 %v1165, %v1164
      %1182 = vmatprep.subr.bf16.mxu0 0
      %1183 = vmatpush1.bf16.msra.mxu0 %v1166
      %1184 = vmatprep.subr.bf16.mxu0 0
      %1185 = vmatpush1.bf16.msra.mxu0 %v1167
      %1186 = vmatprep.subr.bf16.mxu0 0
      %1187 = vmatpush1.bf16.msra.mxu0 %v1168
      %1188 = vmatprep.subr.bf16.mxu0 0
      %1189 = vmatpush1.bf16.msra.mxu0 %v1169
      %1190 = vmatprep.subr.bf16.mxu0 0
      %1191 = vmatpush1.bf16.msra.mxu0 %v1170
      %1192 = vmatprep.subr.bf16.mxu0 0
      %1193 = vmatpush1.bf16.msra.mxu0 %v1171
      %1194 = vmatprep.subr.bf16.mxu0 0
      %1195 = vmatpush1.bf16.msra.mxu0 %v1172
      %1196 = vmatprep.subr.bf16.mxu0 0
      %1197 = vmatpush1.bf16.msra.mxu0 %v1173
      %1198 = vmatprep.subr.bf16.mxu0 0
      %1199 = vmatpush1.bf16.msra.mxu0 0
      %1200 = vmatprep.subr.bf16.mxu0 0
      %1201 = vmatpush1.bf16.msra.mxu0 0
      %1202 = vmatprep.subr.bf16.mxu0 0
      %1203 = vmatpush1.bf16.msra.mxu0 0
      %1204 = vmatprep.subr.bf16.mxu0 0
      %1205 = vmatpush1.bf16.msra.mxu0 0
      %1206 = vmatprep.subr.bf16.mxu0 0
      %1207 = vmatpush1.bf16.msra.mxu0 0
      %1208 = vmatprep.subr.bf16.mxu0 0
      %1209 = vmatpush1.bf16.msra.mxu0 0
      %1210 = vmatprep.subr.bf16.mxu0 0
      %1211 = vmatpush1.bf16.msra.mxu0 0
      %1212 = vmatprep.subr.bf16.mxu0 0
      %1213 = vmatpush1.bf16.msra.mxu0 0
      %1214 = vmatprep.mubr.bf16.mxu0 0
      %1215 = vmatmul.mubr.bf16.gmra.mrb[0].mxu0 %v1126
      %v1216 = vpop.f32.mrb[0].mxu0
      %v1217 = vadd.f32 0.0, %v1216
      %v1218 = vpop.f32.mrb[0].mxu0
      %v1219 = vpop.f32.mrb[0].mxu0
      %v1220 = vadd.f32 0.0, %v1219
      %v1221 = vpop.f32.mrb[0].mxu0
      %1222 = vmatprep.mubr.bf16.mxu0 0
      %1223 = vmatmul.mubr.bf16.gmra.mrb[0].mxu0 %v1127
      %v1224 = vpop.f32.mrb[0].mxu0
      %v1225 = vadd.f32 0.0, %v1224
      %v1226 = vpop.f32.mrb[0].mxu0
      %v1227 = vpop.f32.mrb[0].mxu0
      %v1228 = vadd.f32 0.0, %v1227
      %v1229 = vpop.f32.mrb[0].mxu0
      %1230 = vmatprep.mubr.bf16.mxu0 0
      %1231 = vmatmul.mubr.bf16.gmra.mrb[0].mxu0 %v1128
      %v1232 = vpop.f32.mrb[0].mxu0
      %v1233 = vadd.f32 0.0, %v1232
      %v1234 = vpop.f32.mrb[0].mxu0
      %v1235 = vpop.f32.mrb[0].mxu0
      %v1236 = vadd.f32 0.0, %v1235
      %v1237 = vpop.f32.mrb[0].mxu0
      %1238 = vmatprep.mubr.bf16.mxu0 0
      %1239 = vmatmul.mubr.bf16.gmra.mrb[0].mxu0 %v1129
      %v1240 = vpop.f32.mrb[0].mxu0
      %v1241 = vadd.f32 0.0, %v1240
      %v1242 = vpop.f32.mrb[0].mxu0
      %v1243 = vpop.f32.mrb[0].mxu0
      %v1244 = vadd.f32 0.0, %v1243
      %v1245 = vpop.f32.mrb[0].mxu0
      %1246 = vdwg.mxu0
      %v1247 = vadd.f32 %v1072, %v1217
      %v1248 = vadd.f32 %v1073, %v1220
      %v1249 = vadd.f32 %v1074, %v1225
      %v1250 = vadd.f32 %v1075, %v1228
      %v1251 = vadd.f32 %v1076, %v1233
      %v1252 = vadd.f32 %v1077, %v1236
      %v1253 = vadd.f32 %v1078, %v1241
      %v1254 = vadd.f32 %v1079, %v1244
      %s1255 = scalar_lea.vmem %s1, 320
      %v1256 = vld [vmem:[%s1255] sm:$0xf]
      %v1257 = vld [vmem:[%s1255 + $0x4] sm:$0xf]
      %v1258 = vld [vmem:[%s1255 + $0x8] sm:$0xf]
      %v1259 = vld [vmem:[%s1255 + $0xc] sm:$0xf]
      %v1260 = vld [vmem:[%s1255 + $0x10] sm:$0xf]
      %v1261 = vld [vmem:[%s1255 + $0x14] sm:$0xf]
      %v1262 = vld [vmem:[%s1255 + $0x18] sm:$0xf]
      %v1263 = vld [vmem:[%s1255 + $0x1c] sm:$0xf]
      %v1264 = vld [vmem:[%s1255 + $0x20] sm:$0xf]
      %v1265 = vld [vmem:[%s1255 + $0x24] sm:$0xf]
      %v1266 = vld [vmem:[%s1255 + $0x28] sm:$0xf]
      %v1267 = vld [vmem:[%s1255 + $0x2c] sm:$0xf]
      %v1268 = vld [vmem:[%s1255 + $0x30] sm:$0xf]
      %v1269 = vld [vmem:[%s1255 + $0x34] sm:$0xf]
      %v1270 = vld [vmem:[%s1255 + $0x38] sm:$0xf]
      %v1271 = vld [vmem:[%s1255 + $0x3c] sm:$0xf]
      %v1274 = vunpack.c.l.b16 %v1089
      %v1275 = vunpack.c.l.b16 %v1090
      %v1276 = vpack.c.b16 %v1275, %v1274
      %v1294 = vunpack.c.l.b16 %v1256
      %v1295 = vunpack.c.l.b16 %v1257
      %v1296 = vunpack.c.l.b16 %v1258
      %v1297 = vunpack.c.l.b16 %v1259
      %v1298 = vunpack.c.l.b16 %v1260
      %v1299 = vunpack.c.l.b16 %v1261
      %v1300 = vunpack.c.l.b16 %v1262
      %v1301 = vunpack.c.l.b16 %v1263
      %v1302 = vunpack.c.l.b16 %v1264
      %v1303 = vunpack.c.l.b16 %v1265
      %v1304 = vunpack.c.l.b16 %v1266
      %v1305 = vunpack.c.l.b16 %v1267
      %v1306 = vunpack.c.l.b16 %v1268
      %v1307 = vunpack.c.l.b16 %v1269
      %v1308 = vunpack.c.l.b16 %v1270
      %v1309 = vunpack.c.l.b16 %v1271
      %v1310 = vpack.c.b16 %v1295, %v1294
      %v1311 = vpack.c.b16 %v1297, %v1296
      %v1312 = vpack.c.b16 %v1299, %v1298
      %v1313 = vpack.c.b16 %v1301, %v1300
      %v1314 = vpack.c.b16 %v1303, %v1302
      %v1315 = vpack.c.b16 %v1305, %v1304
      %v1316 = vpack.c.b16 %v1307, %v1306
      %v1317 = vpack.c.b16 %v1309, %v1308
      %1326 = vmatprep.subr.bf16.mxu0 0
      %1327 = vmatpush1.bf16.msra.mxu0 %v1310
      %1328 = vmatprep.subr.bf16.mxu0 0
      %1329 = vmatpush1.bf16.msra.mxu0 %v1311
      %1330 = vmatprep.subr.bf16.mxu0 0
      %1331 = vmatpush1.bf16.msra.mxu0 %v1312
      %1332 = vmatprep.subr.bf16.mxu0 0
      %1333 = vmatpush1.bf16.msra.mxu0 %v1313
      %1334 = vmatprep.subr.bf16.mxu0 0
      %1335 = vmatpush1.bf16.msra.mxu0 %v1314
      %1336 = vmatprep.subr.bf16.mxu0 0
      %1337 = vmatpush1.bf16.msra.mxu0 %v1315
      %1338 = vmatprep.subr.bf16.mxu0 0
      %1339 = vmatpush1.bf16.msra.mxu0 %v1316
      %1340 = vmatprep.subr.bf16.mxu0 0
      %1341 = vmatpush1.bf16.msra.mxu0 %v1317
      %1342 = vmatprep.subr.bf16.mxu0 0
      %1343 = vmatpush1.bf16.msra.mxu0 0
      %1344 = vmatprep.subr.bf16.mxu0 0
      %1345 = vmatpush1.bf16.msra.mxu0 0
      %1346 = vmatprep.subr.bf16.mxu0 0
      %1347 = vmatpush1.bf16.msra.mxu0 0
      %1348 = vmatprep.subr.bf16.mxu0 0
      %1349 = vmatpush1.bf16.msra.mxu0 0
      %1350 = vmatprep.subr.bf16.mxu0 0
      %1351 = vmatpush1.bf16.msra.mxu0 0
      %1352 = vmatprep.subr.bf16.mxu0 0
      %1353 = vmatpush1.bf16.msra.mxu0 0
      %1354 = vmatprep.subr.bf16.mxu0 0
      %1355 = vmatpush1.bf16.msra.mxu0 0
      %1356 = vmatprep.subr.bf16.mxu0 0
      %1357 = vmatpush1.bf16.msra.mxu0 0
      %1358 = vmatprep.mubr.bf16.mxu0 0
      %1359 = vmatmul.mubr.bf16.gmra.mrb[0].mxu0 %v1127
      %v1360 = vpop.f32.mrb[0].mxu0
      %v1361 = vadd.f32 0.0, %v1360
      %v1362 = vpop.f32.mrb[0].mxu0
      %v1363 = vpop.f32.mrb[0].mxu0
      %v1364 = vadd.f32 0.0, %v1363
      %v1365 = vpop.f32.mrb[0].mxu0
      %1366 = vmatprep.mubr.bf16.mxu0 0
      %1367 = vmatmul.mubr.bf16.gmra.mrb[0].mxu0 %v1128
      %v1368 = vpop.f32.mrb[0].mxu0
      %v1369 = vadd.f32 0.0, %v1368
      %v1370 = vpop.f32.mrb[0].mxu0
      %v1371 = vpop.f32.mrb[0].mxu0
      %v1372 = vadd.f32 0.0, %v1371
      %v1373 = vpop.f32.mrb[0].mxu0
      %1374 = vmatprep.mubr.bf16.mxu0 0
      %1375 = vmatmul.mubr.bf16.gmra.mrb[0].mxu0 %v1129
      %v1376 = vpop.f32.mrb[0].mxu0
      %v1377 = vadd.f32 0.0, %v1376
      %v1378 = vpop.f32.mrb[0].mxu0
      %v1379 = vpop.f32.mrb[0].mxu0
      %v1380 = vadd.f32 0.0, %v1379
      %v1381 = vpop.f32.mrb[0].mxu0
      %1382 = vmatprep.mubr.bf16.mxu0 0
      %1383 = vmatmul.mubr.bf16.gmra.mrb[0].mxu0 %v1276
      %v1384 = vpop.f32.mrb[0].mxu0
      %v1385 = vadd.f32 0.0, %v1384
      %v1386 = vpop.f32.mrb[0].mxu0
      %v1387 = vpop.f32.mrb[0].mxu0
      %v1388 = vadd.f32 0.0, %v1387
      %v1389 = vpop.f32.mrb[0].mxu0
      %1390 = vdwg.mxu0
      %v1391 = vadd.f32 %v1247, %v1361
      %v1392 = vadd.f32 %v1248, %v1364
      %v1393 = vadd.f32 %v1249, %v1369
      %v1394 = vadd.f32 %v1250, %v1372
      %v1395 = vadd.f32 %v1251, %v1377
      %v1396 = vadd.f32 %v1252, %v1380
      %v1397 = vadd.f32 %v1253, %v1385
      %v1398 = vadd.f32 %v1254, %v1388
      %s1399 = scalar_lea.vmem %s1, 512
      %v1400 = vld [vmem:[%s1399] sm:$0xf]
      %v1401 = vld [vmem:[%s1399 + $0x4] sm:$0xf]
      %v1402 = vld [vmem:[%s1399 + $0x8] sm:$0xf]
      %v1403 = vld [vmem:[%s1399 + $0xc] sm:$0xf]
      %v1404 = vld [vmem:[%s1399 + $0x10] sm:$0xf]
      %v1405 = vld [vmem:[%s1399 + $0x14] sm:$0xf]
      %v1406 = vld [vmem:[%s1399 + $0x18] sm:$0xf]
      %v1407 = vld [vmem:[%s1399 + $0x1c] sm:$0xf]
      %v1408 = vld [vmem:[%s1399 + $0x20] sm:$0xf]
      %v1409 = vld [vmem:[%s1399 + $0x24] sm:$0xf]
      %v1410 = vld [vmem:[%s1399 + $0x28] sm:$0xf]
      %v1411 = vld [vmem:[%s1399 + $0x2c] sm:$0xf]
      %v1412 = vld [vmem:[%s1399 + $0x30] sm:$0xf]
      %v1413 = vld [vmem:[%s1399 + $0x34] sm:$0xf]
      %v1414 = vld [vmem:[%s1399 + $0x38] sm:$0xf]
      %v1415 = vld [vmem:[%s1399 + $0x3c] sm:$0xf]
      %v1418 = vunpack.c.l.b16 %v1091
      %v1419 = vunpack.c.l.b16 %v1092
      %v1420 = vpack.c.b16 %v1419, %v1418
      %v1438 = vunpack.c.l.b16 %v1400
      %v1439 = vunpack.c.l.b16 %v1401
      %v1440 = vunpack.c.l.b16 %v1402
      %v1441 = vunpack.c.l.b16 %v1403
      %v1442 = vunpack.c.l.b16 %v1404
      %v1443 = vunpack.c.l.b16 %v1405
      %v1444 = vunpack.c.l.b16 %v1406
      %v1445 = vunpack.c.l.b16 %v1407
      %v1446 = vunpack.c.l.b16 %v1408
      %v1447 = vunpack.c.l.b16 %v1409
      %v1448 = vunpack.c.l.b16 %v1410
      %v1449 = vunpack.c.l.b16 %v1411
      %v1450 = vunpack.c.l.b16 %v1412
      %v1451 = vunpack.c.l.b16 %v1413
      %v1452 = vunpack.c.l.b16 %v1414
      %v1453 = vunpack.c.l.b16 %v1415
      %v1454 = vpack.c.b16 %v1439, %v1438
      %v1455 = vpack.c.b16 %v1441, %v1440
      %v1456 = vpack.c.b16 %v1443, %v1442
      %v1457 = vpack.c.b16 %v1445, %v1444
      %v1458 = vpack.c.b16 %v1447, %v1446
      %v1459 = vpack.c.b16 %v1449, %v1448
      %v1460 = vpack.c.b16 %v1451, %v1450
      %v1461 = vpack.c.b16 %v1453, %v1452
      %1470 = vmatprep.subr.bf16.mxu0 0
      %1471 = vmatpush1.bf16.msra.mxu0 %v1454
      %1472 = vmatprep.subr.bf16.mxu0 0
      %1473 = vmatpush1.bf16.msra.mxu0 %v1455
      %1474 = vmatprep.subr.bf16.mxu0 0
      %1475 = vmatpush1.bf16.msra.mxu0 %v1456
      %1476 = vmatprep.subr.bf16.mxu0 0
      %1477 = vmatpush1.bf16.msra.mxu0 %v1457
      %1478 = vmatprep.subr.bf16.mxu0 0
      %1479 = vmatpush1.bf16.msra.mxu0 %v1458
      %1480 = vmatprep.subr.bf16.mxu0 0
      %1481 = vmatpush1.bf16.msra.mxu0 %v1459
      %1482 = vmatprep.subr.bf16.mxu0 0
      %1483 = vmatpush1.bf16.msra.mxu0 %v1460
      %1484 = vmatprep.subr.bf16.mxu0 0
      %1485 = vmatpush1.bf16.msra.mxu0 %v1461
      %1486 = vmatprep.subr.bf16.mxu0 0
      %1487 = vmatpush1.bf16.msra.mxu0 0
      %1488 = vmatprep.subr.bf16.mxu0 0
      %1489 = vmatpush1.bf16.msra.mxu0 0
      %1490 = vmatprep.subr.bf16.mxu0 0
      %1491 = vmatpush1.bf16.msra.mxu0 0
      %1492 = vmatprep.subr.bf16.mxu0 0
      %1493 = vmatpush1.bf16.msra.mxu0 0
      %1494 = vmatprep.subr.bf16.mxu0 0
      %1495 = vmatpush1.bf16.msra.mxu0 0
      %1496 = vmatprep.subr.bf16.mxu0 0
      %1497 = vmatpush1.bf16.msra.mxu0 0
      %1498 = vmatprep.subr.bf16.mxu0 0
      %1499 = vmatpush1.bf16.msra.mxu0 0
      %1500 = vmatprep.subr.bf16.mxu0 0
      %1501 = vmatpush1.bf16.msra.mxu0 0
      %1502 = vmatprep.mubr.bf16.mxu0 0
      %1503 = vmatmul.mubr.bf16.gmra.mrb[0].mxu0 %v1128
      %v1504 = vpop.f32.mrb[0].mxu0
      %v1505 = vadd.f32 0.0, %v1504
      %v1506 = vpop.f32.mrb[0].mxu0
      %v1507 = vpop.f32.mrb[0].mxu0
      %v1508 = vadd.f32 0.0, %v1507
      %v1509 = vpop.f32.mrb[0].mxu0
      %1510 = vmatprep.mubr.bf16.mxu0 0
      %1511 = vmatmul.mubr.bf16.gmra.mrb[0].mxu0 %v1129
      %v1512 = vpop.f32.mrb[0].mxu0
      %v1513 = vadd.f32 0.0, %v1512
      %v1514 = vpop.f32.mrb[0].mxu0
      %v1515 = vpop.f32.mrb[0].mxu0
      %v1516 = vadd.f32 0.0, %v1515
      %v1517 = vpop.f32.mrb[0].mxu0
      %1518 = vmatprep.mubr.bf16.mxu0 0
      %1519 = vmatmul.mubr.bf16.gmra.mrb[0].mxu0 %v1276
      %v1520 = vpop.f32.mrb[0].mxu0
      %v1521 = vadd.f32 0.0, %v1520
      %v1522 = vpop.f32.mrb[0].mxu0
      %v1523 = vpop.f32.mrb[0].mxu0
      %v1524 = vadd.f32 0.0, %v1523
      %v1525 = vpop.f32.mrb[0].mxu0
      %1526 = vmatprep.mubr.bf16.mxu0 0
      %1527 = vmatmul.mubr.bf16.gmra.mrb[0].mxu0 %v1420
      %v1528 = vpop.f32.mrb[0].mxu0
      %v1529 = vadd.f32 0.0, %v1528
      %v1530 = vpop.f32.mrb[0].mxu0
      %v1531 = vpop.f32.mrb[0].mxu0
      %v1532 = vadd.f32 0.0, %v1531
      %v1533 = vpop.f32.mrb[0].mxu0
      %1534 = vdwg.mxu0
      %v1535 = vadd.f32 %v1391, %v1505
      %v1536 = vadd.f32 %v1392, %v1508
      %v1537 = vadd.f32 %v1393, %v1513
      %v1538 = vadd.f32 %v1394, %v1516
      %v1539 = vadd.f32 %v1395, %v1521
      %v1540 = vadd.f32 %v1396, %v1524
      %v1541 = vadd.f32 %v1397, %v1529
      %v1542 = vadd.f32 %v1398, %v1532
      %v1543 = vld [vmem:[%s2] sm:$0x1]
      %v1545 = vlaneseq
      %v1546 = vshrl.u32 %v1545, 7
      %v1547 = vsub.s32 0, %v1546
      %v1548 = vrot.slane %v1543, %v1547
      %v1550 = vadd.f32 %v1535, %v1548
      %v1551 = vadd.f32 %v1536, %v1548
      %v1552 = vadd.f32 %v1537, %v1548
      %v1553 = vadd.f32 %v1538, %v1548
      %v1554 = vadd.f32 %v1539, %v1548
      %v1555 = vadd.f32 %v1540, %v1548
      %v1556 = vadd.f32 %v1541, %v1548
      %v1557 = vadd.f32 %v1542, %v1548
      %v1558 = vpack.c.bf16 %v1551, %v1550
      %v1559 = vpack.c.bf16 %v1553, %v1552
      %v1560 = vpack.c.bf16 %v1555, %v1554
      %v1561 = vpack.c.bf16 %v1557, %v1556
      %v1566 = vunpack.c.l.b16 %v1558
      %v1567 = vunpack.c.h.b16 %v1558
      %v1568 = vunpack.c.l.b16 %v1559
      %v1569 = vunpack.c.h.b16 %v1559
      %v1570 = vunpack.c.l.b16 %v1560
      %v1571 = vunpack.c.h.b16 %v1560
      %v1572 = vunpack.c.l.b16 %v1561
      %v1573 = vunpack.c.h.b16 %v1561
      %v1574 = vpack.c.b16 %v1566, %v1566
      %v1575 = vpack.c.b16 %v1567, %v1567
      %v1576 = vpack.c.b16 %v1568, %v1568
      %v1577 = vpack.c.b16 %v1569, %v1569
      %v1578 = vpack.c.b16 %v1570, %v1570
      %v1579 = vpack.c.b16 %v1571, %v1571
      %v1580 = vpack.c.b16 %v1572, %v1572
      %v1581 = vpack.c.b16 %v1573, %v1573
      %1590 = vst [vmem:[%s170] sm:$0xf] %v1574
      %1591 = vst [vmem:[%s170 + $0x4] sm:$0xf] %v1575
      %1592 = vst [vmem:[%s170 + $0x8] sm:$0xf] %v1576
      %1593 = vst [vmem:[%s170 + $0xc] sm:$0xf] %v1577
      %1594 = vst [vmem:[%s170 + $0x10] sm:$0xf] %v1578
      %1595 = vst [vmem:[%s170 + $0x14] sm:$0xf] %v1579
      %1596 = vst [vmem:[%s170 + $0x18] sm:$0xf] %v1580
      %1597 = vst [vmem:[%s170 + $0x1c] sm:$0xf] %v1581
      %p1598 = scmp.lt.s32.totalorder %s14, 1
      %s1599 = scalar_select %p1598, %s14, 1
      %s1600 = smul.addr %s1599, 8
      %s1601 = smul.addr %s1600, 4
      %s1602 = scalar_lea.vmem %s3, %s1601
      // Predicated region
      $region33: #{encoder_forward.9} parent=31 // pred_check
        %p1603 = pneg %p100
      $region34: #{encoder_forward.9} parent=31 // pred_check_branch
        %1605 = sbr.rel (%p1603) target = $region36
      $region35: #{encoder_forward.9} parent=31 // pred_region
        _
      $region36: #{encoder_forward.9} parent=31 // pred_fallthru
        _
    $region32: #{encoder_forward.9} parent=5 // pred_fallthru
      _
    %p1606 = scmp.le.s32.totalorder 2, %s9
    // Predicated region
    $region37: #{encoder_forward.9} parent=5 // pred_check
      %p1607 = pneg %p1606
    $region38: #{encoder_forward.9} parent=5 // pred_check_branch
      %1609 = sbr.rel (%p1607) target = $region40
    $region39: #{encoder_forward.9} parent=5 // pred_region
      %s1610 = ssub.s32 %s9, 2
      // Predicated region
      $region41: #{encoder_forward.9} parent=39 // pred_check
        %p1611 = pneg %p106
      $region42: #{encoder_forward.9} parent=39 // pred_check_branch
        %1613 = sbr.rel (%p1611) target = $region44
      $region43: #{encoder_forward.9} parent=39 // pred_region
        %p1614 = scmp.lt.s32.totalorder %s15, 1
        %s1615 = scalar_select %p1614, %s15, 1
        %s1616 = smul.addr %s1615, 8
        %s1617 = smul.addr %s1616, 4
        %s1618 = scalar_lea.vmem %s3, %s1617
      $region44: #{encoder_forward.9} parent=39 // pred_fallthru
        _
    $region40: #{encoder_forward.9} parent=5 // pred_fallthru
      _
  $region6: #{encoder_forward.9} parent=0 // loop_footer
    %s13 = sadd.s32 1, %s9
  $region7: #{encoder_forward.9} parent=0 // loop_footer_branch
    %8 = sbr.rel target = $region3
  $region8: #{encoder_forward.9} parent=0 // loop_exit
    _

// kernel: encoder_forward.7
$region0: #{encoder_forward.7}
  #allocation0 [shape = 'u32[]', space=smem, size = 0x4, offset = 0x4, fixed_abs, tag = 'smem constant byte address 0x4 - core index']
  #allocation1 [shape = 'u32[144,128]{1,0:T(1,128)}', space=vmem, size = 0x12000, scoped, tag = 'internal scratch']
  %s0 = inlined_call_operand.vmem [shape: bf16[2,3,96,128], index: 0, kind: input, shape index: {}]
  %s1 = inlined_call_operand.vmem [shape: bf16[9,128,128], index: 1, kind: input, shape index: {}]
  %s2 = inlined_call_operand.vmem [shape: f32[1,128], index: 2, kind: input, shape index: {}]
  %s3 = inlined_call_operand.vmem [shape: bf16[128,128], index: 3, kind: input, shape index: {}]
  %s4 = inlined_call_operand.vmem [shape: f32[1,128], index: 4, kind: input, shape index: {}]
  %s5 = inlined_call_operand.vmem [shape: bf16[2,64,128], index: 5, kind: output, shape index: {}]
  %s6 = sld [smem:[#allocation0]]
  $region53: #{encoder_forward.7} parent=0
    _
  %s8 = ssub.s32 1, %s6
  %s9 = scalar_select 0, %s8, %s6
  loop: start=0, step=1, limit=4
  $region2: #{encoder_forward.7} parent=0 // loop_pre_header
    _
  $region3: #{encoder_forward.7} parent=0 // loop_header
    %s11 = sphi 0, %s15
    %p12 = scmp.ge.s32.totalorder %s11, 4
    %s21 = sphi 0, %s23
    %s24 = sphi 0, %s21
    %s25 = sphi 0, %s24
    %s41 = sphi 0, %s25
    %s45 = sphi 0, %s45
    %s47 = sphi 0, %s45
    %s48 = sphi 0, %s47
    %s62 = sphi 0, %s48
    %s66 = sphi 0, %s66
    %s68 = sphi 0, %s66
    %s69 = sphi 0, %s68
    %s83 = sphi 0, %s69
    %s87 = sphi 0, %s87
    %s89 = sphi 0, %s87
    %s90 = sphi 0, %s89
    %s104 = sphi 0, %s90
    %s108 = sphi 0, %s108
    %s110 = sphi 0, %s108
    %s111 = sphi 0, %s110
    %s125 = sphi 0, %s111
    %s131 = sphi 0, %s133
    %s134 = sphi 0, %s131
    %s135 = sphi 0, %s134
    %s151 = sphi 0, %s135
  $region4: #{encoder_forward.7} parent=0 // loop_header_branch
    %14 = sbr.rel (%p12) target = $region8
  $region5: #{encoder_forward.7} parent=0 // loop_body
    %s16 = ssub.s32 %s11, 1
    %s17 = ssub.s32 %s11, 2
    %s18 = sadd.s32 %s11, 1
    %s19 = ssub.s32 %s11, %s18
    %p20 = scmp.eq.s32.totalorder %s19, 0
    %s22 = sadd.s32 %s21, 1
    %s23 = scalar_select %p20, %s21, %s22
    %p26 = pneg %p20
    %p27 = scmp.eq.s32.totalorder %s11, 1
    %p28 = por %p26, %p27
    %p29 = scmp.ne.s32.totalorder %s21, %s24
    %p30 = scmp.eq.s32.totalorder %s11, 0
    %p31 = por %p29, %p30
    %p32 = scmp.ne.s32.totalorder %s21, %s24
    %p33 = scmp.eq.s32.totalorder %s16, 1
    %p34 = por %p32, %p33
    %p35 = scmp.ne.s32.totalorder %s24, %s25
    %p36 = scmp.eq.s32.totalorder %s16, 0
    %p37 = por %p35, %p36
    %p38 = scmp.ne.s32.totalorder %s24, %s25
    %p39 = scmp.eq.s32.totalorder %s17, 1
    %p40 = por %p38, %p39
    %p42 = scmp.ne.s32.totalorder %s25, %s41
    %p43 = scmp.eq.s32.totalorder %s17, 0
    %p44 = por %p42, %p43
    %s46 = sadd.s32 %s45, 1
    %p49 = scmp.eq.s32.totalorder %s11, 1
    %p50 = scmp.ne.s32.totalorder %s45, %s47
    %p51 = scmp.eq.s32.totalorder %s11, 0
    %p52 = por %p50, %p51
    %p53 = scmp.ne.s32.totalorder %s45, %s47
    %p54 = scmp.eq.s32.totalorder %s16, 1
    %p55 = por %p53, %p54
    %p56 = scmp.ne.s32.totalorder %s47, %s48
    %p57 = scmp.eq.s32.totalorder %s16, 0
    %p58 = por %p56, %p57
    %p59 = scmp.ne.s32.totalorder %s47, %s48
    %p60 = scmp.eq.s32.totalorder %s17, 1
    %p61 = por %p59, %p60
    %p63 = scmp.ne.s32.totalorder %s48, %s62
    %p64 = scmp.eq.s32.totalorder %s17, 0
    %p65 = por %p63, %p64
    %s67 = sadd.s32 %s66, 1
    %p70 = scmp.eq.s32.totalorder %s11, 1
    %p71 = scmp.ne.s32.totalorder %s66, %s68
    %p72 = scmp.eq.s32.totalorder %s11, 0
    %p73 = por %p71, %p72
    %p74 = scmp.ne.s32.totalorder %s66, %s68
    %p75 = scmp.eq.s32.totalorder %s16, 1
    %p76 = por %p74, %p75
    %p77 = scmp.ne.s32.totalorder %s68, %s69
    %p78 = scmp.eq.s32.totalorder %s16, 0
    %p79 = por %p77, %p78
    %p80 = scmp.ne.s32.totalorder %s68, %s69
    %p81 = scmp.eq.s32.totalorder %s17, 1
    %p82 = por %p80, %p81
    %p84 = scmp.ne.s32.totalorder %s69, %s83
    %p85 = scmp.eq.s32.totalorder %s17, 0
    %p86 = por %p84, %p85
    %s88 = sadd.s32 %s87, 1
    %p91 = scmp.eq.s32.totalorder %s11, 1
    %p92 = scmp.ne.s32.totalorder %s87, %s89
    %p93 = scmp.eq.s32.totalorder %s11, 0
    %p94 = por %p92, %p93
    %p95 = scmp.ne.s32.totalorder %s87, %s89
    %p96 = scmp.eq.s32.totalorder %s16, 1
    %p97 = por %p95, %p96
    %p98 = scmp.ne.s32.totalorder %s89, %s90
    %p99 = scmp.eq.s32.totalorder %s16, 0
    %p100 = por %p98, %p99
    %p101 = scmp.ne.s32.totalorder %s89, %s90
    %p102 = scmp.eq.s32.totalorder %s17, 1
    %p103 = por %p101, %p102
    %p105 = scmp.ne.s32.totalorder %s90, %s104
    %p106 = scmp.eq.s32.totalorder %s17, 0
    %p107 = por %p105, %p106
    %s109 = sadd.s32 %s108, 1
    %p112 = scmp.eq.s32.totalorder %s11, 1
    %p113 = scmp.ne.s32.totalorder %s108, %s110
    %p114 = scmp.eq.s32.totalorder %s11, 0
    %p115 = por %p113, %p114
    %p116 = scmp.ne.s32.totalorder %s108, %s110
    %p117 = scmp.eq.s32.totalorder %s16, 1
    %p118 = por %p116, %p117
    %p119 = scmp.ne.s32.totalorder %s110, %s111
    %p120 = scmp.eq.s32.totalorder %s16, 0
    %p121 = por %p119, %p120
    %p122 = scmp.ne.s32.totalorder %s110, %s111
    %p123 = scmp.eq.s32.totalorder %s17, 1
    %p124 = por %p122, %p123
    %p126 = scmp.ne.s32.totalorder %s111, %s125
    %p127 = scmp.eq.s32.totalorder %s17, 0
    %p128 = por %p126, %p127
    %s129 = ssub.s32 %s11, %s18
    %p130 = scmp.eq.s32.totalorder %s129, 0
    %s132 = sadd.s32 %s131, 1
    %s133 = scalar_select %p130, %s131, %s132
    %p136 = pneg %p130
    %p137 = scmp.eq.s32.totalorder %s11, 1
    %p138 = por %p136, %p137
    %p139 = scmp.ne.s32.totalorder %s131, %s134
    %p140 = scmp.eq.s32.totalorder %s11, 0
    %p141 = por %p139, %p140
    %p142 = scmp.ne.s32.totalorder %s131, %s134
    %p143 = scmp.eq.s32.totalorder %s16, 1
    %p144 = por %p142, %p143
    %p145 = scmp.ne.s32.totalorder %s134, %s135
    %p146 = scmp.eq.s32.totalorder %s16, 0
    %p147 = por %p145, %p146
    %p148 = scmp.ne.s32.totalorder %s134, %s135
    %p149 = scmp.eq.s32.totalorder %s17, 1
    %p150 = por %p148, %p149
    %p152 = scmp.ne.s32.totalorder %s135, %s151
    %p153 = scmp.eq.s32.totalorder %s17, 0
    %p154 = por %p152, %p153
    %p155 = scmp.le.s32.totalorder 1, %s11
    %p156 = scmp.lt.s32.totalorder %s11, 3
    %p157 = pnand %p155, %p156
    %p158 = pneg %p157
    // Predicated region
    $region9: #{encoder_forward.7} parent=5 // pred_check
      _
    $region10: #{encoder_forward.7} parent=5 // pred_check_branch
      %160 = sbr.rel (%p157) target = $region12
    $region11: #{encoder_forward.7} parent=5 // pred_region
      %s161 = ssub.s32 %s11, 1
      // Predicated region
      $region13: #{encoder_forward.7} parent=11 // pred_check
        %p162 = pneg %p58
      $region14: #{encoder_forward.7} parent=11 // pred_check_branch
        %164 = sbr.rel (%p162) target = $region16
      $region15: #{encoder_forward.7} parent=11 // pred_region
        _
      $region16: #{encoder_forward.7} parent=11 // pred_fallthru
        _
      // Predicated region
      $region17: #{encoder_forward.7} parent=11 // pred_check
        %p165 = pneg %p79
      $region18: #{encoder_forward.7} parent=11 // pred_check_branch
        %167 = sbr.rel (%p165) target = $region20
      $region19: #{encoder_forward.7} parent=11 // pred_region
        _
      $region20: #{encoder_forward.7} parent=11 // pred_fallthru
        _
      // Predicated region
      $region21: #{encoder_forward.7} parent=11 // pred_check
        %p168 = pneg %p100
      $region22: #{encoder_forward.7} parent=11 // pred_check_branch
        %170 = sbr.rel (%p168) target = $region24
      $region23: #{encoder_forward.7} parent=11 // pred_region
        _
      $region24: #{encoder_forward.7} parent=11 // pred_fallthru
        _
      // Predicated region
      $region25: #{encoder_forward.7} parent=11 // pred_check
        %p171 = pneg %p121
      $region26: #{encoder_forward.7} parent=11 // pred_check_branch
        %173 = sbr.rel (%p171) target = $region28
      $region27: #{encoder_forward.7} parent=11 // pred_region
        _
      $region28: #{encoder_forward.7} parent=11 // pred_fallthru
        _
    $region12: #{encoder_forward.7} parent=5 // pred_fallthru
      _
    %p174 = scmp.lt.s32.totalorder %s11, 2
    // Predicated region
    $region29: #{encoder_forward.7} parent=5 // pred_check
      %p175 = pneg %p174
    $region30: #{encoder_forward.7} parent=5 // pred_check_branch
      %177 = sbr.rel (%p175) target = $region32
    $region31: #{encoder_forward.7} parent=5 // pred_region
      // Predicated region
      $region33: #{encoder_forward.7} parent=31 // pred_check
        %p178 = pneg %p31
      $region34: #{encoder_forward.7} parent=31 // pred_check_branch
        %180 = sbr.rel (%p178) target = $region36
      $region35: #{encoder_forward.7} parent=31 // pred_region
        %p181 = scmp.lt.s32.totalorder %s11, 1
        %s182 = scalar_select %p181, %s11, 1
        %s183 = smul.addr %s182, 36
        %s184 = smul.addr %s183, 4
        %s185 = scalar_lea.vmem %s0, %s184
      $region36: #{encoder_forward.7} parent=31 // pred_fallthru
        _
    $region32: #{encoder_forward.7} parent=5 // pred_fallthru
      _
    %p186 = scmp.le.s32.totalorder 1, %s11
    %p187 = scmp.lt.s32.totalorder %s11, 3
    %p188 = pnand %p186, %p187
    %p189 = pneg %p188
    // Predicated region
    $region37: #{encoder_forward.7} parent=5 // pred_check
      _
    $region38: #{encoder_forward.7} parent=5 // pred_check_branch
      %191 = sbr.rel (%p188) target = $region40
    $region39: #{encoder_forward.7} parent=5 // pred_region
      %s192 = ssub.s32 %s11, 1
      %p193 = scmp.lt.s32.totalorder %s16, 1
      %s194 = scalar_select %p193, %s16, 1
      %s195 = smul.addr %s194, 36
      %s196 = smul.addr %s195, 4
      %s197 = scalar_lea.vmem %s0, %s196
      %p198 = pneg %p37
      %p199 = pneg %p34
      %p200 = pneg %p58
      %p201 = pneg %p55
      %p202 = pneg %p79
      %p203 = pneg %p76
      %p204 = pneg %p100
      %p205 = pneg %p97
      %p206 = pneg %p121
      %p207 = pneg %p118
      %p208 = pneg %p147
      %p209 = pneg %p144
      %p210 = scmp.lt.s32.totalorder %s16, 1
      %s211 = scalar_select %p210, %s16, 1
      %s212 = smul.addr %s211, 8
      %s213 = smul.addr %s212, 4
      %s214 = scalar_lea.vmem %s5, %s213
      %p215 = scmp.lt.s32.totalorder %s16, 1
      %s216 = scalar_select %p215, %s16, 1
      %s217 = smul.addr %s216, 36
      %s218 = smul.addr %s217, 4
      %s219 = scalar_lea.vmem %s0, %s218
      %p220 = scmp.lt.s32.totalorder %s16, 1
      %s221 = scalar_select %p220, %s16, 1
      %s222 = smul.addr %s221, 8
      %s223 = smul.addr %s222, 4
      %s224 = scalar_lea.vmem %s5, %s223
      %v226 = vld [vmem:[%s219] sm:$0xf]
      %v227 = vld [vmem:[%s219 + $0x4] sm:$0xf]
      %v228 = vld [vmem:[%s219 + $0x8] sm:$0xf]
      %v229 = vld [vmem:[%s219 + $0xc] sm:$0xf]
      %v230 = vld [vmem:[%s219 + $0x10] sm:$0xf]
      %v231 = vld [vmem:[%s219 + $0x14] sm:$0xf]
      %v232 = vld [vmem:[%s219 + $0x18] sm:$0xf]
      %v233 = vld [vmem:[%s219 + $0x1c] sm:$0xf]
      %v234 = vld [vmem:[%s219 + $0x20] sm:$0xf]
      %v235 = vld [vmem:[%s219 + $0x24] sm:$0xf]
      %v236 = vld [vmem:[%s219 + $0x28] sm:$0xf]
      %v237 = vld [vmem:[%s219 + $0x2c] sm:$0xf]
      %v238 = vld [vmem:[%s1] sm:$0xf]
      %v239 = vld [vmem:[%s1 + $0x4] sm:$0xf]
      %v240 = vld [vmem:[%s1 + $0x8] sm:$0xf]
      %v241 = vld [vmem:[%s1 + $0xc] sm:$0xf]
      %v242 = vld [vmem:[%s1 + $0x10] sm:$0xf]
      %v243 = vld [vmem:[%s1 + $0x14] sm:$0xf]
      %v244 = vld [vmem:[%s1 + $0x18] sm:$0xf]
      %v245 = vld [vmem:[%s1 + $0x1c] sm:$0xf]
      %v246 = vld [vmem:[%s1 + $0x20] sm:$0xf]
      %v247 = vld [vmem:[%s1 + $0x24] sm:$0xf]
      %v248 = vld [vmem:[%s1 + $0x28] sm:$0xf]
      %v249 = vld [vmem:[%s1 + $0x2c] sm:$0xf]
      %v250 = vld [vmem:[%s1 + $0x30] sm:$0xf]
      %v251 = vld [vmem:[%s1 + $0x34] sm:$0xf]
      %v252 = vld [vmem:[%s1 + $0x38] sm:$0xf]
      %v253 = vld [vmem:[%s1 + $0x3c] sm:$0xf]
      %s254 = scalar_lea.vmem %s1, 192
      %v255 = vld [vmem:[%s254] sm:$0xf]
      %v256 = vld [vmem:[%s254 + $0x4] sm:$0xf]
      %v257 = vld [vmem:[%s254 + $0x8] sm:$0xf]
      %v258 = vld [vmem:[%s254 + $0xc] sm:$0xf]
      %v259 = vld [vmem:[%s254 + $0x10] sm:$0xf]
      %v260 = vld [vmem:[%s254 + $0x14] sm:$0xf]
      %v261 = vld [vmem:[%s254 + $0x18] sm:$0xf]
      %v262 = vld [vmem:[%s254 + $0x1c] sm:$0xf]
      %v263 = vld [vmem:[%s254 + $0x20] sm:$0xf]
      %v264 = vld [vmem:[%s254 + $0x24] sm:$0xf]
      %v265 = vld [vmem:[%s254 + $0x28] sm:$0xf]
      %v266 = vld [vmem:[%s254 + $0x2c] sm:$0xf]
      %v267 = vld [vmem:[%s254 + $0x30] sm:$0xf]
      %v268 = vld [vmem:[%s254 + $0x34] sm:$0xf]
      %v269 = vld [vmem:[%s254 + $0x38] sm:$0xf]
      %v270 = vld [vmem:[%s254 + $0x3c] sm:$0xf]
      %v279 = vunpack.c.l.b16 %v228
      %v280 = vunpack.c.l.b16 %v229
      %v281 = vunpack.c.l.b16 %v230
      %v282 = vunpack.c.l.b16 %v231
      %v283 = vunpack.c.l.b16 %v232
      %v284 = vunpack.c.l.b16 %v233
      %v285 = vunpack.c.l.b16 %v234
      %v286 = vunpack.c.l.b16 %v235
      %v287 = vpack.c.b16 %v280, %v279
      %v288 = vpack.c.b16 %v282, %v281
      %v289 = vpack.c.b16 %v284, %v283
      %v290 = vpack.c.b16 %v286, %v285
      %v311 = vunpack.c.l.b16 %v255
      %v312 = vunpack.c.l.b16 %v256
      %v313 = vunpack.c.l.b16 %v257
      %v314 = vunpack.c.l.b16 %v258
      %v315 = vunpack.c.l.b16 %v259
      %v316 = vunpack.c.l.b16 %v260
      %v317 = vunpack.c.l.b16 %v261
      %v318 = vunpack.c.l.b16 %v262
      %v319 = vunpack.c.l.b16 %v263
      %v320 = vunpack.c.l.b16 %v264
      %v321 = vunpack.c.l.b16 %v265
      %v322 = vunpack.c.l.b16 %v266
      %v323 = vunpack.c.l.b16 %v267
      %v324 = vunpack.c.l.b16 %v268
      %v325 = vunpack.c.l.b16 %v269
      %v326 = vunpack.c.l.b16 %v270
      %v327 = vpack.c.b16 %v312, %v311
      %v328 = vpack.c.b16 %v314, %v313
      %v329 = vpack.c.b16 %v316, %v315
      %v330 = vpack.c.b16 %v318, %v317
      %v331 = vpack.c.b16 %v320, %v319
      %v332 = vpack.c.b16 %v322, %v321
      %v333 = vpack.c.b16 %v324, %v323
      %v334 = vpack.c.b16 %v326, %v325
      %343 = vmatprep.subr.bf16.mxu0 0
      %344 = vmatpush1.bf16.msra.mxu0 %v327
      %345 = vmatprep.subr.bf16.mxu0 0
      %346 = vmatpush1.bf16.msra.mxu0 %v328
      %347 = vmatprep.subr.bf16.mxu0 0
      %348 = vmatpush1.bf16.msra.mxu0 %v329
      %349 = vmatprep.subr.bf16.mxu0 0
      %350 = vmatpush1.bf16.msra.mxu0 %v330
      %351 = vmatprep.subr.bf16.mxu0 0
      %352 = vmatpush1.bf16.msra.mxu0 %v331
      %353 = vmatprep.subr.bf16.mxu0 0
      %354 = vmatpush1.bf16.msra.mxu0 %v332
      %355 = vmatprep.subr.bf16.mxu0 0
      %356 = vmatpush1.bf16.msra.mxu0 %v333
      %357 = vmatprep.subr.bf16.mxu0 0
      %358 = vmatpush1.bf16.msra.mxu0 %v334
      %359 = vmatprep.subr.bf16.mxu0 0
      %360 = vmatpush1.bf16.msra.mxu0 0
      %361 = vmatprep.subr.bf16.mxu0 0
      %362 = vmatpush1.bf16.msra.mxu0 0
      %363 = vmatprep.subr.bf16.mxu0 0
      %364 = vmatpush1.bf16.msra.mxu0 0
      %365 = vmatprep.subr.bf16.mxu0 0
      %366 = vmatpush1.bf16.msra.mxu0 0
      %367 = vmatprep.subr.bf16.mxu0 0
      %368 = vmatpush1.bf16.msra.mxu0 0
      %369 = vmatprep.subr.bf16.mxu0 0
      %370 = vmatpush1.bf16.msra.mxu0 0
      %371 = vmatprep.subr.bf16.mxu0 0
      %372 = vmatpush1.bf16.msra.mxu0 0
      %373 = vmatprep.subr.bf16.mxu0 0
      %374 = vmatpush1.bf16.msra.mxu0 0
      %375 = vmatprep.mubr.bf16.mxu0 0
      %376 = vmatmul.mubr.bf16.gmra.mrb[0].mxu0 %v287
      %v377 = vpop.f32.mrb[0].mxu0
      %v378 = vadd.f32 0.0, %v377
      %v379 = vpop.f32.mrb[0].mxu0
      %v380 = vpop.f32.mrb[0].mxu0
      %v381 = vadd.f32 0.0, %v380
      %v382 = vpop.f32.mrb[0].mxu0
      %383 = vmatprep.mubr.bf16.mxu0 0
      %384 = vmatmul.mubr.bf16.gmra.mrb[0].mxu0 %v288
      %v385 = vpop.f32.mrb[0].mxu0
      %v386 = vadd.f32 0.0, %v385
      %v387 = vpop.f32.mrb[0].mxu0
      %v388 = vpop.f32.mrb[0].mxu0
      %v389 = vadd.f32 0.0, %v388
      %v390 = vpop.f32.mrb[0].mxu0
      %391 = vmatprep.mubr.bf16.mxu0 0
      %392 = vmatmul.mubr.bf16.gmra.mrb[0].mxu0 %v289
      %v393 = vpop.f32.mrb[0].mxu0
      %v394 = vadd.f32 0.0, %v393
      %v395 = vpop.f32.mrb[0].mxu0
      %v396 = vpop.f32.mrb[0].mxu0
      %v397 = vadd.f32 0.0, %v396
      %v398 = vpop.f32.mrb[0].mxu0
      %399 = vmatprep.mubr.bf16.mxu0 0
      %400 = vmatmul.mubr.bf16.gmra.mrb[0].mxu0 %v290
      %v401 = vpop.f32.mrb[0].mxu0
      %v402 = vadd.f32 0.0, %v401
      %v403 = vpop.f32.mrb[0].mxu0
      %v404 = vpop.f32.mrb[0].mxu0
      %v405 = vadd.f32 0.0, %v404
      %v406 = vpop.f32.mrb[0].mxu0
      %407 = vdwg.mxu0
      %v410 = vunpack.c.l.b16 %v226
      %v411 = vunpack.c.l.b16 %v227
      %v412 = vpack.c.b16 %v411, %v410
      %v430 = vunpack.c.l.b16 %v238
      %v431 = vunpack.c.l.b16 %v239
      %v432 = vunpack.c.l.b16 %v240
      %v433 = vunpack.c.l.b16 %v241
      %v434 = vunpack.c.l.b16 %v242
      %v435 = vunpack.c.l.b16 %v243
      %v436 = vunpack.c.l.b16 %v244
      %v437 = vunpack.c.l.b16 %v245
      %v438 = vunpack.c.l.b16 %v246
      %v439 = vunpack.c.l.b16 %v247
      %v440 = vunpack.c.l.b16 %v248
      %v441 = vunpack.c.l.b16 %v249
      %v442 = vunpack.c.l.b16 %v250
      %v443 = vunpack.c.l.b16 %v251
      %v444 = vunpack.c.l.b16 %v252
      %v445 = vunpack.c.l.b16 %v253
      %v446 = vpack.c.b16 %v431, %v430
      %v447 = vpack.c.b16 %v433, %v432
      %v448 = vpack.c.b16 %v435, %v434
      %v449 = vpack.c.b16 %v437, %v436
      %v450 = vpack.c.b16 %v439, %v438
      %v451 = vpack.c.b16 %v441, %v440
      %v452 = vpack.c.b16 %v443, %v442
      %v453 = vpack.c.b16 %v445, %v444
      %462 = vmatprep.subr.bf16.mxu0 0
      %463 = vmatpush1.bf16.msra.mxu0 %v446
      %464 = vmatprep.subr.bf16.mxu0 0
      %465 = vmatpush1.bf16.msra.mxu0 %v447
      %466 = vmatprep.subr.bf16.mxu0 0
      %467 = vmatpush1.bf16.msra.mxu0 %v448
      %468 = vmatprep.subr.bf16.mxu0 0
      %469 = vmatpush1.bf16.msra.mxu0 %v449
      %470 = vmatprep.subr.bf16.mxu0 0
      %471 = vmatpush1.bf16.msra.mxu0 %v450
      %472 = vmatprep.subr.bf16.mxu0 0
      %473 = vmatpush1.bf16.msra.mxu0 %v451
      %474 = vmatprep.subr.bf16.mxu0 0
      %475 = vmatpush1.bf16.msra.mxu0 %v452
      %476 = vmatprep.subr.bf16.mxu0 0
      %477 = vmatpush1.bf16.msra.mxu0 %v453
      %478 = vmatprep.subr.bf16.mxu0 0
      %479 = vmatpush1.bf16.msra.mxu0 0
      %480 = vmatprep.subr.bf16.mxu0 0
      %481 = vmatpush1.bf16.msra.mxu0 0
      %482 = vmatprep.subr.bf16.mxu0 0
      %483 = vmatpush1.bf16.msra.mxu0 0
      %484 = vmatprep.subr.bf16.mxu0 0
      %485 = vmatpush1.bf16.msra.mxu0 0
      %486 = vmatprep.subr.bf16.mxu0 0
      %487 = vmatpush1.bf16.msra.mxu0 0
      %488 = vmatprep.subr.bf16.mxu0 0
      %489 = vmatpush1.bf16.msra.mxu0 0
      %490 = vmatprep.subr.bf16.mxu0 0
      %491 = vmatpush1.bf16.msra.mxu0 0
      %492 = vmatprep.subr.bf16.mxu0 0
      %493 = vmatpush1.bf16.msra.mxu0 0
      %494 = vmatprep.mubr.bf16.mxu0 0
      %495 = vmatmul.mubr.bf16.gmra.mrb[0].mxu0 %v412
      %v496 = vpop.f32.mrb[0].mxu0
      %v497 = vadd.f32 %v378, %v496
      %v498 = vpop.f32.mrb[0].mxu0
      %v499 = vpop.f32.mrb[0].mxu0
      %v500 = vadd.f32 %v381, %v499
      %v501 = vpop.f32.mrb[0].mxu0
      %502 = vmatprep.mubr.bf16.mxu0 0
      %503 = vmatmul.mubr.bf16.gmra.mrb[0].mxu0 %v287
      %v504 = vpop.f32.mrb[0].mxu0
      %v505 = vadd.f32 %v386, %v504
      %v506 = vpop.f32.mrb[0].mxu0
      %v507 = vpop.f32.mrb[0].mxu0
      %v508 = vadd.f32 %v389, %v507
      %v509 = vpop.f32.mrb[0].mxu0
      %510 = vmatprep.mubr.bf16.mxu0 0
      %511 = vmatmul.mubr.bf16.gmra.mrb[0].mxu0 %v288
      %v512 = vpop.f32.mrb[0].mxu0
      %v513 = vadd.f32 %v394, %v512
      %v514 = vpop.f32.mrb[0].mxu0
      %v515 = vpop.f32.mrb[0].mxu0
      %v516 = vadd.f32 %v397, %v515
      %v517 = vpop.f32.mrb[0].mxu0
      %518 = vmatprep.mubr.bf16.mxu0 0
      %519 = vmatmul.mubr.bf16.gmra.mrb[0].mxu0 %v289
      %v520 = vpop.f32.mrb[0].mxu0
      %v521 = vadd.f32 %v402, %v520
      %v522 = vpop.f32.mrb[0].mxu0
      %v523 = vpop.f32.mrb[0].mxu0
      %v524 = vadd.f32 %v405, %v523
      %v525 = vpop.f32.mrb[0].mxu0
      %526 = vdwg.mxu0
      %s527 = scalar_lea.vmem %s1, 384
      %v528 = vld [vmem:[%s527] sm:$0xf]
      %v529 = vld [vmem:[%s527 + $0x4] sm:$0xf]
      %v530 = vld [vmem:[%s527 + $0x8] sm:$0xf]
      %v531 = vld [vmem:[%s527 + $0xc] sm:$0xf]
      %v532 = vld [vmem:[%s527 + $0x10] sm:$0xf]
      %v533 = vld [vmem:[%s527 + $0x14] sm:$0xf]
      %v534 = vld [vmem:[%s527 + $0x18] sm:$0xf]
      %v535 = vld [vmem:[%s527 + $0x1c] sm:$0xf]
      %v536 = vld [vmem:[%s527 + $0x20] sm:$0xf]
      %v537 = vld [vmem:[%s527 + $0x24] sm:$0xf]
      %v538 = vld [vmem:[%s527 + $0x28] sm:$0xf]
      %v539 = vld [vmem:[%s527 + $0x2c] sm:$0xf]
      %v540 = vld [vmem:[%s527 + $0x30] sm:$0xf]
      %v541 = vld [vmem:[%s527 + $0x34] sm:$0xf]
      %v542 = vld [vmem:[%s527 + $0x38] sm:$0xf]
      %v543 = vld [vmem:[%s527 + $0x3c] sm:$0xf]
      %v546 = vunpack.c.l.b16 %v236
      %v547 = vunpack.c.l.b16 %v237
      %v548 = vpack.c.b16 %v547, %v546
      %v566 = vunpack.c.l.b16 %v528
      %v567 = vunpack.c.l.b16 %v529
      %v568 = vunpack.c.l.b16 %v530
      %v569 = vunpack.c.l.b16 %v531
      %v570 = vunpack.c.l.b16 %v532
      %v571 = vunpack.c.l.b16 %v533
      %v572 = vunpack.c.l.b16 %v534
      %v573 = vunpack.c.l.b16 %v535
      %v574 = vunpack.c.l.b16 %v536
      %v575 = vunpack.c.l.b16 %v537
      %v576 = vunpack.c.l.b16 %v538
      %v577 = vunpack.c.l.b16 %v539
      %v578 = vunpack.c.l.b16 %v540
      %v579 = vunpack.c.l.b16 %v541
      %v580 = vunpack.c.l.b16 %v542
      %v581 = vunpack.c.l.b16 %v543
      %v582 = vpack.c.b16 %v567, %v566
      %v583 = vpack.c.b16 %v569, %v568
      %v584 = vpack.c.b16 %v571, %v570
      %v585 = vpack.c.b16 %v573, %v572
      %v586 = vpack.c.b16 %v575, %v574
      %v587 = vpack.c.b16 %v577, %v576
      %v588 = vpack.c.b16 %v579, %v578
      %v589 = vpack.c.b16 %v581, %v580
      %598 = vmatprep.subr.bf16.mxu0 0
      %599 = vmatpush1.bf16.msra.mxu0 %v582
      %600 = vmatprep.subr.bf16.mxu0 0
      %601 = vmatpush1.bf16.msra.mxu0 %v583
      %602 = vmatprep.subr.bf16.mxu0 0
      %603 = vmatpush1.bf16.msra.mxu0 %v584
      %604 = vmatprep.subr.bf16.mxu0 0
      %605 = vmatpush1.bf16.msra.mxu0 %v585
      %606 = vmatprep.subr.bf16.mxu0 0
      %607 = vmatpush1.bf16.msra.mxu0 %v586
      %608 = vmatprep.subr.bf16.mxu0 0
      %609 = vmatpush1.bf16.msra.mxu0 %v587
      %610 = vmatprep.subr.bf16.mxu0 0
      %611 = vmatpush1.bf16.msra.mxu0 %v588
      %612 = vmatprep.subr.bf16.mxu0 0
      %613 = vmatpush1.bf16.msra.mxu0 %v589
      %614 = vmatprep.subr.bf16.mxu0 0
      %615 = vmatpush1.bf16.msra.mxu0 0
      %616 = vmatprep.subr.bf16.mxu0 0
      %617 = vmatpush1.bf16.msra.mxu0 0
      %618 = vmatprep.subr.bf16.mxu0 0
      %619 = vmatpush1.bf16.msra.mxu0 0
      %620 = vmatprep.subr.bf16.mxu0 0
      %621 = vmatpush1.bf16.msra.mxu0 0
      %622 = vmatprep.subr.bf16.mxu0 0
      %623 = vmatpush1.bf16.msra.mxu0 0
      %624 = vmatprep.subr.bf16.mxu0 0
      %625 = vmatpush1.bf16.msra.mxu0 0
      %626 = vmatprep.subr.bf16.mxu0 0
      %627 = vmatpush1.bf16.msra.mxu0 0
      %628 = vmatprep.subr.bf16.mxu0 0
      %629 = vmatpush1.bf16.msra.mxu0 0
      %630 = vmatprep.mubr.bf16.mxu0 0
      %631 = vmatmul.mubr.bf16.gmra.mrb[0].mxu0 %v288
      %v632 = vpop.f32.mrb[0].mxu0
      %v633 = vadd.f32 0.0, %v632
      %v634 = vpop.f32.mrb[0].mxu0
      %v635 = vpop.f32.mrb[0].mxu0
      %v636 = vadd.f32 0.0, %v635
      %v637 = vpop.f32.mrb[0].mxu0
      %638 = vmatprep.mubr.bf16.mxu0 0
      %639 = vmatmul.mubr.bf16.gmra.mrb[0].mxu0 %v289
      %v640 = vpop.f32.mrb[0].mxu0
      %v641 = vadd.f32 0.0, %v640
      %v642 = vpop.f32.mrb[0].mxu0
      %v643 = vpop.f32.mrb[0].mxu0
      %v644 = vadd.f32 0.0, %v643
      %v645 = vpop.f32.mrb[0].mxu0
      %646 = vmatprep.mubr.bf16.mxu0 0
      %647 = vmatmul.mubr.bf16.gmra.mrb[0].mxu0 %v290
      %v648 = vpop.f32.mrb[0].mxu0
      %v649 = vadd.f32 0.0, %v648
      %v650 = vpop.f32.mrb[0].mxu0
      %v651 = vpop.f32.mrb[0].mxu0
      %v652 = vadd.f32 0.0, %v651
      %v653 = vpop.f32.mrb[0].mxu0
      %654 = vmatprep.mubr.bf16.mxu0 0
      %655 = vmatmul.mubr.bf16.gmra.mrb[0].mxu0 %v548
      %v656 = vpop.f32.mrb[0].mxu0
      %v657 = vadd.f32 0.0, %v656
      %v658 = vpop.f32.mrb[0].mxu0
      %v659 = vpop.f32.mrb[0].mxu0
      %v660 = vadd.f32 0.0, %v659
      %v661 = vpop.f32.mrb[0].mxu0
      %662 = vdwg.mxu0
      %v663 = vadd.f32 %v497, %v633
      %v664 = vadd.f32 %v500, %v636
      %v665 = vadd.f32 %v505, %v641
      %v666 = vadd.f32 %v508, %v644
      %v667 = vadd.f32 %v513, %v649
      %v668 = vadd.f32 %v516, %v652
      %v669 = vadd.f32 %v521, %v657
      %v670 = vadd.f32 %v524, %v660
      %s671 = scalar_lea.vmem %s219, 48
      %v672 = vld [vmem:[%s671] sm:$0xf]
      %v673 = vld [vmem:[%s671 + $0x4] sm:$0xf]
      %v674 = vld [vmem:[%s671 + $0x8] sm:$0xf]
      %v675 = vld [vmem:[%s671 + $0xc] sm:$0xf]
      %v676 = vld [vmem:[%s671 + $0x10] sm:$0xf]
      %v677 = vld [vmem:[%s671 + $0x14] sm:$0xf]
      %v678 = vld [vmem:[%s671 + $0x18] sm:$0xf]
      %v679 = vld [vmem:[%s671 + $0x1c] sm:$0xf]
      %v680 = vld [vmem:[%s671 + $0x20] sm:$0xf]
      %v681 = vld [vmem:[%s671 + $0x24] sm:$0xf]
      %v682 = vld [vmem:[%s671 + $0x28] sm:$0xf]
      %v683 = vld [vmem:[%s671 + $0x2c] sm:$0xf]
      %s684 = scalar_lea.vmem %s1, 64
      %v685 = vld [vmem:[%s684] sm:$0xf]
      %v686 = vld [vmem:[%s684 + $0x4] sm:$0xf]
      %v687 = vld [vmem:[%s684 + $0x8] sm:$0xf]
      %v688 = vld [vmem:[%s684 + $0xc] sm:$0xf]
      %v689 = vld [vmem:[%s684 + $0x10] sm:$0xf]
      %v690 = vld [vmem:[%s684 + $0x14] sm:$0xf]
      %v691 = vld [vmem:[%s684 + $0x18] sm:$0xf]
      %v692 = vld [vmem:[%s684 + $0x1c] sm:$0xf]
      %v693 = vld [vmem:[%s684 + $0x20] sm:$0xf]
      %v694 = vld [vmem:[%s684 + $0x24] sm:$0xf]
      %v695 = vld [vmem:[%s684 + $0x28] sm:$0xf]
      %v696 = vld [vmem:[%s684 + $0x2c] sm:$0xf]
      %v697 = vld [vmem:[%s684 + $0x30] sm:$0xf]
      %v698 = vld [vmem:[%s684 + $0x34] sm:$0xf]
      %v699 = vld [vmem:[%s684 + $0x38] sm:$0xf]
      %v700 = vld [vmem:[%s684 + $0x3c] sm:$0xf]
      %v709 = vunpack.c.l.b16 %v672
      %v710 = vunpack.c.l.b16 %v673
      %v711 = vunpack.c.l.b16 %v674
      %v712 = vunpack.c.l.b16 %v675
      %v713 = vunpack.c.l.b16 %v676
      %v714 = vunpack.c.l.b16 %v677
      %v715 = vunpack.c.l.b16 %v678
      %v716 = vunpack.c.l.b16 %v679
      %v717 = vpack.c.b16 %v710, %v709
      %v718 = vpack.c.b16 %v712, %v711
      %v719 = vpack.c.b16 %v714, %v713
      %v720 = vpack.c.b16 %v716, %v715
      %v741 = vunpack.c.l.b16 %v685
      %v742 = vunpack.c.l.b16 %v686
      %v743 = vunpack.c.l.b16 %v687
      %v744 = vunpack.c.l.b16 %v688
      %v745 = vunpack.c.l.b16 %v689
      %v746 = vunpack.c.l.b16 %v690
      %v747 = vunpack.c.l.b16 %v691
      %v748 = vunpack.c.l.b16 %v692
      %v749 = vunpack.c.l.b16 %v693
      %v750 = vunpack.c.l.b16 %v694
      %v751 = vunpack.c.l.b16 %v695
      %v752 = vunpack.c.l.b16 %v696
      %v753 = vunpack.c.l.b16 %v697
      %v754 = vunpack.c.l.b16 %v698
      %v755 = vunpack.c.l.b16 %v699
      %v756 = vunpack.c.l.b16 %v700
      %v757 = vpack.c.b16 %v742, %v741
      %v758 = vpack.c.b16 %v744, %v743
      %v759 = vpack.c.b16 %v746, %v745
      %v760 = vpack.c.b16 %v748, %v747
      %v761 = vpack.c.b16 %v750, %v749
      %v762 = vpack.c.b16 %v752, %v751
      %v763 = vpack.c.b16 %v754, %v753
      %v764 = vpack.c.b16 %v756, %v755
      %773 = vmatprep.subr.bf16.mxu0 0
      %774 = vmatpush1.bf16.msra.mxu0 %v757
      %775 = vmatprep.subr.bf16.mxu0 0
      %776 = vmatpush1.bf16.msra.mxu0 %v758
      %777 = vmatprep.subr.bf16.mxu0 0
      %778 = vmatpush1.bf16.msra.mxu0 %v759
      %779 = vmatprep.subr.bf16.mxu0 0
      %780 = vmatpush1.bf16.msra.mxu0 %v760
      %781 = vmatprep.subr.bf16.mxu0 0
      %782 = vmatpush1.bf16.msra.mxu0 %v761
      %783 = vmatprep.subr.bf16.mxu0 0
      %784 = vmatpush1.bf16.msra.mxu0 %v762
      %785 = vmatprep.subr.bf16.mxu0 0
      %786 = vmatpush1.bf16.msra.mxu0 %v763
      %787 = vmatprep.subr.bf16.mxu0 0
      %788 = vmatpush1.bf16.msra.mxu0 %v764
      %789 = vmatprep.subr.bf16.mxu0 0
      %790 = vmatpush1.bf16.msra.mxu0 0
      %791 = vmatprep.subr.bf16.mxu0 0
      %792 = vmatpush1.bf16.msra.mxu0 0
      %793 = vmatprep.subr.bf16.mxu0 0
      %794 = vmatpush1.bf16.msra.mxu0 0
      %795 = vmatprep.subr.bf16.mxu0 0
      %796 = vmatpush1.bf16.msra.mxu0 0
      %797 = vmatprep.subr.bf16.mxu0 0
      %798 = vmatpush1.bf16.msra.mxu0 0
      %799 = vmatprep.subr.bf16.mxu0 0
      %800 = vmatpush1.bf16.msra.mxu0 0
      %801 = vmatprep.subr.bf16.mxu0 0
      %802 = vmatpush1.bf16.msra.mxu0 0
      %803 = vmatprep.subr.bf16.mxu0 0
      %804 = vmatpush1.bf16.msra.mxu0 0
      %805 = vmatprep.mubr.bf16.mxu0 0
      %806 = vmatmul.mubr.bf16.gmra.mrb[0].mxu0 %v717
      %v807 = vpop.f32.mrb[0].mxu0
      %v808 = vadd.f32 0.0, %v807
      %v809 = vpop.f32.mrb[0].mxu0
      %v810 = vpop.f32.mrb[0].mxu0
      %v811 = vadd.f32 0.0, %v810
      %v812 = vpop.f32.mrb[0].mxu0
      %813 = vmatprep.mubr.bf16.mxu0 0
      %814 = vmatmul.mubr.bf16.gmra.mrb[0].mxu0 %v718
      %v815 = vpop.f32.mrb[0].mxu0
      %v816 = vadd.f32 0.0, %v815
      %v817 = vpop.f32.mrb[0].mxu0
      %v818 = vpop.f32.mrb[0].mxu0
      %v819 = vadd.f32 0.0, %v818
      %v820 = vpop.f32.mrb[0].mxu0
      %821 = vmatprep.mubr.bf16.mxu0 0
      %822 = vmatmul.mubr.bf16.gmra.mrb[0].mxu0 %v719
      %v823 = vpop.f32.mrb[0].mxu0
      %v824 = vadd.f32 0.0, %v823
      %v825 = vpop.f32.mrb[0].mxu0
      %v826 = vpop.f32.mrb[0].mxu0
      %v827 = vadd.f32 0.0, %v826
      %v828 = vpop.f32.mrb[0].mxu0
      %829 = vmatprep.mubr.bf16.mxu0 0
      %830 = vmatmul.mubr.bf16.gmra.mrb[0].mxu0 %v720
      %v831 = vpop.f32.mrb[0].mxu0
      %v832 = vadd.f32 0.0, %v831
      %v833 = vpop.f32.mrb[0].mxu0
      %v834 = vpop.f32.mrb[0].mxu0
      %v835 = vadd.f32 0.0, %v834
      %v836 = vpop.f32.mrb[0].mxu0
      %837 = vdwg.mxu0
      %v838 = vadd.f32 %v663, %v808
      %v839 = vadd.f32 %v664, %v811
      %v840 = vadd.f32 %v665, %v816
      %v841 = vadd.f32 %v666, %v819
      %v842 = vadd.f32 %v667, %v824
      %v843 = vadd.f32 %v668, %v827
      %v844 = vadd.f32 %v669, %v832
      %v845 = vadd.f32 %v670, %v835
      %s846 = scalar_lea.vmem %s1, 256
      %v847 = vld [vmem:[%s846] sm:$0xf]
      %v848 = vld [vmem:[%s846 + $0x4] sm:$0xf]
      %v849 = vld [vmem:[%s846 + $0x8] sm:$0xf]
      %v850 = vld [vmem:[%s846 + $0xc] sm:$0xf]
      %v851 = vld [vmem:[%s846 + $0x10] sm:$0xf]
      %v852 = vld [vmem:[%s846 + $0x14] sm:$0xf]
      %v853 = vld [vmem:[%s846 + $0x18] sm:$0xf]
      %v854 = vld [vmem:[%s846 + $0x1c] sm:$0xf]
      %v855 = vld [vmem:[%s846 + $0x20] sm:$0xf]
      %v856 = vld [vmem:[%s846 + $0x24] sm:$0xf]
      %v857 = vld [vmem:[%s846 + $0x28] sm:$0xf]
      %v858 = vld [vmem:[%s846 + $0x2c] sm:$0xf]
      %v859 = vld [vmem:[%s846 + $0x30] sm:$0xf]
      %v860 = vld [vmem:[%s846 + $0x34] sm:$0xf]
      %v861 = vld [vmem:[%s846 + $0x38] sm:$0xf]
      %v862 = vld [vmem:[%s846 + $0x3c] sm:$0xf]
      %v865 = vunpack.c.l.b16 %v680
      %v866 = vunpack.c.l.b16 %v681
      %v867 = vpack.c.b16 %v866, %v865
      %v885 = vunpack.c.l.b16 %v847
      %v886 = vunpack.c.l.b16 %v848
      %v887 = vunpack.c.l.b16 %v849
      %v888 = vunpack.c.l.b16 %v850
      %v889 = vunpack.c.l.b16 %v851
      %v890 = vunpack.c.l.b16 %v852
      %v891 = vunpack.c.l.b16 %v853
      %v892 = vunpack.c.l.b16 %v854
      %v893 = vunpack.c.l.b16 %v855
      %v894 = vunpack.c.l.b16 %v856
      %v895 = vunpack.c.l.b16 %v857
      %v896 = vunpack.c.l.b16 %v858
      %v897 = vunpack.c.l.b16 %v859
      %v898 = vunpack.c.l.b16 %v860
      %v899 = vunpack.c.l.b16 %v861
      %v900 = vunpack.c.l.b16 %v862
      %v901 = vpack.c.b16 %v886, %v885
      %v902 = vpack.c.b16 %v888, %v887
      %v903 = vpack.c.b16 %v890, %v889
      %v904 = vpack.c.b16 %v892, %v891
      %v905 = vpack.c.b16 %v894, %v893
      %v906 = vpack.c.b16 %v896, %v895
      %v907 = vpack.c.b16 %v898, %v897
      %v908 = vpack.c.b16 %v900, %v899
      %917 = vmatprep.subr.bf16.mxu0 0
      %918 = vmatpush1.bf16.msra.mxu0 %v901
      %919 = vmatprep.subr.bf16.mxu0 0
      %920 = vmatpush1.bf16.msra.mxu0 %v902
      %921 = vmatprep.subr.bf16.mxu0 0
      %922 = vmatpush1.bf16.msra.mxu0 %v903
      %923 = vmatprep.subr.bf16.mxu0 0
      %924 = vmatpush1.bf16.msra.mxu0 %v904
      %925 = vmatprep.subr.bf16.mxu0 0
      %926 = vmatpush1.bf16.msra.mxu0 %v905
      %927 = vmatprep.subr.bf16.mxu0 0
      %928 = vmatpush1.bf16.msra.mxu0 %v906
      %929 = vmatprep.subr.bf16.mxu0 0
      %930 = vmatpush1.bf16.msra.mxu0 %v907
      %931 = vmatprep.subr.bf16.mxu0 0
      %932 = vmatpush1.bf16.msra.mxu0 %v908
      %933 = vmatprep.subr.bf16.mxu0 0
      %934 = vmatpush1.bf16.msra.mxu0 0
      %935 = vmatprep.subr.bf16.mxu0 0
      %936 = vmatpush1.bf16.msra.mxu0 0
      %937 = vmatprep.subr.bf16.mxu0 0
      %938 = vmatpush1.bf16.msra.mxu0 0
      %939 = vmatprep.subr.bf16.mxu0 0
      %940 = vmatpush1.bf16.msra.mxu0 0
      %941 = vmatprep.subr.bf16.mxu0 0
      %942 = vmatpush1.bf16.msra.mxu0 0
      %943 = vmatprep.subr.bf16.mxu0 0
      %944 = vmatpush1.bf16.msra.mxu0 0
      %945 = vmatprep.subr.bf16.mxu0 0
      %946 = vmatpush1.bf16.msra.mxu0 0
      %947 = vmatprep.subr.bf16.mxu0 0
      %948 = vmatpush1.bf16.msra.mxu0 0
      %949 = vmatprep.mubr.bf16.mxu0 0
      %950 = vmatmul.mubr.bf16.gmra.mrb[0].mxu0 %v718
      %v951 = vpop.f32.mrb[0].mxu0
      %v952 = vadd.f32 0.0, %v951
      %v953 = vpop.f32.mrb[0].mxu0
      %v954 = vpop.f32.mrb[0].mxu0
      %v955 = vadd.f32 0.0, %v954
      %v956 = vpop.f32.mrb[0].mxu0
      %957 = vmatprep.mubr.bf16.mxu0 0
      %958 = vmatmul.mubr.bf16.gmra.mrb[0].mxu0 %v719
      %v959 = vpop.f32.mrb[0].mxu0
      %v960 = vadd.f32 0.0, %v959
      %v961 = vpop.f32.mrb[0].mxu0
      %v962 = vpop.f32.mrb[0].mxu0
      %v963 = vadd.f32 0.0, %v962
      %v964 = vpop.f32.mrb[0].mxu0
      %965 = vmatprep.mubr.bf16.mxu0 0
      %966 = vmatmul.mubr.bf16.gmra.mrb[0].mxu0 %v720
      %v967 = vpop.f32.mrb[0].mxu0
      %v968 = vadd.f32 0.0, %v967
      %v969 = vpop.f32.mrb[0].mxu0
      %v970 = vpop.f32.mrb[0].mxu0
      %v971 = vadd.f32 0.0, %v970
      %v972 = vpop.f32.mrb[0].mxu0
      %973 = vmatprep.mubr.bf16.mxu0 0
      %974 = vmatmul.mubr.bf16.gmra.mrb[0].mxu0 %v867
      %v975 = vpop.f32.mrb[0].mxu0
      %v976 = vadd.f32 0.0, %v975
      %v977 = vpop.f32.mrb[0].mxu0
      %v978 = vpop.f32.mrb[0].mxu0
      %v979 = vadd.f32 0.0, %v978
      %v980 = vpop.f32.mrb[0].mxu0
      %981 = vdwg.mxu0
      %v982 = vadd.f32 %v838, %v952
      %v983 = vadd.f32 %v839, %v955
      %v984 = vadd.f32 %v840, %v960
      %v985 = vadd.f32 %v841, %v963
      %v986 = vadd.f32 %v842, %v968
      %v987 = vadd.f32 %v843, %v971
      %v988 = vadd.f32 %v844, %v976
      %v989 = vadd.f32 %v845, %v979
      %s990 = scalar_lea.vmem %s1, 448
      %v991 = vld [vmem:[%s990] sm:$0xf]
      %v992 = vld [vmem:[%s990 + $0x4] sm:$0xf]
      %v993 = vld [vmem:[%s990 + $0x8] sm:$0xf]
      %v994 = vld [vmem:[%s990 + $0xc] sm:$0xf]
      %v995 = vld [vmem:[%s990 + $0x10] sm:$0xf]
      %v996 = vld [vmem:[%s990 + $0x14] sm:$0xf]
      %v997 = vld [vmem:[%s990 + $0x18] sm:$0xf]
      %v998 = vld [vmem:[%s990 + $0x1c] sm:$0xf]
      %v999 = vld [vmem:[%s990 + $0x20] sm:$0xf]
      %v1000 = vld [vmem:[%s990 + $0x24] sm:$0xf]
      %v1001 = vld [vmem:[%s990 + $0x28] sm:$0xf]
      %v1002 = vld [vmem:[%s990 + $0x2c] sm:$0xf]
      %v1003 = vld [vmem:[%s990 + $0x30] sm:$0xf]
      %v1004 = vld [vmem:[%s990 + $0x34] sm:$0xf]
      %v1005 = vld [vmem:[%s990 + $0x38] sm:$0xf]
      %v1006 = vld [vmem:[%s990 + $0x3c] sm:$0xf]
      %v1009 = vunpack.c.l.b16 %v682
      %v1010 = vunpack.c.l.b16 %v683
      %v1011 = vpack.c.b16 %v1010, %v1009
      %v1029 = vunpack.c.l.b16 %v991
      %v1030 = vunpack.c.l.b16 %v992
      %v1031 = vunpack.c.l.b16 %v993
      %v1032 = vunpack.c.l.b16 %v994
      %v1033 = vunpack.c.l.b16 %v995
      %v1034 = vunpack.c.l.b16 %v996
      %v1035 = vunpack.c.l.b16 %v997
      %v1036 = vunpack.c.l.b16 %v998
      %v1037 = vunpack.c.l.b16 %v999
      %v1038 = vunpack.c.l.b16 %v1000
      %v1039 = vunpack.c.l.b16 %v1001
      %v1040 = vunpack.c.l.b16 %v1002
      %v1041 = vunpack.c.l.b16 %v1003
      %v1042 = vunpack.c.l.b16 %v1004
      %v1043 = vunpack.c.l.b16 %v1005
      %v1044 = vunpack.c.l.b16 %v1006
      %v1045 = vpack.c.b16 %v1030, %v1029
      %v1046 = vpack.c.b16 %v1032, %v1031
      %v1047 = vpack.c.b16 %v1034, %v1033
      %v1048 = vpack.c.b16 %v1036, %v1035
      %v1049 = vpack.c.b16 %v1038, %v1037
      %v1050 = vpack.c.b16 %v1040, %v1039
      %v1051 = vpack.c.b16 %v1042, %v1041
      %v1052 = vpack.c.b16 %v1044, %v1043
      %1061 = vmatprep.subr.bf16.mxu0 0
      %1062 = vmatpush1.bf16.msra.mxu0 %v1045
      %1063 = vmatprep.subr.bf16.mxu0 0
      %1064 = vmatpush1.bf16.msra.mxu0 %v1046
      %1065 = vmatprep.subr.bf16.mxu0 0
      %1066 = vmatpush1.bf16.msra.mxu0 %v1047
      %1067 = vmatprep.subr.bf16.mxu0 0
      %1068 = vmatpush1.bf16.msra.mxu0 %v1048
      %1069 = vmatprep.subr.bf16.mxu0 0
      %1070 = vmatpush1.bf16.msra.mxu0 %v1049
      %1071 = vmatprep.subr.bf16.mxu0 0
      %1072 = vmatpush1.bf16.msra.mxu0 %v1050
      %1073 = vmatprep.subr.bf16.mxu0 0
      %1074 = vmatpush1.bf16.msra.mxu0 %v1051
      %1075 = vmatprep.subr.bf16.mxu0 0
      %1076 = vmatpush1.bf16.msra.mxu0 %v1052
      %1077 = vmatprep.subr.bf16.mxu0 0
      %1078 = vmatpush1.bf16.msra.mxu0 0
      %1079 = vmatprep.subr.bf16.mxu0 0
      %1080 = vmatpush1.bf16.msra.mxu0 0
      %1081 = vmatprep.subr.bf16.mxu0 0
      %1082 = vmatpush1.bf16.msra.mxu0 0
      %1083 = vmatprep.subr.bf16.mxu0 0
      %1084 = vmatpush1.bf16.msra.mxu0 0
      %1085 = vmatprep.subr.bf16.mxu0 0
      %1086 = vmatpush1.bf16.msra.mxu0 0
      %1087 = vmatprep.subr.bf16.mxu0 0
      %1088 = vmatpush1.bf16.msra.mxu0 0
      %1089 = vmatprep.subr.bf16.mxu0 0
      %1090 = vmatpush1.bf16.msra.mxu0 0
      %1091 = vmatprep.subr.bf16.mxu0 0
      %1092 = vmatpush1.bf16.msra.mxu0 0
      %1093 = vmatprep.mubr.bf16.mxu0 0
      %1094 = vmatmul.mubr.bf16.gmra.mrb[0].mxu0 %v719
      %v1095 = vpop.f32.mrb[0].mxu0
      %v1096 = vadd.f32 0.0, %v1095
      %v1097 = vpop.f32.mrb[0].mxu0
      %v1098 = vpop.f32.mrb[0].mxu0
      %v1099 = vadd.f32 0.0, %v1098
      %v1100 = vpop.f32.mrb[0].mxu0
      %1101 = vmatprep.mubr.bf16.mxu0 0
      %1102 = vmatmul.mubr.bf16.gmra.mrb[0].mxu0 %v720
      %v1103 = vpop.f32.mrb[0].mxu0
      %v1104 = vadd.f32 0.0, %v1103
      %v1105 = vpop.f32.mrb[0].mxu0
      %v1106 = vpop.f32.mrb[0].mxu0
      %v1107 = vadd.f32 0.0, %v1106
      %v1108 = vpop.f32.mrb[0].mxu0
      %1109 = vmatprep.mubr.bf16.mxu0 0
      %1110 = vmatmul.mubr.bf16.gmra.mrb[0].mxu0 %v867
      %v1111 = vpop.f32.mrb[0].mxu0
      %v1112 = vadd.f32 0.0, %v1111
      %v1113 = vpop.f32.mrb[0].mxu0
      %v1114 = vpop.f32.mrb[0].mxu0
      %v1115 = vadd.f32 0.0, %v1114
      %v1116 = vpop.f32.mrb[0].mxu0
      %1117 = vmatprep.mubr.bf16.mxu0 0
      %1118 = vmatmul.mubr.bf16.gmra.mrb[0].mxu0 %v1011
      %v1119 = vpop.f32.mrb[0].mxu0
      %v1120 = vadd.f32 0.0, %v1119
      %v1121 = vpop.f32.mrb[0].mxu0
      %v1122 = vpop.f32.mrb[0].mxu0
      %v1123 = vadd.f32 0.0, %v1122
      %v1124 = vpop.f32.mrb[0].mxu0
      %1125 = vdwg.mxu0
      %v1126 = vadd.f32 %v982, %v1096
      %v1127 = vadd.f32 %v983, %v1099
      %v1128 = vadd.f32 %v984, %v1104
      %v1129 = vadd.f32 %v985, %v1107
      %v1130 = vadd.f32 %v986, %v1112
      %v1131 = vadd.f32 %v987, %v1115
      %v1132 = vadd.f32 %v988, %v1120
      %v1133 = vadd.f32 %v989, %v1123
      %s1134 = scalar_lea.vmem %s219, 96
      %v1135 = vld [vmem:[%s1134] sm:$0xf]
      %v1136 = vld [vmem:[%s1134 + $0x4] sm:$0xf]
      %v1137 = vld [vmem:[%s1134 + $0x8] sm:$0xf]
      %v1138 = vld [vmem:[%s1134 + $0xc] sm:$0xf]
      %v1139 = vld [vmem:[%s1134 + $0x10] sm:$0xf]
      %v1140 = vld [vmem:[%s1134 + $0x14] sm:$0xf]
      %v1141 = vld [vmem:[%s1134 + $0x18] sm:$0xf]
      %v1142 = vld [vmem:[%s1134 + $0x1c] sm:$0xf]
      %v1143 = vld [vmem:[%s1134 + $0x20] sm:$0xf]
      %v1144 = vld [vmem:[%s1134 + $0x24] sm:$0xf]
      %v1145 = vld [vmem:[%s1134 + $0x28] sm:$0xf]
      %v1146 = vld [vmem:[%s1134 + $0x2c] sm:$0xf]
      %s1147 = scalar_lea.vmem %s1, 128
      %v1148 = vld [vmem:[%s1147] sm:$0xf]
      %v1149 = vld [vmem:[%s1147 + $0x4] sm:$0xf]
      %v1150 = vld [vmem:[%s1147 + $0x8] sm:$0xf]
      %v1151 = vld [vmem:[%s1147 + $0xc] sm:$0xf]
      %v1152 = vld [vmem:[%s1147 + $0x10] sm:$0xf]
      %v1153 = vld [vmem:[%s1147 + $0x14] sm:$0xf]
      %v1154 = vld [vmem:[%s1147 + $0x18] sm:$0xf]
      %v1155 = vld [vmem:[%s1147 + $0x1c] sm:$0xf]
      %v1156 = vld [vmem:[%s1147 + $0x20] sm:$0xf]
      %v1157 = vld [vmem:[%s1147 + $0x24] sm:$0xf]
      %v1158 = vld [vmem:[%s1147 + $0x28] sm:$0xf]
      %v1159 = vld [vmem:[%s1147 + $0x2c] sm:$0xf]
      %v1160 = vld [vmem:[%s1147 + $0x30] sm:$0xf]
      %v1161 = vld [vmem:[%s1147 + $0x34] sm:$0xf]
      %v1162 = vld [vmem:[%s1147 + $0x38] sm:$0xf]
      %v1163 = vld [vmem:[%s1147 + $0x3c] sm:$0xf]
      %v1172 = vunpack.c.l.b16 %v1135
      %v1173 = vunpack.c.l.b16 %v1136
      %v1174 = vunpack.c.l.b16 %v1137
      %v1175 = vunpack.c.l.b16 %v1138
      %v1176 = vunpack.c.l.b16 %v1139
      %v1177 = vunpack.c.l.b16 %v1140
      %v1178 = vunpack.c.l.b16 %v1141
      %v1179 = vunpack.c.l.b16 %v1142
      %v1180 = vpack.c.b16 %v1173, %v1172
      %v1181 = vpack.c.b16 %v1175, %v1174
      %v1182 = vpack.c.b16 %v1177, %v1176
      %v1183 = vpack.c.b16 %v1179, %v1178
      %v1204 = vunpack.c.l.b16 %v1148
      %v1205 = vunpack.c.l.b16 %v1149
      %v1206 = vunpack.c.l.b16 %v1150
      %v1207 = vunpack.c.l.b16 %v1151
      %v1208 = vunpack.c.l.b16 %v1152
      %v1209 = vunpack.c.l.b16 %v1153
      %v1210 = vunpack.c.l.b16 %v1154
      %v1211 = vunpack.c.l.b16 %v1155
      %v1212 = vunpack.c.l.b16 %v1156
      %v1213 = vunpack.c.l.b16 %v1157
      %v1214 = vunpack.c.l.b16 %v1158
      %v1215 = vunpack.c.l.b16 %v1159
      %v1216 = vunpack.c.l.b16 %v1160
      %v1217 = vunpack.c.l.b16 %v1161
      %v1218 = vunpack.c.l.b16 %v1162
      %v1219 = vunpack.c.l.b16 %v1163
      %v1220 = vpack.c.b16 %v1205, %v1204
      %v1221 = vpack.c.b16 %v1207, %v1206
      %v1222 = vpack.c.b16 %v1209, %v1208
      %v1223 = vpack.c.b16 %v1211, %v1210
      %v1224 = vpack.c.b16 %v1213, %v1212
      %v1225 = vpack.c.b16 %v1215, %v1214
      %v1226 = vpack.c.b16 %v1217, %v1216
      %v1227 = vpack.c.b16 %v1219, %v1218
      %1236 = vmatprep.subr.bf16.mxu0 0
      %1237 = vmatpush1.bf16.msra.mxu0 %v1220
      %1238 = vmatprep.subr.bf16.mxu0 0
      %1239 = vmatpush1.bf16.msra.mxu0 %v1221
      %1240 = vmatprep.subr.bf16.mxu0 0
      %1241 = vmatpush1.bf16.msra.mxu0 %v1222
      %1242 = vmatprep.subr.bf16.mxu0 0
      %1243 = vmatpush1.bf16.msra.mxu0 %v1223
      %1244 = vmatprep.subr.bf16.mxu0 0
      %1245 = vmatpush1.bf16.msra.mxu0 %v1224
      %1246 = vmatprep.subr.bf16.mxu0 0
      %1247 = vmatpush1.bf16.msra.mxu0 %v1225
      %1248 = vmatprep.subr.bf16.mxu0 0
      %1249 = vmatpush1.bf16.msra.mxu0 %v1226
      %1250 = vmatprep.subr.bf16.mxu0 0
      %1251 = vmatpush1.bf16.msra.mxu0 %v1227
      %1252 = vmatprep.subr.bf16.mxu0 0
      %1253 = vmatpush1.bf16.msra.mxu0 0
      %1254 = vmatprep.subr.bf16.mxu0 0
      %1255 = vmatpush1.bf16.msra.mxu0 0
      %1256 = vmatprep.subr.bf16.mxu0 0
      %1257 = vmatpush1.bf16.msra.mxu0 0
      %1258 = vmatprep.subr.bf16.mxu0 0
      %1259 = vmatpush1.bf16.msra.mxu0 0
      %1260 = vmatprep.subr.bf16.mxu0 0
      %1261 = vmatpush1.bf16.msra.mxu0 0
      %1262 = vmatprep.subr.bf16.mxu0 0
      %1263 = vmatpush1.bf16.msra.mxu0 0
      %1264 = vmatprep.subr.bf16.mxu0 0
      %1265 = vmatpush1.bf16.msra.mxu0 0
      %1266 = vmatprep.subr.bf16.mxu0 0
      %1267 = vmatpush1.bf16.msra.mxu0 0
      %1268 = vmatprep.mubr.bf16.mxu0 0
      %1269 = vmatmul.mubr.bf16.gmra.mrb[0].mxu0 %v1180
      %v1270 = vpop.f32.mrb[0].mxu0
      %v1271 = vadd.f32 0.0, %v1270
      %v1272 = vpop.f32.mrb[0].mxu0
      %v1273 = vpop.f32.mrb[0].mxu0
      %v1274 = vadd.f32 0.0, %v1273
      %v1275 = vpop.f32.mrb[0].mxu0
      %1276 = vmatprep.mubr.bf16.mxu0 0
      %1277 = vmatmul.mubr.bf16.gmra.mrb[0].mxu0 %v1181
      %v1278 = vpop.f32.mrb[0].mxu0
      %v1279 = vadd.f32 0.0, %v1278
      %v1280 = vpop.f32.mrb[0].mxu0
      %v1281 = vpop.f32.mrb[0].mxu0
      %v1282 = vadd.f32 0.0, %v1281
      %v1283 = vpop.f32.mrb[0].mxu0
      %1284 = vmatprep.mubr.bf16.mxu0 0
      %1285 = vmatmul.mubr.bf16.gmra.mrb[0].mxu0 %v1182
      %v1286 = vpop.f32.mrb[0].mxu0
      %v1287 = vadd.f32 0.0, %v1286
      %v1288 = vpop.f32.mrb[0].mxu0
      %v1289 = vpop.f32.mrb[0].mxu0
      %v1290 = vadd.f32 0.0, %v1289
      %v1291 = vpop.f32.mrb[0].mxu0
      %1292 = vmatprep.mubr.bf16.mxu0 0
      %1293 = vmatmul.mubr.bf16.gmra.mrb[0].mxu0 %v1183
      %v1294 = vpop.f32.mrb[0].mxu0
      %v1295 = vadd.f32 0.0, %v1294
      %v1296 = vpop.f32.mrb[0].mxu0
      %v1297 = vpop.f32.mrb[0].mxu0
      %v1298 = vadd.f32 0.0, %v1297
      %v1299 = vpop.f32.mrb[0].mxu0
      %1300 = vdwg.mxu0
      %v1301 = vadd.f32 %v1126, %v1271
      %v1302 = vadd.f32 %v1127, %v1274
      %v1303 = vadd.f32 %v1128, %v1279
      %v1304 = vadd.f32 %v1129, %v1282
      %v1305 = vadd.f32 %v1130, %v1287
      %v1306 = vadd.f32 %v1131, %v1290
      %v1307 = vadd.f32 %v1132, %v1295
      %v1308 = vadd.f32 %v1133, %v1298
      %s1309 = scalar_lea.vmem %s1, 320
      %v1310 = vld [vmem:[%s1309] sm:$0xf]
      %v1311 = vld [vmem:[%s1309 + $0x4] sm:$0xf]
      %v1312 = vld [vmem:[%s1309 + $0x8] sm:$0xf]
      %v1313 = vld [vmem:[%s1309 + $0xc] sm:$0xf]
      %v1314 = vld [vmem:[%s1309 + $0x10] sm:$0xf]
      %v1315 = vld [vmem:[%s1309 + $0x14] sm:$0xf]
      %v1316 = vld [vmem:[%s1309 + $0x18] sm:$0xf]
      %v1317 = vld [vmem:[%s1309 + $0x1c] sm:$0xf]
      %v1318 = vld [vmem:[%s1309 + $0x20] sm:$0xf]
      %v1319 = vld [vmem:[%s1309 + $0x24] sm:$0xf]
      %v1320 = vld [vmem:[%s1309 + $0x28] sm:$0xf]
      %v1321 = vld [vmem:[%s1309 + $0x2c] sm:$0xf]
      %v1322 = vld [vmem:[%s1309 + $0x30] sm:$0xf]
      %v1323 = vld [vmem:[%s1309 + $0x34] sm:$0xf]
      %v1324 = vld [vmem:[%s1309 + $0x38] sm:$0xf]
      %v1325 = vld [vmem:[%s1309 + $0x3c] sm:$0xf]
      %v1328 = vunpack.c.l.b16 %v1143
      %v1329 = vunpack.c.l.b16 %v1144
      %v1330 = vpack.c.b16 %v1329, %v1328
      %v1348 = vunpack.c.l.b16 %v1310
      %v1349 = vunpack.c.l.b16 %v1311
      %v1350 = vunpack.c.l.b16 %v1312
      %v1351 = vunpack.c.l.b16 %v1313
      %v1352 = vunpack.c.l.b16 %v1314
      %v1353 = vunpack.c.l.b16 %v1315
      %v1354 = vunpack.c.l.b16 %v1316
      %v1355 = vunpack.c.l.b16 %v1317
      %v1356 = vunpack.c.l.b16 %v1318
      %v1357 = vunpack.c.l.b16 %v1319
      %v1358 = vunpack.c.l.b16 %v1320
      %v1359 = vunpack.c.l.b16 %v1321
      %v1360 = vunpack.c.l.b16 %v1322
      %v1361 = vunpack.c.l.b16 %v1323
      %v1362 = vunpack.c.l.b16 %v1324
      %v1363 = vunpack.c.l.b16 %v1325
      %v1364 = vpack.c.b16 %v1349, %v1348
      %v1365 = vpack.c.b16 %v1351, %v1350
      %v1366 = vpack.c.b16 %v1353, %v1352
      %v1367 = vpack.c.b16 %v1355, %v1354
      %v1368 = vpack.c.b16 %v1357, %v1356
      %v1369 = vpack.c.b16 %v1359, %v1358
      %v1370 = vpack.c.b16 %v1361, %v1360
      %v1371 = vpack.c.b16 %v1363, %v1362
      %1380 = vmatprep.subr.bf16.mxu0 0
      %1381 = vmatpush1.bf16.msra.mxu0 %v1364
      %1382 = vmatprep.subr.bf16.mxu0 0
      %1383 = vmatpush1.bf16.msra.mxu0 %v1365
      %1384 = vmatprep.subr.bf16.mxu0 0
      %1385 = vmatpush1.bf16.msra.mxu0 %v1366
      %1386 = vmatprep.subr.bf16.mxu0 0
      %1387 = vmatpush1.bf16.msra.mxu0 %v1367
      %1388 = vmatprep.subr.bf16.mxu0 0
      %1389 = vmatpush1.bf16.msra.mxu0 %v1368
      %1390 = vmatprep.subr.bf16.mxu0 0
      %1391 = vmatpush1.bf16.msra.mxu0 %v1369
      %1392 = vmatprep.subr.bf16.mxu0 0
      %1393 = vmatpush1.bf16.msra.mxu0 %v1370
      %1394 = vmatprep.subr.bf16.mxu0 0
      %1395 = vmatpush1.bf16.msra.mxu0 %v1371
      %1396 = vmatprep.subr.bf16.mxu0 0
      %1397 = vmatpush1.bf16.msra.mxu0 0
      %1398 = vmatprep.subr.bf16.mxu0 0
      %1399 = vmatpush1.bf16.msra.mxu0 0
      %1400 = vmatprep.subr.bf16.mxu0 0
      %1401 = vmatpush1.bf16.msra.mxu0 0
      %1402 = vmatprep.subr.bf16.mxu0 0
      %1403 = vmatpush1.bf16.msra.mxu0 0
      %1404 = vmatprep.subr.bf16.mxu0 0
      %1405 = vmatpush1.bf16.msra.mxu0 0
      %1406 = vmatprep.subr.bf16.mxu0 0
      %1407 = vmatpush1.bf16.msra.mxu0 0
      %1408 = vmatprep.subr.bf16.mxu0 0
      %1409 = vmatpush1.bf16.msra.mxu0 0
      %1410 = vmatprep.subr.bf16.mxu0 0
      %1411 = vmatpush1.bf16.msra.mxu0 0
      %1412 = vmatprep.mubr.bf16.mxu0 0
      %1413 = vmatmul.mubr.bf16.gmra.mrb[0].mxu0 %v1181
      %v1414 = vpop.f32.mrb[0].mxu0
      %v1415 = vadd.f32 0.0, %v1414
      %v1416 = vpop.f32.mrb[0].mxu0
      %v1417 = vpop.f32.mrb[0].mxu0
      %v1418 = vadd.f32 0.0, %v1417
      %v1419 = vpop.f32.mrb[0].mxu0
      %1420 = vmatprep.mubr.bf16.mxu0 0
      %1421 = vmatmul.mubr.bf16.gmra.mrb[0].mxu0 %v1182
      %v1422 = vpop.f32.mrb[0].mxu0
      %v1423 = vadd.f32 0.0, %v1422
      %v1424 = vpop.f32.mrb[0].mxu0
      %v1425 = vpop.f32.mrb[0].mxu0
      %v1426 = vadd.f32 0.0, %v1425
      %v1427 = vpop.f32.mrb[0].mxu0
      %1428 = vmatprep.mubr.bf16.mxu0 0
      %1429 = vmatmul.mubr.bf16.gmra.mrb[0].mxu0 %v1183
      %v1430 = vpop.f32.mrb[0].mxu0
      %v1431 = vadd.f32 0.0, %v1430
      %v1432 = vpop.f32.mrb[0].mxu0
      %v1433 = vpop.f32.mrb[0].mxu0
      %v1434 = vadd.f32 0.0, %v1433
      %v1435 = vpop.f32.mrb[0].mxu0
      %1436 = vmatprep.mubr.bf16.mxu0 0
      %1437 = vmatmul.mubr.bf16.gmra.mrb[0].mxu0 %v1330
      %v1438 = vpop.f32.mrb[0].mxu0
      %v1439 = vadd.f32 0.0, %v1438
      %v1440 = vpop.f32.mrb[0].mxu0
      %v1441 = vpop.f32.mrb[0].mxu0
      %v1442 = vadd.f32 0.0, %v1441
      %v1443 = vpop.f32.mrb[0].mxu0
      %1444 = vdwg.mxu0
      %v1445 = vadd.f32 %v1301, %v1415
      %v1446 = vadd.f32 %v1302, %v1418
      %v1447 = vadd.f32 %v1303, %v1423
      %v1448 = vadd.f32 %v1304, %v1426
      %v1449 = vadd.f32 %v1305, %v1431
      %v1450 = vadd.f32 %v1306, %v1434
      %v1451 = vadd.f32 %v1307, %v1439
      %v1452 = vadd.f32 %v1308, %v1442
      %s1453 = scalar_lea.vmem %s1, 512
      %v1454 = vld [vmem:[%s1453] sm:$0xf]
      %v1455 = vld [vmem:[%s1453 + $0x4] sm:$0xf]
      %v1456 = vld [vmem:[%s1453 + $0x8] sm:$0xf]
      %v1457 = vld [vmem:[%s1453 + $0xc] sm:$0xf]
      %v1458 = vld [vmem:[%s1453 + $0x10] sm:$0xf]
      %v1459 = vld [vmem:[%s1453 + $0x14] sm:$0xf]
      %v1460 = vld [vmem:[%s1453 + $0x18] sm:$0xf]
      %v1461 = vld [vmem:[%s1453 + $0x1c] sm:$0xf]
      %v1462 = vld [vmem:[%s1453 + $0x20] sm:$0xf]
      %v1463 = vld [vmem:[%s1453 + $0x24] sm:$0xf]
      %v1464 = vld [vmem:[%s1453 + $0x28] sm:$0xf]
      %v1465 = vld [vmem:[%s1453 + $0x2c] sm:$0xf]
      %v1466 = vld [vmem:[%s1453 + $0x30] sm:$0xf]
      %v1467 = vld [vmem:[%s1453 + $0x34] sm:$0xf]
      %v1468 = vld [vmem:[%s1453 + $0x38] sm:$0xf]
      %v1469 = vld [vmem:[%s1453 + $0x3c] sm:$0xf]
      %v1472 = vunpack.c.l.b16 %v1145
      %v1473 = vunpack.c.l.b16 %v1146
      %v1474 = vpack.c.b16 %v1473, %v1472
      %v1492 = vunpack.c.l.b16 %v1454
      %v1493 = vunpack.c.l.b16 %v1455
      %v1494 = vunpack.c.l.b16 %v1456
      %v1495 = vunpack.c.l.b16 %v1457
      %v1496 = vunpack.c.l.b16 %v1458
      %v1497 = vunpack.c.l.b16 %v1459
      %v1498 = vunpack.c.l.b16 %v1460
      %v1499 = vunpack.c.l.b16 %v1461
      %v1500 = vunpack.c.l.b16 %v1462
      %v1501 = vunpack.c.l.b16 %v1463
      %v1502 = vunpack.c.l.b16 %v1464
      %v1503 = vunpack.c.l.b16 %v1465
      %v1504 = vunpack.c.l.b16 %v1466
      %v1505 = vunpack.c.l.b16 %v1467
      %v1506 = vunpack.c.l.b16 %v1468
      %v1507 = vunpack.c.l.b16 %v1469
      %v1508 = vpack.c.b16 %v1493, %v1492
      %v1509 = vpack.c.b16 %v1495, %v1494
      %v1510 = vpack.c.b16 %v1497, %v1496
      %v1511 = vpack.c.b16 %v1499, %v1498
      %v1512 = vpack.c.b16 %v1501, %v1500
      %v1513 = vpack.c.b16 %v1503, %v1502
      %v1514 = vpack.c.b16 %v1505, %v1504
      %v1515 = vpack.c.b16 %v1507, %v1506
      %1524 = vmatprep.subr.bf16.mxu0 0
      %1525 = vmatpush1.bf16.msra.mxu0 %v1508
      %1526 = vmatprep.subr.bf16.mxu0 0
      %1527 = vmatpush1.bf16.msra.mxu0 %v1509
      %1528 = vmatprep.subr.bf16.mxu0 0
      %1529 = vmatpush1.bf16.msra.mxu0 %v1510
      %1530 = vmatprep.subr.bf16.mxu0 0
      %1531 = vmatpush1.bf16.msra.mxu0 %v1511
      %1532 = vmatprep.subr.bf16.mxu0 0
      %1533 = vmatpush1.bf16.msra.mxu0 %v1512
      %1534 = vmatprep.subr.bf16.mxu0 0
      %1535 = vmatpush1.bf16.msra.mxu0 %v1513
      %1536 = vmatprep.subr.bf16.mxu0 0
      %1537 = vmatpush1.bf16.msra.mxu0 %v1514
      %1538 = vmatprep.subr.bf16.mxu0 0
      %1539 = vmatpush1.bf16.msra.mxu0 %v1515
      %1540 = vmatprep.subr.bf16.mxu0 0
      %1541 = vmatpush1.bf16.msra.mxu0 0
      %1542 = vmatprep.subr.bf16.mxu0 0
      %1543 = vmatpush1.bf16.msra.mxu0 0
      %1544 = vmatprep.subr.bf16.mxu0 0
      %1545 = vmatpush1.bf16.msra.mxu0 0
      %1546 = vmatprep.subr.bf16.mxu0 0
      %1547 = vmatpush1.bf16.msra.mxu0 0
      %1548 = vmatprep.subr.bf16.mxu0 0
      %1549 = vmatpush1.bf16.msra.mxu0 0
      %1550 = vmatprep.subr.bf16.mxu0 0
      %1551 = vmatpush1.bf16.msra.mxu0 0
      %1552 = vmatprep.subr.bf16.mxu0 0
      %1553 = vmatpush1.bf16.msra.mxu0 0
      %1554 = vmatprep.subr.bf16.mxu0 0
      %1555 = vmatpush1.bf16.msra.mxu0 0
      %1556 = vmatprep.mubr.bf16.mxu0 0
      %1557 = vmatmul.mubr.bf16.gmra.mrb[0].mxu0 %v1182
      %v1558 = vpop.f32.mrb[0].mxu0
      %v1559 = vadd.f32 0.0, %v1558
      %v1560 = vpop.f32.mrb[0].mxu0
      %v1561 = vpop.f32.mrb[0].mxu0
      %v1562 = vadd.f32 0.0, %v1561
      %v1563 = vpop.f32.mrb[0].mxu0
      %1564 = vmatprep.mubr.bf16.mxu0 0
      %1565 = vmatmul.mubr.bf16.gmra.mrb[0].mxu0 %v1183
      %v1566 = vpop.f32.mrb[0].mxu0
      %v1567 = vadd.f32 0.0, %v1566
      %v1568 = vpop.f32.mrb[0].mxu0
      %v1569 = vpop.f32.mrb[0].mxu0
      %v1570 = vadd.f32 0.0, %v1569
      %v1571 = vpop.f32.mrb[0].mxu0
      %1572 = vmatprep.mubr.bf16.mxu0 0
      %1573 = vmatmul.mubr.bf16.gmra.mrb[0].mxu0 %v1330
      %v1574 = vpop.f32.mrb[0].mxu0
      %v1575 = vadd.f32 0.0, %v1574
      %v1576 = vpop.f32.mrb[0].mxu0
      %v1577 = vpop.f32.mrb[0].mxu0
      %v1578 = vadd.f32 0.0, %v1577
      %v1579 = vpop.f32.mrb[0].mxu0
      %1580 = vmatprep.mubr.bf16.mxu0 0
      %1581 = vmatmul.mubr.bf16.gmra.mrb[0].mxu0 %v1474
      %v1582 = vpop.f32.mrb[0].mxu0
      %v1583 = vadd.f32 0.0, %v1582
      %v1584 = vpop.f32.mrb[0].mxu0
      %v1585 = vpop.f32.mrb[0].mxu0
      %v1586 = vadd.f32 0.0, %v1585
      %v1587 = vpop.f32.mrb[0].mxu0
      %1588 = vdwg.mxu0
      %v1589 = vadd.f32 %v1445, %v1559
      %v1590 = vadd.f32 %v1446, %v1562
      %v1591 = vadd.f32 %v1447, %v1567
      %v1592 = vadd.f32 %v1448, %v1570
      %v1593 = vadd.f32 %v1449, %v1575
      %v1594 = vadd.f32 %v1450, %v1578
      %v1595 = vadd.f32 %v1451, %v1583
      %v1596 = vadd.f32 %v1452, %v1586
      %v1597 = vld [vmem:[%s2] sm:$0x1]
      %v1599 = vlaneseq
      %v1600 = vshrl.u32 %v1599, 7
      %v1601 = vsub.s32 0, %v1600
      %v1602 = vrot.slane %v1597, %v1601
      %v1604 = vadd.f32 %v1589, %v1602
      %v1605 = vadd.f32 %v1590, %v1602
      %v1606 = vadd.f32 %v1591, %v1602
      %v1607 = vadd.f32 %v1592, %v1602
      %v1608 = vadd.f32 %v1593, %v1602
      %v1609 = vadd.f32 %v1594, %v1602
      %v1610 = vadd.f32 %v1595, %v1602
      %v1611 = vadd.f32 %v1596, %v1602
      %v1612 = vmax.f32 %v1604, 0.0
      %v1613 = vmax.f32 %v1605, 0.0
      %v1614 = vmax.f32 %v1606, 0.0
      %v1615 = vmax.f32 %v1607, 0.0
      %v1616 = vmax.f32 %v1608, 0.0
      %v1617 = vmax.f32 %v1609, 0.0
      %v1618 = vmax.f32 %v1610, 0.0
      %v1619 = vmax.f32 %v1611, 0.0
      %v1620 = vpack.c.bf16 %v1613, %v1612
      %v1621 = vpack.c.bf16 %v1615, %v1614
      %v1622 = vpack.c.bf16 %v1617, %v1616
      %v1623 = vpack.c.bf16 %v1619, %v1618
      %v1624 = vld [vmem:[%s3] sm:$0xf]
      %v1625 = vld [vmem:[%s3 + $0x4] sm:$0xf]
      %v1626 = vld [vmem:[%s3 + $0x8] sm:$0xf]
      %v1627 = vld [vmem:[%s3 + $0xc] sm:$0xf]
      %v1628 = vld [vmem:[%s3 + $0x10] sm:$0xf]
      %v1629 = vld [vmem:[%s3 + $0x14] sm:$0xf]
      %v1630 = vld [vmem:[%s3 + $0x18] sm:$0xf]
      %v1631 = vld [vmem:[%s3 + $0x1c] sm:$0xf]
      %v1632 = vld [vmem:[%s3 + $0x20] sm:$0xf]
      %v1633 = vld [vmem:[%s3 + $0x24] sm:$0xf]
      %v1634 = vld [vmem:[%s3 + $0x28] sm:$0xf]
      %v1635 = vld [vmem:[%s3 + $0x2c] sm:$0xf]
      %v1636 = vld [vmem:[%s3 + $0x30] sm:$0xf]
      %v1637 = vld [vmem:[%s3 + $0x34] sm:$0xf]
      %v1638 = vld [vmem:[%s3 + $0x38] sm:$0xf]
      %v1639 = vld [vmem:[%s3 + $0x3c] sm:$0xf]
      %v1640 = vld [vmem:[%s4] sm:$0x1]
      %v1642 = vlaneseq
      %v1643 = vshrl.u32 %v1642, 7
      %v1644 = vsub.s32 0, %v1643
      %v1645 = vrot.slane %v1640, %v1644
      %v1663 = vunpack.c.l.b16 %v1624
      %v1664 = vunpack.c.l.b16 %v1625
      %v1665 = vunpack.c.l.b16 %v1626
      %v1666 = vunpack.c.l.b16 %v1627
      %v1667 = vunpack.c.l.b16 %v1628
      %v1668 = vunpack.c.l.b16 %v1629
      %v1669 = vunpack.c.l.b16 %v1630
      %v1670 = vunpack.c.l.b16 %v1631
      %v1671 = vunpack.c.l.b16 %v1632
      %v1672 = vunpack.c.l.b16 %v1633
      %v1673 = vunpack.c.l.b16 %v1634
      %v1674 = vunpack.c.l.b16 %v1635
      %v1675 = vunpack.c.l.b16 %v1636
      %v1676 = vunpack.c.l.b16 %v1637
      %v1677 = vunpack.c.l.b16 %v1638
      %v1678 = vunpack.c.l.b16 %v1639
      %v1679 = vpack.c.b16 %v1664, %v1663
      %v1680 = vpack.c.b16 %v1666, %v1665
      %v1681 = vpack.c.b16 %v1668, %v1667
      %v1682 = vpack.c.b16 %v1670, %v1669
      %v1683 = vpack.c.b16 %v1672, %v1671
      %v1684 = vpack.c.b16 %v1674, %v1673
      %v1685 = vpack.c.b16 %v1676, %v1675
      %v1686 = vpack.c.b16 %v1678, %v1677
      %1695 = vmatprep.subr.bf16.mxu0 0
      %1696 = vmatpush1.bf16.msra.mxu0 %v1679
      %1697 = vmatprep.subr.bf16.mxu0 0
      %1698 = vmatpush1.bf16.msra.mxu0 %v1680
      %1699 = vmatprep.subr.bf16.mxu0 0
      %1700 = vmatpush1.bf16.msra.mxu0 %v1681
      %1701 = vmatprep.subr.bf16.mxu0 0
      %1702 = vmatpush1.bf16.msra.mxu0 %v1682
      %1703 = vmatprep.subr.bf16.mxu0 0
      %1704 = vmatpush1.bf16.msra.mxu0 %v1683
      %1705 = vmatprep.subr.bf16.mxu0 0
      %1706 = vmatpush1.bf16.msra.mxu0 %v1684
      %1707 = vmatprep.subr.bf16.mxu0 0
      %1708 = vmatpush1.bf16.msra.mxu0 %v1685
      %1709 = vmatprep.subr.bf16.mxu0 0
      %1710 = vmatpush1.bf16.msra.mxu0 %v1686
      %1711 = vmatprep.subr.bf16.mxu0 0
      %1712 = vmatpush1.bf16.msra.mxu0 0
      %1713 = vmatprep.subr.bf16.mxu0 0
      %1714 = vmatpush1.bf16.msra.mxu0 0
      %1715 = vmatprep.subr.bf16.mxu0 0
      %1716 = vmatpush1.bf16.msra.mxu0 0
      %1717 = vmatprep.subr.bf16.mxu0 0
      %1718 = vmatpush1.bf16.msra.mxu0 0
      %1719 = vmatprep.subr.bf16.mxu0 0
      %1720 = vmatpush1.bf16.msra.mxu0 0
      %1721 = vmatprep.subr.bf16.mxu0 0
      %1722 = vmatpush1.bf16.msra.mxu0 0
      %1723 = vmatprep.subr.bf16.mxu0 0
      %1724 = vmatpush1.bf16.msra.mxu0 0
      %1725 = vmatprep.subr.bf16.mxu0 0
      %1726 = vmatpush1.bf16.msra.mxu0 0
      %1727 = vmatprep.mubr.bf16.mxu0 0
      %1728 = vmatmul.mubr.bf16.gmra.mrb[0].mxu0 %v1620
      %v1729 = vpop.f32.mrb[0].mxu0
      %v1730 = vadd.f32 %v1645, %v1729
      %v1731 = vpop.f32.mrb[0].mxu0
      %v1732 = vpop.f32.mrb[0].mxu0
      %v1733 = vadd.f32 %v1645, %v1732
      %v1734 = vpop.f32.mrb[0].mxu0
      %1735 = vmatprep.mubr.bf16.mxu0 0
      %1736 = vmatmul.mubr.bf16.gmra.mrb[0].mxu0 %v1621
      %v1737 = vpop.f32.mrb[0].mxu0
      %v1738 = vadd.f32 %v1645, %v1737
      %v1739 = vpop.f32.mrb[0].mxu0
      %v1740 = vpop.f32.mrb[0].mxu0
      %v1741 = vadd.f32 %v1645, %v1740
      %v1742 = vpop.f32.mrb[0].mxu0
      %1743 = vmatprep.mubr.bf16.mxu0 0
      %1744 = vmatmul.mubr.bf16.gmra.mrb[0].mxu0 %v1622
      %v1745 = vpop.f32.mrb[0].mxu0
      %v1746 = vadd.f32 %v1645, %v1745
      %v1747 = vpop.f32.mrb[0].mxu0
      %v1748 = vpop.f32.mrb[0].mxu0
      %v1749 = vadd.f32 %v1645, %v1748
      %v1750 = vpop.f32.mrb[0].mxu0
      %1751 = vmatprep.mubr.bf16.mxu0 0
      %1752 = vmatmul.mubr.bf16.gmra.mrb[0].mxu0 %v1623
      %v1753 = vpop.f32.mrb[0].mxu0
      %v1754 = vadd.f32 %v1645, %v1753
      %v1755 = vpop.f32.mrb[0].mxu0
      %v1756 = vpop.f32.mrb[0].mxu0
      %v1757 = vadd.f32 %v1645, %v1756
      %v1758 = vpop.f32.mrb[0].mxu0
      %1759 = vdwg.mxu0
      %v1760 = vunpack.c.l.bf16 %v674
      %v1761 = vunpack.c.l.bf16 %v675
      %v1762 = vunpack.c.l.bf16 %v676
      %v1763 = vunpack.c.l.bf16 %v677
      %v1764 = vunpack.c.l.bf16 %v678
      %v1765 = vunpack.c.l.bf16 %v679
      %v1766 = vunpack.c.l.bf16 %v680
      %v1767 = vunpack.c.l.bf16 %v681
      %v1768 = vadd.f32 %v1730, %v1760
      %v1769 = vadd.f32 %v1733, %v1761
      %v1770 = vadd.f32 %v1738, %v1762
      %v1771 = vadd.f32 %v1741, %v1763
      %v1772 = vadd.f32 %v1746, %v1764
      %v1773 = vadd.f32 %v1749, %v1765
      %v1774 = vadd.f32 %v1754, %v1766
      %v1775 = vadd.f32 %v1757, %v1767
      %v1776 = vmax.f32 %v1768, 0.0
      %v1777 = vmax.f32 %v1769, 0.0
      %v1778 = vmax.f32 %v1770, 0.0
      %v1779 = vmax.f32 %v1771, 0.0
      %v1780 = vmax.f32 %v1772, 0.0
      %v1781 = vmax.f32 %v1773, 0.0
      %v1782 = vmax.f32 %v1774, 0.0
      %v1783 = vmax.f32 %v1775, 0.0
      %v1784 = vpack.c.bf16 %v1777, %v1776
      %v1785 = vpack.c.bf16 %v1779, %v1778
      %v1786 = vpack.c.bf16 %v1781, %v1780
      %v1787 = vpack.c.bf16 %v1783, %v1782
      %v1792 = vunpack.c.l.b16 %v1784
      %v1793 = vunpack.c.h.b16 %v1784
      %v1794 = vunpack.c.l.b16 %v1785
      %v1795 = vunpack.c.h.b16 %v1785
      %v1796 = vunpack.c.l.b16 %v1786
      %v1797 = vunpack.c.h.b16 %v1786
      %v1798 = vunpack.c.l.b16 %v1787
      %v1799 = vunpack.c.h.b16 %v1787
      %v1800 = vpack.c.b16 %v1792, %v1792
      %v1801 = vpack.c.b16 %v1793, %v1793
      %v1802 = vpack.c.b16 %v1794, %v1794
      %v1803 = vpack.c.b16 %v1795, %v1795
      %v1804 = vpack.c.b16 %v1796, %v1796
      %v1805 = vpack.c.b16 %v1797, %v1797
      %v1806 = vpack.c.b16 %v1798, %v1798
      %v1807 = vpack.c.b16 %v1799, %v1799
      %1816 = vst [vmem:[%s224] sm:$0xf] %v1800
      %1817 = vst [vmem:[%s224 + $0x4] sm:$0xf] %v1801
      %1818 = vst [vmem:[%s224 + $0x8] sm:$0xf] %v1802
      %1819 = vst [vmem:[%s224 + $0xc] sm:$0xf] %v1803
      %1820 = vst [vmem:[%s224 + $0x10] sm:$0xf] %v1804
      %1821 = vst [vmem:[%s224 + $0x14] sm:$0xf] %v1805
      %1822 = vst [vmem:[%s224 + $0x18] sm:$0xf] %v1806
      %1823 = vst [vmem:[%s224 + $0x1c] sm:$0xf] %v1807
      %p1824 = scmp.lt.s32.totalorder %s16, 1
      %s1825 = scalar_select %p1824, %s16, 1
      %s1826 = smul.addr %s1825, 8
      %s1827 = smul.addr %s1826, 4
      %s1828 = scalar_lea.vmem %s5, %s1827
      // Predicated region
      $region41: #{encoder_forward.7} parent=39 // pred_check
        %p1829 = pneg %p144
      $region42: #{encoder_forward.7} parent=39 // pred_check_branch
        %1831 = sbr.rel (%p1829) target = $region44
      $region43: #{encoder_forward.7} parent=39 // pred_region
        _
      $region44: #{encoder_forward.7} parent=39 // pred_fallthru
        _
    $region40: #{encoder_forward.7} parent=5 // pred_fallthru
      _
    %p1832 = scmp.le.s32.totalorder 2, %s11
    // Predicated region
    $region45: #{encoder_forward.7} parent=5 // pred_check
      %p1833 = pneg %p1832
    $region46: #{encoder_forward.7} parent=5 // pred_check_branch
      %1835 = sbr.rel (%p1833) target = $region48
    $region47: #{encoder_forward.7} parent=5 // pred_region
      %s1836 = ssub.s32 %s11, 2
      // Predicated region
      $region49: #{encoder_forward.7} parent=47 // pred_check
        %p1837 = pneg %p150
      $region50: #{encoder_forward.7} parent=47 // pred_check_branch
        %1839 = sbr.rel (%p1837) target = $region52
      $region51: #{encoder_forward.7} parent=47 // pred_region
        %p1840 = scmp.lt.s32.totalorder %s17, 1
        %s1841 = scalar_select %p1840, %s17, 1
        %s1842 = smul.addr %s1841, 8
        %s1843 = smul.addr %s1842, 4
        %s1844 = scalar_lea.vmem %s5, %s1843
      $region52: #{encoder_forward.7} parent=47 // pred_fallthru
        _
    $region48: #{encoder_forward.7} parent=5 // pred_fallthru
      _
  $region6: #{encoder_forward.7} parent=0 // loop_footer
    %s15 = sadd.s32 1, %s11
  $region7: #{encoder_forward.7} parent=0 // loop_footer_branch
    %10 = sbr.rel target = $region3
  $region8: #{encoder_forward.7} parent=0 // loop_exit
    _

</llo_original>
